<compile_context>
chip_gen: v7x
topology: tpu7x:2x2x1
jax: 0.10.0
libtpu: 0.0.40
codegen_flags: <defaults>
</compile_context>

<pallas_src>
import functools

import jax
import jax.numpy as jnp
from jax.experimental import pallas as pl
from jax.experimental.pallas import tpu as pltpu

EPS = 1e-5  # nn.BatchNorm2d default eps


def _largest_tile(n, max_tile, quantum=8):
    """Largest divisor of n that is a multiple of `quantum` and <= max_tile.

    Falls back to n (full extent) if none exists, which keeps the (8, 128)
    block-shape rule satisfied ("multiple of 8 OR full dim").
    """
    best = None
    t = quantum
    while t <= min(n, max_tile):
        if n % t == 0:
            best = t
        t += quantum
    return best if best is not None else n


# ---------------------------------------------------------------------------
# Kernels
# ---------------------------------------------------------------------------
def _conv3x3_film_kernel(x_ref, w_ref, b_ref, fw_ref, fb_ref,
                         pre_ref, stat_ref, *, tile_h, W):
    """One (batch, row-tile) step: 3x3 conv (pad=1) + bias + FiLM affine.

    Emits the f32 pre-activation tile and the per-channel sum / sum-of-squares
    partials needed for batch-statistics BatchNorm (reduced in the wrapper).
    """
    i = pl.program_id(1)
    row0 = pl.multiple_of(i * tile_h, tile_h)
    # Halo window of the zero-padded image: (tile_h + 2, W + 2, Cin), bf16.
    xh = x_ref[pl.ds(row0, tile_h + 2)]
    # Build the im2col patch matrix in VMEM only: (tile_h, W, 9*Cin).
    cols = []
    for ky in range(3):
        for kx in range(3):
            cols.append(xh[ky:ky + tile_h, kx:kx + W, :])
    patch = jnp.concatenate(cols, axis=-1).reshape(tile_h * W, -1)
    # Single MXU matmul: bf16 operands, f32 accumulation.
    acc = jnp.dot(patch, w_ref[...], preferred_element_type=jnp.float32)
    acc = acc + b_ref[...]                       # conv bias       (1, Cout)
    acc = acc * fw_ref[...] + fb_ref[...]        # per-batch FiLM  (1, Cout)
    pre_ref[...] = acc                           # f32 pre-activation tile
    # Per-channel partial BN statistics for this tile.
    s = jnp.sum(acc, axis=0, keepdims=True)
    ss = jnp.sum(acc * acc, axis=0, keepdims=True)
    stat_ref[...] = jnp.concatenate([s, ss], axis=0)


def _scale_shift_relu_kernel(x_ref, scale_ref, shift_ref, o_ref):
    """BatchNorm normalize (pre-folded per-channel scale/shift) + ReLU, f32."""
    y = x_ref[...] * scale_ref[...] + shift_ref[...]
    o_ref[...] = jnp.maximum(y, 0.0).astype(o_ref.dtype)


# ---------------------------------------------------------------------------
# pallas_call wrappers
# ---------------------------------------------------------------------------
def _conv3x3_film(x_pad, w, bias, fw, fb, tile_h):
    """x_pad: (B, H+2, W+2, Cin) bf16 -> preact (B, H*W, Cout) f32 + stats."""
    B, Hp2, Wp2, Cin = x_pad.shape
    H, W = Hp2 - 2, Wp2 - 2
    Cout = w.shape[-1]
    nt = H // tile_h
    kernel = functools.partial(_conv3x3_film_kernel, tile_h=tile_h, W=W)
    return pl.pallas_call(
        kernel,
        out_shape=(jax.ShapeDtypeStruct((B, H * W, Cout), jnp.float32),
                   jax.ShapeDtypeStruct((B, nt, 2, Cout), jnp.float32)),
        grid=(B, nt),
        in_specs=[
            # Full padded image of batch b (re-used across row tiles).
            pl.BlockSpec((None, Hp2, Wp2, Cin), lambda b, i: (b, 0, 0, 0)),
            pl.BlockSpec((9 * Cin, Cout), lambda b, i: (0, 0)),   # conv weight
            pl.BlockSpec((1, Cout), lambda b, i: (0, 0)),         # conv bias
            pl.BlockSpec((None, 1, Cout), lambda b, i: (b, 0, 0)),  # FiLM scale[b]
            pl.BlockSpec((None, 1, Cout), lambda b, i: (b, 0, 0)),  # FiLM shift[b]
        ],
        out_specs=(
            pl.BlockSpec((None, tile_h * W, Cout), lambda b, i: (b, i, 0)),
            pl.BlockSpec((None, None, 2, Cout), lambda b, i: (b, i, 0, 0)),
        ),
        compiler_params=pltpu.CompilerParams(
            dimension_semantics=("parallel", "parallel")),
    )(x_pad, w, bias, fw, fb)


def _scale_shift_relu(x2d, scale_row, shift_row, out_dtype):
    """Row-tiled elementwise BN-normalize + ReLU over a [rows, C] activation."""
    R, C = x2d.shape
    tile_r = _largest_tile(R, 1024)
    return pl.pallas_call(
        _scale_shift_relu_kernel,
        out_shape=jax.ShapeDtypeStruct((R, C), out_dtype),
        grid=(R // tile_r,),
        in_specs=[
            pl.BlockSpec((tile_r, C), lambda r: (r, 0)),
            pl.BlockSpec((1, C), lambda r: (0, 0)),
            pl.BlockSpec((1, C), lambda r: (0, 0)),
        ],
        out_specs=pl.BlockSpec((tile_r, C), lambda r: (r, 0)),
        compiler_params=pltpu.CompilerParams(
            dimension_semantics=("parallel",)),
    )(x2d, scale_row, shift_row)


# ---------------------------------------------------------------------------
# JAX glue
# ---------------------------------------------------------------------------
def _pad_hw(x_nhwc):
    return jnp.pad(x_nhwc, ((0, 0), (1, 1), (1, 1), (0, 0)))


def _bn_fold(stats, gamma, beta, count):
    """Reduce per-tile partials and fold BN into per-channel scale/shift (f32)."""
    s = jnp.sum(stats[:, :, 0, :], axis=(0, 1))
    ss = jnp.sum(stats[:, :, 1, :], axis=(0, 1))
    mean = s / count
    var = jnp.maximum(ss / count - mean * mean, 0.0)   # biased var, f32 accum
    scale_c = gamma.reshape(-1) * jax.lax.rsqrt(var + EPS)
    shift_c = beta.reshape(-1) - mean * scale_c
    return scale_c[None, :], shift_c[None, :]


@jax.jit
def film_forward(params, x_nchw, y):
    """Matches FiLM.forward(x, y) with the module in training mode (batch-stat BN)."""
    B, _, H, W = x_nchw.shape
    Cimm = params["w1"].shape[-1]
    Cout = params["w2"].shape[-1]
    count = float(B * H * W)
    tile_h = _largest_tile(H, max(8, 1024 // max(W, 1)))  # ~<=1024 rows / tile

    x = jnp.transpose(x_nchw, (0, 2, 3, 1))               # NCHW -> NHWC

    # ---- layer 1: relu(bn1(conv1(x))) --------------------------------------
    film1_w = jnp.ones((B, 1, Cimm), jnp.float32)          # identity FiLM
    film1_b = jnp.zeros((B, 1, Cimm), jnp.float32)
    pre1, st1 = _conv3x3_film(_pad_hw(x).astype(jnp.bfloat16),
                              params["w1"].astype(jnp.bfloat16),
                              params["b1"], film1_w, film1_b, tile_h)
    sc1, sh1 = _bn_fold(st1, params["bn1_g"], params["bn1_b"], count)
    # Intermediate activation stored bf16 (it is only a matmul operand next).
    h = _scale_shift_relu(pre1.reshape(B * H * W, Cimm), sc1, sh1, jnp.bfloat16)

    # ---- layer 2: relu(bn2(conv2(h) * weight(y) + bias(y))) ----------------
    # FiLM linears hoisted out of the tiled kernel (tiny [B, Cout] matmuls).
    fw = (y @ params["wf"] + params["bf"]).reshape(B, 1, Cout)
    fb = (y @ params["wb"] + params["bb"]).reshape(B, 1, Cout)
    h_pad = _pad_hw(h.reshape(B, H, W, Cimm))
    pre2, st2 = _conv3x3_film(h_pad, params["w2"].astype(jnp.bfloat16),
                              params["b2"], fw, fb, tile_h)
    sc2, sh2 = _bn_fold(st2, params["bn2_g"], params["bn2_b"], count)
    out = _scale_shift_relu(pre2.reshape(B * H * W, Cout), sc2, sh2, jnp.float32)

    return out.reshape(B, H, W, Cout).transpose(0, 3, 1, 2)   # back to NCHW


# ---------------------------------------------------------------------------
# Pure-JAX reference (same bf16 matmul operands, f32 everywhere else)
# ---------------------------------------------------------------------------
def _film_reference(params, x_nchw, y):
    cin = params["w1"].shape[0] // 9
    cimm = params["w1"].shape[1]
    cout = params["w2"].shape[1]

    def conv(h, w_flat, b, ci, co):
        w = w_flat.reshape(3, 3, ci, co).astype(jnp.bfloat16)
        out = jax.lax.conv_general_dilated(
            h.astype(jnp.bfloat16), w, window_strides=(1, 1), padding="SAME",
            dimension_numbers=("NHWC", "HWIO", "NHWC"),
            preferred_element_type=jnp.float32)
        return out + b.reshape(1, 1, 1, co)

    def bn(v, g, bt):
        m = jnp.mean(v, axis=(0, 1, 2))
        var = jnp.mean(jnp.square(v - m), axis=(0, 1, 2))
        return (v - m) * jax.lax.rsqrt(var + EPS) * g.reshape(-1) + bt.reshape(-1)

    x = jnp.transpose(x_nchw, (0, 2, 3, 1))
    h = jax.nn.relu(bn(conv(x, params["w1"], params["b1"], cin, cimm),
                       params["bn1_g"], params["bn1_b"]))
    c2 = conv(h, params["w2"], params["b2"], cimm, cout)
    fw = y @ params["wf"] + params["bf"]
    fb = y @ params["wb"] + params["bb"]
    out = c2 * fw[:, None, None, :] + fb[:, None, None, :]
    out = jax.nn.relu(bn(out, params["bn2_g"], params["bn2_b"]))
    return jnp.transpose(out, (0, 3, 1, 2))


# ---------------------------------------------------------------------------
# Deterministic parameter construction (synthetic; mirrors module __init__ shapes)
# ---------------------------------------------------------------------------
def init_params(key, in_features, out_features, in_channels, imm_channels):
    ks = jax.random.split(key, 6)

    # Conv weights: PyTorch layout [Cout, Cin, 3, 3] -> matmul layout [9*Cin, Cout]
    # flattened in (ky, kx, cin) row order (matches the in-kernel patch build).
    w1_t = jax.random.normal(ks[0], (imm_channels, in_channels, 3, 3),
                             jnp.float32) / (3.0 * jnp.sqrt(float(in_channels)))
    w2_t = jax.random.normal(ks[1], (out_features, imm_channels, 3, 3),
                             jnp.float32) / (3.0 * jnp.sqrt(float(imm_channels)))
    w1 = jnp.transpose(w1_t, (2, 3, 1, 0)).reshape(9 * in_channels, imm_channels)
    w2 = jnp.transpose(w2_t, (2, 3, 1, 0)).reshape(9 * imm_channels, out_features)
    b1 = jax.random.normal(ks[2], (1, imm_channels), jnp.float32) * 0.01
    b2 = jax.random.normal(ks[3], (1, out_features), jnp.float32) * 0.01

    # FiLM linear layers, per initialize_parameters:
    #   W ~ N(0,1), each row normalized to unit L2 over in_features, bias = 0
    wf_t = jax.random.normal(ks[4], (out_features, in_features), jnp.float32)
    wf_t = wf_t / jnp.sqrt(jnp.sum(wf_t ** 2, axis=1, keepdims=True))
    wb_t = jax.random.normal(ks[5], (out_features, in_features), jnp.float32)
    wb_t = wb_t / jnp.sqrt(jnp.sum(wb_t ** 2, axis=1, keepdims=True))

    # TODO(synk): BatchNorm running-mean/var buffer updates are a training-time
    # side effect (not part of the forward return value) and are not modeled.
    return dict(
        w1=w1, b1=b1, w2=w2, b2=b2,
        wf=wf_t.T, bf=jnp.zeros((1, out_features), jnp.float32),
        wb=wb_t.T, bb=jnp.zeros((1, out_features), jnp.float32),
        # BatchNorm affine params at PyTorch defaults (gamma=1, beta=0)
        bn1_g=jnp.ones((1, imm_channels), jnp.float32),
        bn1_b=jnp.zeros((1, imm_channels), jnp.float32),
        bn2_g=jnp.ones((1, out_features), jnp.float32),
        bn2_b=jnp.zeros((1, out_features), jnp.float32),
    )


if __name__ == "__main__":
    B, H, W = 2, 16, 16
    in_channels, imm_channels = 4, 8
    in_features, out_features = 32, 16

    key = jax.random.PRNGKey(0)
    kx, ky_, kp = jax.random.split(key, 3)
    x = jax.random.normal(kx, (B, in_channels, H, W), jnp.float32)  # NCHW like PyTorch
    y = jax.random.normal(ky_, (B, in_features), jnp.float32)
    params = init_params(kp, in_features, out_features, in_channels, imm_channels)

    out = jax.block_until_ready(film_forward(params, x, y))
    assert out.shape == (B, out_features, H, W)
    assert bool(jnp.all(jnp.isfinite(out)))

    ref = jax.block_until_ready(_film_reference(params, x, y))
    err = float(jnp.max(jnp.abs(out - ref)))
    assert err < 5e-2, f"max abs err vs reference: {err}"
    print("KERNEL_OK")
</pallas_src>

<mosaic_0001>
module attributes {stable_mosaic.version = 11 : i64} {
  func.func @_conv3x3_film_kernel(%arg0: i32, %arg1: i32, %arg2: memref<1x18x18x4xbf16, #tpu.memory_space<vmem>>, %arg3: memref<36x8xbf16, #tpu.memory_space<vmem>>, %arg4: memref<1x8xf32, #tpu.memory_space<vmem>>, %arg5: memref<1x1x8xf32, #tpu.memory_space<vmem>>, %arg6: memref<1x1x8xf32, #tpu.memory_space<vmem>>, %arg7: memref<1x256x8xf32, #tpu.memory_space<vmem>>, %arg8: memref<1x1x2x8xf32, #tpu.memory_space<vmem>>) attributes {dimension_semantics = [#tpu.dimension_semantics<parallel>, #tpu.dimension_semantics<parallel>], iteration_bounds = array<i64: 2, 1>, scalar_prefetch = 0 : i64, scratch_operands = 0 : i64, tpu.core_type = #tpu.core_type<tc>, window_params = [{transform_indices = @transform_0, window_bounds = array<i64: 1, 18, 18, 4>}, {pipeline_mode = #tpu.pipeline_mode<synchronous>, transform_indices = @transform_1, window_bounds = array<i64: 36, 8>}, {pipeline_mode = #tpu.pipeline_mode<synchronous>, transform_indices = @transform_2, window_bounds = array<i64: 1, 8>}, {transform_indices = @transform_3, window_bounds = array<i64: 1, 1, 8>}, {transform_indices = @transform_4, window_bounds = array<i64: 1, 1, 8>}, {transform_indices = @transform_5, window_bounds = array<i64: 1, 256, 8>}, {transform_indices = @transform_6, window_bounds = array<i64: 1, 1, 2, 8>}]} {
    %c16_i32 = arith.constant 16 : i32
    %0 = arith.muli %arg1, %c16_i32 : i32
    %1 = tpu.assume_multiple %0, 16 : i32
    %c0 = arith.constant 0 : index
    %2 = arith.index_cast %1 : i32 to index
    %c0_0 = arith.constant 0 : index
    %c0_1 = arith.constant 0 : index
    %3 = vector.load %arg2[%c0, %2, %c0_0, %c0_1] : memref<1x18x18x4xbf16, #tpu.memory_space<vmem>>, vector<1x18x18x4xbf16>
    %4 = vector.shape_cast %3 : vector<1x18x18x4xbf16> to vector<18x18x4xbf16>
    %5 = vector.extract_strided_slice %4 {offsets = [0, 0, 0], sizes = [16, 16, 4], strides = [1, 1, 1]} : vector<18x18x4xbf16> to vector<16x16x4xbf16>
    %6 = vector.extract_strided_slice %4 {offsets = [0, 1, 0], sizes = [16, 16, 4], strides = [1, 1, 1]} : vector<18x18x4xbf16> to vector<16x16x4xbf16>
    %7 = vector.extract_strided_slice %4 {offsets = [0, 2, 0], sizes = [16, 16, 4], strides = [1, 1, 1]} : vector<18x18x4xbf16> to vector<16x16x4xbf16>
    %8 = vector.extract_strided_slice %4 {offsets = [1, 0, 0], sizes = [16, 16, 4], strides = [1, 1, 1]} : vector<18x18x4xbf16> to vector<16x16x4xbf16>
    %9 = vector.extract_strided_slice %4 {offsets = [1, 1, 0], sizes = [16, 16, 4], strides = [1, 1, 1]} : vector<18x18x4xbf16> to vector<16x16x4xbf16>
    %10 = vector.extract_strided_slice %4 {offsets = [1, 2, 0], sizes = [16, 16, 4], strides = [1, 1, 1]} : vector<18x18x4xbf16> to vector<16x16x4xbf16>
    %11 = vector.extract_strided_slice %4 {offsets = [2, 0, 0], sizes = [16, 16, 4], strides = [1, 1, 1]} : vector<18x18x4xbf16> to vector<16x16x4xbf16>
    %12 = vector.extract_strided_slice %4 {offsets = [2, 1, 0], sizes = [16, 16, 4], strides = [1, 1, 1]} : vector<18x18x4xbf16> to vector<16x16x4xbf16>
    %13 = vector.extract_strided_slice %4 {offsets = [2, 2, 0], sizes = [16, 16, 4], strides = [1, 1, 1]} : vector<18x18x4xbf16> to vector<16x16x4xbf16>
    %14 = tpu.concatenate %5, %6, %7, %8, %9, %10, %11, %12, %13 in 2 : vector<16x16x4xbf16>, vector<16x16x4xbf16>, vector<16x16x4xbf16>, vector<16x16x4xbf16>, vector<16x16x4xbf16>, vector<16x16x4xbf16>, vector<16x16x4xbf16>, vector<16x16x4xbf16>, vector<16x16x4xbf16> -> vector<16x16x36xbf16>
    %15 = vector.shape_cast %14 : vector<16x16x36xbf16> to vector<256x36xbf16>
    %c0_2 = arith.constant 0 : index
    %c0_3 = arith.constant 0 : index
    %16 = vector.load %arg3[%c0_2, %c0_3] : memref<36x8xbf16, #tpu.memory_space<vmem>>, vector<36x8xbf16>
    %cst = arith.constant dense<0.000000e+00> : vector<256x8xf32>
    %17 = tpu.matmul %15, %16, %cst {dimension_numbers = #tpu.dot_dimension_numbers<[1], [0], [0], [1], [0, 0, 1, 1], [], []>} : vector<256x36xbf16>, vector<36x8xbf16>, vector<256x8xf32> -> vector<256x8xf32>
    %c0_4 = arith.constant 0 : index
    %c0_5 = arith.constant 0 : index
    %18 = vector.load %arg4[%c0_4, %c0_5] : memref<1x8xf32, #tpu.memory_space<vmem>>, vector<1x8xf32>
    %19 = vector.broadcast %18 : vector<1x8xf32> to vector<256x8xf32>
    %20 = arith.addf %17, %19 : vector<256x8xf32>
    %c0_6 = arith.constant 0 : index
    %c0_7 = arith.constant 0 : index
    %c0_8 = arith.constant 0 : index
    %21 = vector.load %arg5[%c0_6, %c0_7, %c0_8] : memref<1x1x8xf32, #tpu.memory_space<vmem>>, vector<1x1x8xf32>
    %22 = vector.shape_cast %21 : vector<1x1x8xf32> to vector<1x8xf32>
    %23 = vector.broadcast %22 : vector<1x8xf32> to vector<256x8xf32>
    %24 = arith.mulf %20, %23 : vector<256x8xf32>
    %c0_9 = arith.constant 0 : index
    %c0_10 = arith.constant 0 : index
    %c0_11 = arith.constant 0 : index
    %25 = vector.load %arg6[%c0_9, %c0_10, %c0_11] : memref<1x1x8xf32, #tpu.memory_space<vmem>>, vector<1x1x8xf32>
    %26 = vector.shape_cast %25 : vector<1x1x8xf32> to vector<1x8xf32>
    %27 = vector.broadcast %26 : vector<1x8xf32> to vector<256x8xf32>
    %28 = arith.addf %24, %27 : vector<256x8xf32>
    %c0_12 = arith.constant 0 : index
    %c0_13 = arith.constant 0 : index
    %c0_14 = arith.constant 0 : index
    %29 = vector.load %arg7[%c0_12, %c0_13, %c0_14] : memref<1x256x8xf32, #tpu.memory_space<vmem>>, vector<1x256x8xf32>
    %30 = vector.shape_cast %29 : vector<1x256x8xf32> to vector<256x8xf32>
    %31 = vector.shape_cast %28 : vector<256x8xf32> to vector<1x256x8xf32>
    tpu.vector_store %arg7[%c0_12, %c0_13, %c0_14], %31 {strides = array<i32>} : memref<1x256x8xf32, #tpu.memory_space<vmem>>, vector<1x256x8xf32>,
    %cst_15 = arith.constant dense<0.000000e+00> : vector<8xf32>
    %32 = vector.multi_reduction <add>, %28, %cst_15 [0] : vector<256x8xf32> to vector<8xf32>
    %33 = vector.shape_cast %32 : vector<8xf32> to vector<1x8xf32>
    %34 = arith.mulf %28, %28 : vector<256x8xf32>
    %cst_16 = arith.constant dense<0.000000e+00> : vector<8xf32>
    %35 = vector.multi_reduction <add>, %34, %cst_16 [0] : vector<256x8xf32> to vector<8xf32>
    %36 = vector.shape_cast %35 : vector<8xf32> to vector<1x8xf32>
    %37 = tpu.concatenate %33, %36 in 0 : vector<1x8xf32>, vector<1x8xf32> -> vector<2x8xf32>
    %c0_17 = arith.constant 0 : index
    %c0_18 = arith.constant 0 : index
    %c0_19 = arith.constant 0 : index
    %c0_20 = arith.constant 0 : index
    %38 = vector.load %arg8[%c0_17, %c0_18, %c0_19, %c0_20] : memref<1x1x2x8xf32, #tpu.memory_space<vmem>>, vector<1x1x2x8xf32>
    %39 = vector.shape_cast %38 : vector<1x1x2x8xf32> to vector<2x8xf32>
    %40 = vector.shape_cast %37 : vector<2x8xf32> to vector<1x1x2x8xf32>
    tpu.vector_store %arg8[%c0_17, %c0_18, %c0_19, %c0_20], %40 {strides = array<i32>} : memref<1x1x2x8xf32, #tpu.memory_space<vmem>>, vector<1x1x2x8xf32>,
    return
  }
  func.func @transform_0(%arg0: i32, %arg1: i32) -> (i32, i32, i32, i32) {
    %c0_i32 = arith.constant 0 : i32
    %c0_i32_0 = arith.constant 0 : i32
    %c0_i32_1 = arith.constant 0 : i32
    %c0_i32_2 = arith.constant 0 : i32
    return %arg0, %c0_i32, %c0_i32_0, %c0_i32_1 : i32, i32, i32, i32
  }
  func.func @transform_1(%arg0: i32, %arg1: i32) -> (i32, i32) {
    %c0_i32 = arith.constant 0 : i32
    %c0_i32_0 = arith.constant 0 : i32
    %c0_i32_1 = arith.constant 0 : i32
    return %c0_i32, %c0_i32_0 : i32, i32
  }
  func.func @transform_2(%arg0: i32, %arg1: i32) -> (i32, i32) {
    %c0_i32 = arith.constant 0 : i32
    %c0_i32_0 = arith.constant 0 : i32
    %c0_i32_1 = arith.constant 0 : i32
    return %c0_i32, %c0_i32_0 : i32, i32
  }
  func.func @transform_3(%arg0: i32, %arg1: i32) -> (i32, i32, i32) {
    %c0_i32 = arith.constant 0 : i32
    %c0_i32_0 = arith.constant 0 : i32
    %c0_i32_1 = arith.constant 0 : i32
    return %arg0, %c0_i32, %c0_i32_0 : i32, i32, i32
  }
  func.func @transform_4(%arg0: i32, %arg1: i32) -> (i32, i32, i32) {
    %c0_i32 = arith.constant 0 : i32
    %c0_i32_0 = arith.constant 0 : i32
    %c0_i32_1 = arith.constant 0 : i32
    return %arg0, %c0_i32, %c0_i32_0 : i32, i32, i32
  }
  func.func @transform_5(%arg0: i32, %arg1: i32) -> (i32, i32, i32) {
    %c0_i32 = arith.constant 0 : i32
    %c0_i32_0 = arith.constant 0 : i32
    return %arg0, %arg1, %c0_i32 : i32, i32, i32
  }
  func.func @transform_6(%arg0: i32, %arg1: i32) -> (i32, i32, i32, i32) {
    %c0_i32 = arith.constant 0 : i32
    %c0_i32_0 = arith.constant 0 : i32
    %c0_i32_1 = arith.constant 0 : i32
    return %arg0, %arg1, %c0_i32, %c0_i32_0 : i32, i32, i32, i32
  }
}

module attributes {stable_mosaic.version = 11 : i64} {
  func.func @_scale_shift_relu_kernel(%arg0: i32, %arg1: memref<512x8xf32, #tpu.memory_space<vmem>>, %arg2: memref<1x8xf32, #tpu.memory_space<vmem>>, %arg3: memref<1x8xf32, #tpu.memory_space<vmem>>, %arg4: memref<512x8xbf16, #tpu.memory_space<vmem>>) attributes {dimension_semantics = [#tpu.dimension_semantics<parallel>], iteration_bounds = array<i64: 1>, scalar_prefetch = 0 : i64, scratch_operands = 0 : i64, tpu.core_type = #tpu.core_type<tc>, window_params = [{transform_indices = @transform_0, window_bounds = array<i64: 512, 8>}, {pipeline_mode = #tpu.pipeline_mode<synchronous>, transform_indices = @transform_1, window_bounds = array<i64: 1, 8>}, {pipeline_mode = #tpu.pipeline_mode<synchronous>, transform_indices = @transform_2, window_bounds = array<i64: 1, 8>}, {transform_indices = @transform_3, window_bounds = array<i64: 512, 8>}]} {
    %c0 = arith.constant 0 : index
    %c0_0 = arith.constant 0 : index
    %0 = vector.load %arg1[%c0, %c0_0] : memref<512x8xf32, #tpu.memory_space<vmem>>, vector<512x8xf32>
    %c0_1 = arith.constant 0 : index
    %c0_2 = arith.constant 0 : index
    %1 = vector.load %arg2[%c0_1, %c0_2] : memref<1x8xf32, #tpu.memory_space<vmem>>, vector<1x8xf32>
    %2 = vector.broadcast %1 : vector<1x8xf32> to vector<512x8xf32>
    %3 = arith.mulf %0, %2 : vector<512x8xf32>
    %c0_3 = arith.constant 0 : index
    %c0_4 = arith.constant 0 : index
    %4 = vector.load %arg3[%c0_3, %c0_4] : memref<1x8xf32, #tpu.memory_space<vmem>>, vector<1x8xf32>
    %5 = vector.broadcast %4 : vector<1x8xf32> to vector<512x8xf32>
    %6 = arith.addf %3, %5 : vector<512x8xf32>
    %cst = arith.constant 0.000000e+00 : f32
    %7 = vector.broadcast %cst : f32 to vector<512x8xf32>
    %8 = arith.maximumf %6, %7 : vector<512x8xf32>
    %9 = arith.truncf %8 : vector<512x8xf32> to vector<512x8xbf16>
    %c0_5 = arith.constant 0 : index
    %c0_6 = arith.constant 0 : index
    %10 = vector.load %arg4[%c0_5, %c0_6] : memref<512x8xbf16, #tpu.memory_space<vmem>>, vector<512x8xbf16>
    tpu.vector_store %arg4[%c0_5, %c0_6], %9 {strides = array<i32>} : memref<512x8xbf16, #tpu.memory_space<vmem>>, vector<512x8xbf16>,
    return
  }
  func.func @transform_0(%arg0: i32) -> (i32, i32) {
    %c0_i32 = arith.constant 0 : i32
    %c0_i32_0 = arith.constant 0 : i32
    return %arg0, %c0_i32 : i32, i32
  }
  func.func @transform_1(%arg0: i32) -> (i32, i32) {
    %c0_i32 = arith.constant 0 : i32
    %c0_i32_0 = arith.constant 0 : i32
    %c0_i32_1 = arith.constant 0 : i32
    return %c0_i32, %c0_i32_0 : i32, i32
  }
  func.func @transform_2(%arg0: i32) -> (i32, i32) {
    %c0_i32 = arith.constant 0 : i32
    %c0_i32_0 = arith.constant 0 : i32
    %c0_i32_1 = arith.constant 0 : i32
    return %c0_i32, %c0_i32_0 : i32, i32
  }
  func.func @transform_3(%arg0: i32) -> (i32, i32) {
    %c0_i32 = arith.constant 0 : i32
    %c0_i32_0 = arith.constant 0 : i32
    return %arg0, %c0_i32 : i32, i32
  }
}

module attributes {stable_mosaic.version = 11 : i64} {
  func.func @_conv3x3_film_kernel(%arg0: i32, %arg1: i32, %arg2: memref<1x18x18x8xbf16, #tpu.memory_space<vmem>>, %arg3: memref<72x16xbf16, #tpu.memory_space<vmem>>, %arg4: memref<1x16xf32, #tpu.memory_space<vmem>>, %arg5: memref<1x1x16xf32, #tpu.memory_space<vmem>>, %arg6: memref<1x1x16xf32, #tpu.memory_space<vmem>>, %arg7: memref<1x256x16xf32, #tpu.memory_space<vmem>>, %arg8: memref<1x1x2x16xf32, #tpu.memory_space<vmem>>) attributes {dimension_semantics = [#tpu.dimension_semantics<parallel>, #tpu.dimension_semantics<parallel>], iteration_bounds = array<i64: 2, 1>, scalar_prefetch = 0 : i64, scratch_operands = 0 : i64, tpu.core_type = #tpu.core_type<tc>, window_params = [{transform_indices = @transform_0, window_bounds = array<i64: 1, 18, 18, 8>}, {pipeline_mode = #tpu.pipeline_mode<synchronous>, transform_indices = @transform_1, window_bounds = array<i64: 72, 16>}, {pipeline_mode = #tpu.pipeline_mode<synchronous>, transform_indices = @transform_2, window_bounds = array<i64: 1, 16>}, {transform_indices = @transform_3, window_bounds = array<i64: 1, 1, 16>}, {transform_indices = @transform_4, window_bounds = array<i64: 1, 1, 16>}, {transform_indices = @transform_5, window_bounds = array<i64: 1, 256, 16>}, {transform_indices = @transform_6, window_bounds = array<i64: 1, 1, 2, 16>}]} {
    %c16_i32 = arith.constant 16 : i32
    %0 = arith.muli %arg1, %c16_i32 : i32
    %1 = tpu.assume_multiple %0, 16 : i32
    %c0 = arith.constant 0 : index
    %2 = arith.index_cast %1 : i32 to index
    %c0_0 = arith.constant 0 : index
    %c0_1 = arith.constant 0 : index
    %3 = vector.load %arg2[%c0, %2, %c0_0, %c0_1] : memref<1x18x18x8xbf16, #tpu.memory_space<vmem>>, vector<1x18x18x8xbf16>
    %4 = vector.shape_cast %3 : vector<1x18x18x8xbf16> to vector<18x18x8xbf16>
    %5 = vector.extract_strided_slice %4 {offsets = [0, 0, 0], sizes = [16, 16, 8], strides = [1, 1, 1]} : vector<18x18x8xbf16> to vector<16x16x8xbf16>
    %6 = vector.extract_strided_slice %4 {offsets = [0, 1, 0], sizes = [16, 16, 8], strides = [1, 1, 1]} : vector<18x18x8xbf16> to vector<16x16x8xbf16>
    %7 = vector.extract_strided_slice %4 {offsets = [0, 2, 0], sizes = [16, 16, 8], strides = [1, 1, 1]} : vector<18x18x8xbf16> to vector<16x16x8xbf16>
    %8 = vector.extract_strided_slice %4 {offsets = [1, 0, 0], sizes = [16, 16, 8], strides = [1, 1, 1]} : vector<18x18x8xbf16> to vector<16x16x8xbf16>
    %9 = vector.extract_strided_slice %4 {offsets = [1, 1, 0], sizes = [16, 16, 8], strides = [1, 1, 1]} : vector<18x18x8xbf16> to vector<16x16x8xbf16>
    %10 = vector.extract_strided_slice %4 {offsets = [1, 2, 0], sizes = [16, 16, 8], strides = [1, 1, 1]} : vector<18x18x8xbf16> to vector<16x16x8xbf16>
    %11 = vector.extract_strided_slice %4 {offsets = [2, 0, 0], sizes = [16, 16, 8], strides = [1, 1, 1]} : vector<18x18x8xbf16> to vector<16x16x8xbf16>
    %12 = vector.extract_strided_slice %4 {offsets = [2, 1, 0], sizes = [16, 16, 8], strides = [1, 1, 1]} : vector<18x18x8xbf16> to vector<16x16x8xbf16>
    %13 = vector.extract_strided_slice %4 {offsets = [2, 2, 0], sizes = [16, 16, 8], strides = [1, 1, 1]} : vector<18x18x8xbf16> to vector<16x16x8xbf16>
    %14 = tpu.concatenate %5, %6, %7, %8, %9, %10, %11, %12, %13 in 2 : vector<16x16x8xbf16>, vector<16x16x8xbf16>, vector<16x16x8xbf16>, vector<16x16x8xbf16>, vector<16x16x8xbf16>, vector<16x16x8xbf16>, vector<16x16x8xbf16>, vector<16x16x8xbf16>, vector<16x16x8xbf16> -> vector<16x16x72xbf16>
    %15 = vector.shape_cast %14 : vector<16x16x72xbf16> to vector<256x72xbf16>
    %c0_2 = arith.constant 0 : index
    %c0_3 = arith.constant 0 : index
    %16 = vector.load %arg3[%c0_2, %c0_3] : memref<72x16xbf16, #tpu.memory_space<vmem>>, vector<72x16xbf16>
    %cst = arith.constant dense<0.000000e+00> : vector<256x16xf32>
    %17 = tpu.matmul %15, %16, %cst {dimension_numbers = #tpu.dot_dimension_numbers<[1], [0], [0], [1], [0, 0, 1, 1], [], []>} : vector<256x72xbf16>, vector<72x16xbf16>, vector<256x16xf32> -> vector<256x16xf32>
    %c0_4 = arith.constant 0 : index
    %c0_5 = arith.constant 0 : index
    %18 = vector.load %arg4[%c0_4, %c0_5] : memref<1x16xf32, #tpu.memory_space<vmem>>, vector<1x16xf32>
    %19 = vector.broadcast %18 : vector<1x16xf32> to vector<256x16xf32>
    %20 = arith.addf %17, %19 : vector<256x16xf32>
    %c0_6 = arith.constant 0 : index
    %c0_7 = arith.constant 0 : index
    %c0_8 = arith.constant 0 : index
    %21 = vector.load %arg5[%c0_6, %c0_7, %c0_8] : memref<1x1x16xf32, #tpu.memory_space<vmem>>, vector<1x1x16xf32>
    %22 = vector.shape_cast %21 : vector<1x1x16xf32> to vector<1x16xf32>
    %23 = vector.broadcast %22 : vector<1x16xf32> to vector<256x16xf32>
    %24 = arith.mulf %20, %23 : vector<256x16xf32>
    %c0_9 = arith.constant 0 : index
    %c0_10 = arith.constant 0 : index
    %c0_11 = arith.constant 0 : index
    %25 = vector.load %arg6[%c0_9, %c0_10, %c0_11] : memref<1x1x16xf32, #tpu.memory_space<vmem>>, vector<1x1x16xf32>
    %26 = vector.shape_cast %25 : vector<1x1x16xf32> to vector<1x16xf32>
    %27 = vector.broadcast %26 : vector<1x16xf32> to vector<256x16xf32>
    %28 = arith.addf %24, %27 : vector<256x16xf32>
    %c0_12 = arith.constant 0 : index
    %c0_13 = arith.constant 0 : index
    %c0_14 = arith.constant 0 : index
    %29 = vector.load %arg7[%c0_12, %c0_13, %c0_14] : memref<1x256x16xf32, #tpu.memory_space<vmem>>, vector<1x256x16xf32>
    %30 = vector.shape_cast %29 : vector<1x256x16xf32> to vector<256x16xf32>
    %31 = vector.shape_cast %28 : vector<256x16xf32> to vector<1x256x16xf32>
    tpu.vector_store %arg7[%c0_12, %c0_13, %c0_14], %31 {strides = array<i32>} : memref<1x256x16xf32, #tpu.memory_space<vmem>>, vector<1x256x16xf32>,
    %cst_15 = arith.constant dense<0.000000e+00> : vector<16xf32>
    %32 = vector.multi_reduction <add>, %28, %cst_15 [0] : vector<256x16xf32> to vector<16xf32>
    %33 = vector.shape_cast %32 : vector<16xf32> to vector<1x16xf32>
    %34 = arith.mulf %28, %28 : vector<256x16xf32>
    %cst_16 = arith.constant dense<0.000000e+00> : vector<16xf32>
    %35 = vector.multi_reduction <add>, %34, %cst_16 [0] : vector<256x16xf32> to vector<16xf32>
    %36 = vector.shape_cast %35 : vector<16xf32> to vector<1x16xf32>
    %37 = tpu.concatenate %33, %36 in 0 : vector<1x16xf32>, vector<1x16xf32> -> vector<2x16xf32>
    %c0_17 = arith.constant 0 : index
    %c0_18 = arith.constant 0 : index
    %c0_19 = arith.constant 0 : index
    %c0_20 = arith.constant 0 : index
    %38 = vector.load %arg8[%c0_17, %c0_18, %c0_19, %c0_20] : memref<1x1x2x16xf32, #tpu.memory_space<vmem>>, vector<1x1x2x16xf32>
    %39 = vector.shape_cast %38 : vector<1x1x2x16xf32> to vector<2x16xf32>
    %40 = vector.shape_cast %37 : vector<2x16xf32> to vector<1x1x2x16xf32>
    tpu.vector_store %arg8[%c0_17, %c0_18, %c0_19, %c0_20], %40 {strides = array<i32>} : memref<1x1x2x16xf32, #tpu.memory_space<vmem>>, vector<1x1x2x16xf32>,
    return
  }
  func.func @transform_0(%arg0: i32, %arg1: i32) -> (i32, i32, i32, i32) {
    %c0_i32 = arith.constant 0 : i32
    %c0_i32_0 = arith.constant 0 : i32
    %c0_i32_1 = arith.constant 0 : i32
    %c0_i32_2 = arith.constant 0 : i32
    return %arg0, %c0_i32, %c0_i32_0, %c0_i32_1 : i32, i32, i32, i32
  }
  func.func @transform_1(%arg0: i32, %arg1: i32) -> (i32, i32) {
    %c0_i32 = arith.constant 0 : i32
    %c0_i32_0 = arith.constant 0 : i32
    %c0_i32_1 = arith.constant 0 : i32
    return %c0_i32, %c0_i32_0 : i32, i32
  }
  func.func @transform_2(%arg0: i32, %arg1: i32) -> (i32, i32) {
    %c0_i32 = arith.constant 0 : i32
    %c0_i32_0 = arith.constant 0 : i32
    %c0_i32_1 = arith.constant 0 : i32
    return %c0_i32, %c0_i32_0 : i32, i32
  }
  func.func @transform_3(%arg0: i32, %arg1: i32) -> (i32, i32, i32) {
    %c0_i32 = arith.constant 0 : i32
    %c0_i32_0 = arith.constant 0 : i32
    %c0_i32_1 = arith.constant 0 : i32
    return %arg0, %c0_i32, %c0_i32_0 : i32, i32, i32
  }
  func.func @transform_4(%arg0: i32, %arg1: i32) -> (i32, i32, i32) {
    %c0_i32 = arith.constant 0 : i32
    %c0_i32_0 = arith.constant 0 : i32
    %c0_i32_1 = arith.constant 0 : i32
    return %arg0, %c0_i32, %c0_i32_0 : i32, i32, i32
  }
  func.func @transform_5(%arg0: i32, %arg1: i32) -> (i32, i32, i32) {
    %c0_i32 = arith.constant 0 : i32
    %c0_i32_0 = arith.constant 0 : i32
    return %arg0, %arg1, %c0_i32 : i32, i32, i32
  }
  func.func @transform_6(%arg0: i32, %arg1: i32) -> (i32, i32, i32, i32) {
    %c0_i32 = arith.constant 0 : i32
    %c0_i32_0 = arith.constant 0 : i32
    %c0_i32_1 = arith.constant 0 : i32
    return %arg0, %arg1, %c0_i32, %c0_i32_0 : i32, i32, i32, i32
  }
}

module attributes {stable_mosaic.version = 11 : i64} {
  func.func @_scale_shift_relu_kernel(%arg0: i32, %arg1: memref<512x16xf32, #tpu.memory_space<vmem>>, %arg2: memref<1x16xf32, #tpu.memory_space<vmem>>, %arg3: memref<1x16xf32, #tpu.memory_space<vmem>>, %arg4: memref<512x16xf32, #tpu.memory_space<vmem>>) attributes {dimension_semantics = [#tpu.dimension_semantics<parallel>], iteration_bounds = array<i64: 1>, scalar_prefetch = 0 : i64, scratch_operands = 0 : i64, tpu.core_type = #tpu.core_type<tc>, window_params = [{transform_indices = @transform_0, window_bounds = array<i64: 512, 16>}, {pipeline_mode = #tpu.pipeline_mode<synchronous>, transform_indices = @transform_1, window_bounds = array<i64: 1, 16>}, {pipeline_mode = #tpu.pipeline_mode<synchronous>, transform_indices = @transform_2, window_bounds = array<i64: 1, 16>}, {transform_indices = @transform_3, window_bounds = array<i64: 512, 16>}]} {
    %c0 = arith.constant 0 : index
    %c0_0 = arith.constant 0 : index
    %0 = vector.load %arg1[%c0, %c0_0] : memref<512x16xf32, #tpu.memory_space<vmem>>, vector<512x16xf32>
    %c0_1 = arith.constant 0 : index
    %c0_2 = arith.constant 0 : index
    %1 = vector.load %arg2[%c0_1, %c0_2] : memref<1x16xf32, #tpu.memory_space<vmem>>, vector<1x16xf32>
    %2 = vector.broadcast %1 : vector<1x16xf32> to vector<512x16xf32>
    %3 = arith.mulf %0, %2 : vector<512x16xf32>
    %c0_3 = arith.constant 0 : index
    %c0_4 = arith.constant 0 : index
    %4 = vector.load %arg3[%c0_3, %c0_4] : memref<1x16xf32, #tpu.memory_space<vmem>>, vector<1x16xf32>
    %5 = vector.broadcast %4 : vector<1x16xf32> to vector<512x16xf32>
    %6 = arith.addf %3, %5 : vector<512x16xf32>
    %cst = arith.constant 0.000000e+00 : f32
    %7 = vector.broadcast %cst : f32 to vector<512x16xf32>
    %8 = arith.maximumf %6, %7 : vector<512x16xf32>
    %c0_5 = arith.constant 0 : index
    %c0_6 = arith.constant 0 : index
    %9 = vector.load %arg4[%c0_5, %c0_6] : memref<512x16xf32, #tpu.memory_space<vmem>>, vector<512x16xf32>
    tpu.vector_store %arg4[%c0_5, %c0_6], %8 {strides = array<i32>} : memref<512x16xf32, #tpu.memory_space<vmem>>, vector<512x16xf32>,
    return
  }
  func.func @transform_0(%arg0: i32) -> (i32, i32) {
    %c0_i32 = arith.constant 0 : i32
    %c0_i32_0 = arith.constant 0 : i32
    return %arg0, %c0_i32 : i32, i32
  }
  func.func @transform_1(%arg0: i32) -> (i32, i32) {
    %c0_i32 = arith.constant 0 : i32
    %c0_i32_0 = arith.constant 0 : i32
    %c0_i32_1 = arith.constant 0 : i32
    return %c0_i32, %c0_i32_0 : i32, i32
  }
  func.func @transform_2(%arg0: i32) -> (i32, i32) {
    %c0_i32 = arith.constant 0 : i32
    %c0_i32_0 = arith.constant 0 : i32
    %c0_i32_1 = arith.constant 0 : i32
    return %c0_i32, %c0_i32_0 : i32, i32
  }
  func.func @transform_3(%arg0: i32) -> (i32, i32) {
    %c0_i32 = arith.constant 0 : i32
    %c0_i32_0 = arith.constant 0 : i32
    return %arg0, %c0_i32 : i32, i32
  }
}

</mosaic_0001>

<llo_original>
// kernel: film_forward.5
$region0: #{film_forward.5}
  #allocation0 [shape = 'u32[]', space=smem, size = 0x4, offset = 0x4, fixed_abs, tag = 'smem constant byte address 0x4 - core index']
  #allocation1 [shape = 'u32[144,128]{1,0:T(1,128)}', space=vmem, size = 0x12000, scoped, tag = 'internal scratch']
  %s0 = inlined_call_operand.vmem [shape: f32[512,8], index: 0, kind: input, shape index: {}]
  %s1 = inlined_call_operand.vmem [shape: f32[1,8], index: 1, kind: input, shape index: {}]
  %s2 = inlined_call_operand.vmem [shape: f32[1,8], index: 2, kind: input, shape index: {}]
  %s3 = inlined_call_operand.vmem [shape: bf16[512,8], index: 3, kind: output, shape index: {}]
  %s4 = sld [smem:[#allocation0]]
  $region22: #{film_forward.5} parent=0
    _
  %s6 = ssub.s32 1, %s4
  %s7 = scalar_select 0, %s6, %s4
  // Predicated region
  $region2: #{film_forward.5} parent=0 // pred_check
    _
  $region3: #{film_forward.5} parent=0 // pred_check_branch
    %9 = sbr.rel (0) target = $region5
  $region4: #{film_forward.5} parent=0 // pred_region
    _
  $region5: #{film_forward.5} parent=0 // pred_fallthru
    _
  // Predicated region
  $region6: #{film_forward.5} parent=0 // pred_check
    _
  $region7: #{film_forward.5} parent=0 // pred_check_branch
    %11 = sbr.rel (0) target = $region9
  $region8: #{film_forward.5} parent=0 // pred_region
    _
  $region9: #{film_forward.5} parent=0 // pred_fallthru
    _
  // Predicated region
  $region10: #{film_forward.5} parent=0 // pred_check
    _
  $region11: #{film_forward.5} parent=0 // pred_check_branch
    %13 = sbr.rel (0) target = $region13
  $region12: #{film_forward.5} parent=0 // pred_region
    _
  $region13: #{film_forward.5} parent=0 // pred_fallthru
    _
  %v14 = vld [vmem:[%s0] sm:$0xff]
  %v15 = vld [vmem:[%s0 + $0x8] sm:$0xff]
  %v16 = vld [vmem:[%s0 + $0x10] sm:$0xff]
  %v17 = vld [vmem:[%s0 + $0x18] sm:$0xff]
  %v18 = vld [vmem:[%s0 + $0x20] sm:$0xff]
  %v19 = vld [vmem:[%s0 + $0x28] sm:$0xff]
  %v20 = vld [vmem:[%s0 + $0x30] sm:$0xff]
  %v21 = vld [vmem:[%s0 + $0x38] sm:$0xff]
  %v22 = vld [vmem:[%s0 + $0x40] sm:$0xff]
  %v23 = vld [vmem:[%s0 + $0x48] sm:$0xff]
  %v24 = vld [vmem:[%s0 + $0x50] sm:$0xff]
  %v25 = vld [vmem:[%s0 + $0x58] sm:$0xff]
  %v26 = vld [vmem:[%s0 + $0x60] sm:$0xff]
  %v27 = vld [vmem:[%s0 + $0x68] sm:$0xff]
  %v28 = vld [vmem:[%s0 + $0x70] sm:$0xff]
  %v29 = vld [vmem:[%s0 + $0x78] sm:$0xff]
  %v30 = vld [vmem:[%s0 + $0x80] sm:$0xff]
  %v31 = vld [vmem:[%s0 + $0x88] sm:$0xff]
  %v32 = vld [vmem:[%s0 + $0x90] sm:$0xff]
  %v33 = vld [vmem:[%s0 + $0x98] sm:$0xff]
  %v34 = vld [vmem:[%s0 + $0xa0] sm:$0xff]
  %v35 = vld [vmem:[%s0 + $0xa8] sm:$0xff]
  %v36 = vld [vmem:[%s0 + $0xb0] sm:$0xff]
  %v37 = vld [vmem:[%s0 + $0xb8] sm:$0xff]
  %v38 = vld [vmem:[%s0 + $0xc0] sm:$0xff]
  %v39 = vld [vmem:[%s0 + $0xc8] sm:$0xff]
  %v40 = vld [vmem:[%s0 + $0xd0] sm:$0xff]
  %v41 = vld [vmem:[%s0 + $0xd8] sm:$0xff]
  %v42 = vld [vmem:[%s0 + $0xe0] sm:$0xff]
  %v43 = vld [vmem:[%s0 + $0xe8] sm:$0xff]
  %v44 = vld [vmem:[%s0 + $0xf0] sm:$0xff]
  %v45 = vld [vmem:[%s0 + $0xf8] sm:$0xff]
  %v46 = vld [vmem:[%s0 + $0x100] sm:$0xff]
  %v47 = vld [vmem:[%s0 + $0x108] sm:$0xff]
  %v48 = vld [vmem:[%s0 + $0x110] sm:$0xff]
  %v49 = vld [vmem:[%s0 + $0x118] sm:$0xff]
  %v50 = vld [vmem:[%s0 + $0x120] sm:$0xff]
  %v51 = vld [vmem:[%s0 + $0x128] sm:$0xff]
  %v52 = vld [vmem:[%s0 + $0x130] sm:$0xff]
  %v53 = vld [vmem:[%s0 + $0x138] sm:$0xff]
  %v54 = vld [vmem:[%s0 + $0x140] sm:$0xff]
  %v55 = vld [vmem:[%s0 + $0x148] sm:$0xff]
  %v56 = vld [vmem:[%s0 + $0x150] sm:$0xff]
  %v57 = vld [vmem:[%s0 + $0x158] sm:$0xff]
  %v58 = vld [vmem:[%s0 + $0x160] sm:$0xff]
  %v59 = vld [vmem:[%s0 + $0x168] sm:$0xff]
  %v60 = vld [vmem:[%s0 + $0x170] sm:$0xff]
  %v61 = vld [vmem:[%s0 + $0x178] sm:$0xff]
  %v62 = vld [vmem:[%s0 + $0x180] sm:$0xff]
  %v63 = vld [vmem:[%s0 + $0x188] sm:$0xff]
  %v64 = vld [vmem:[%s0 + $0x190] sm:$0xff]
  %v65 = vld [vmem:[%s0 + $0x198] sm:$0xff]
  %v66 = vld [vmem:[%s0 + $0x1a0] sm:$0xff]
  %v67 = vld [vmem:[%s0 + $0x1a8] sm:$0xff]
  %v68 = vld [vmem:[%s0 + $0x1b0] sm:$0xff]
  %v69 = vld [vmem:[%s0 + $0x1b8] sm:$0xff]
  %v70 = vld [vmem:[%s0 + $0x1c0] sm:$0xff]
  %v71 = vld [vmem:[%s0 + $0x1c8] sm:$0xff]
  %v72 = vld [vmem:[%s0 + $0x1d0] sm:$0xff]
  %v73 = vld [vmem:[%s0 + $0x1d8] sm:$0xff]
  %v74 = vld [vmem:[%s0 + $0x1e0] sm:$0xff]
  %v75 = vld [vmem:[%s0 + $0x1e8] sm:$0xff]
  %v76 = vld [vmem:[%s0 + $0x1f0] sm:$0xff]
  %v77 = vld [vmem:[%s0 + $0x1f8] sm:$0xff]
  %v78 = vld [vmem:[%s1] sm:$0x1]
  %v80 = vlaneseq
  %v81 = vshrl.u32 %v80, 7
  %v82 = vsub.s32 0, %v81
  %v83 = vrot.slane %v78, %v82
  %v85 = vmul.f32 %v14, %v83
  %v86 = vmul.f32 %v15, %v83
  %v87 = vmul.f32 %v16, %v83
  %v88 = vmul.f32 %v17, %v83
  %v89 = vmul.f32 %v18, %v83
  %v90 = vmul.f32 %v19, %v83
  %v91 = vmul.f32 %v20, %v83
  %v92 = vmul.f32 %v21, %v83
  %v93 = vmul.f32 %v22, %v83
  %v94 = vmul.f32 %v23, %v83
  %v95 = vmul.f32 %v24, %v83
  %v96 = vmul.f32 %v25, %v83
  %v97 = vmul.f32 %v26, %v83
  %v98 = vmul.f32 %v27, %v83
  %v99 = vmul.f32 %v28, %v83
  %v100 = vmul.f32 %v29, %v83
  %v101 = vmul.f32 %v30, %v83
  %v102 = vmul.f32 %v31, %v83
  %v103 = vmul.f32 %v32, %v83
  %v104 = vmul.f32 %v33, %v83
  %v105 = vmul.f32 %v34, %v83
  %v106 = vmul.f32 %v35, %v83
  %v107 = vmul.f32 %v36, %v83
  %v108 = vmul.f32 %v37, %v83
  %v109 = vmul.f32 %v38, %v83
  %v110 = vmul.f32 %v39, %v83
  %v111 = vmul.f32 %v40, %v83
  %v112 = vmul.f32 %v41, %v83
  %v113 = vmul.f32 %v42, %v83
  %v114 = vmul.f32 %v43, %v83
  %v115 = vmul.f32 %v44, %v83
  %v116 = vmul.f32 %v45, %v83
  %v117 = vmul.f32 %v46, %v83
  %v118 = vmul.f32 %v47, %v83
  %v119 = vmul.f32 %v48, %v83
  %v120 = vmul.f32 %v49, %v83
  %v121 = vmul.f32 %v50, %v83
  %v122 = vmul.f32 %v51, %v83
  %v123 = vmul.f32 %v52, %v83
  %v124 = vmul.f32 %v53, %v83
  %v125 = vmul.f32 %v54, %v83
  %v126 = vmul.f32 %v55, %v83
  %v127 = vmul.f32 %v56, %v83
  %v128 = vmul.f32 %v57, %v83
  %v129 = vmul.f32 %v58, %v83
  %v130 = vmul.f32 %v59, %v83
  %v131 = vmul.f32 %v60, %v83
  %v132 = vmul.f32 %v61, %v83
  %v133 = vmul.f32 %v62, %v83
  %v134 = vmul.f32 %v63, %v83
  %v135 = vmul.f32 %v64, %v83
  %v136 = vmul.f32 %v65, %v83
  %v137 = vmul.f32 %v66, %v83
  %v138 = vmul.f32 %v67, %v83
  %v139 = vmul.f32 %v68, %v83
  %v140 = vmul.f32 %v69, %v83
  %v141 = vmul.f32 %v70, %v83
  %v142 = vmul.f32 %v71, %v83
  %v143 = vmul.f32 %v72, %v83
  %v144 = vmul.f32 %v73, %v83
  %v145 = vmul.f32 %v74, %v83
  %v146 = vmul.f32 %v75, %v83
  %v147 = vmul.f32 %v76, %v83
  %v148 = vmul.f32 %v77, %v83
  %v149 = vld [vmem:[%s2] sm:$0x1]
  %v151 = vlaneseq
  %v152 = vshrl.u32 %v151, 7
  %v153 = vsub.s32 0, %v152
  %v154 = vrot.slane %v149, %v153
  %v156 = vadd.f32 %v85, %v154
  %v157 = vadd.f32 %v86, %v154
  %v158 = vadd.f32 %v87, %v154
  %v159 = vadd.f32 %v88, %v154
  %v160 = vadd.f32 %v89, %v154
  %v161 = vadd.f32 %v90, %v154
  %v162 = vadd.f32 %v91, %v154
  %v163 = vadd.f32 %v92, %v154
  %v164 = vadd.f32 %v93, %v154
  %v165 = vadd.f32 %v94, %v154
  %v166 = vadd.f32 %v95, %v154
  %v167 = vadd.f32 %v96, %v154
  %v168 = vadd.f32 %v97, %v154
  %v169 = vadd.f32 %v98, %v154
  %v170 = vadd.f32 %v99, %v154
  %v171 = vadd.f32 %v100, %v154
  %v172 = vadd.f32 %v101, %v154
  %v173 = vadd.f32 %v102, %v154
  %v174 = vadd.f32 %v103, %v154
  %v175 = vadd.f32 %v104, %v154
  %v176 = vadd.f32 %v105, %v154
  %v177 = vadd.f32 %v106, %v154
  %v178 = vadd.f32 %v107, %v154
  %v179 = vadd.f32 %v108, %v154
  %v180 = vadd.f32 %v109, %v154
  %v181 = vadd.f32 %v110, %v154
  %v182 = vadd.f32 %v111, %v154
  %v183 = vadd.f32 %v112, %v154
  %v184 = vadd.f32 %v113, %v154
  %v185 = vadd.f32 %v114, %v154
  %v186 = vadd.f32 %v115, %v154
  %v187 = vadd.f32 %v116, %v154
  %v188 = vadd.f32 %v117, %v154
  %v189 = vadd.f32 %v118, %v154
  %v190 = vadd.f32 %v119, %v154
  %v191 = vadd.f32 %v120, %v154
  %v192 = vadd.f32 %v121, %v154
  %v193 = vadd.f32 %v122, %v154
  %v194 = vadd.f32 %v123, %v154
  %v195 = vadd.f32 %v124, %v154
  %v196 = vadd.f32 %v125, %v154
  %v197 = vadd.f32 %v126, %v154
  %v198 = vadd.f32 %v127, %v154
  %v199 = vadd.f32 %v128, %v154
  %v200 = vadd.f32 %v129, %v154
  %v201 = vadd.f32 %v130, %v154
  %v202 = vadd.f32 %v131, %v154
  %v203 = vadd.f32 %v132, %v154
  %v204 = vadd.f32 %v133, %v154
  %v205 = vadd.f32 %v134, %v154
  %v206 = vadd.f32 %v135, %v154
  %v207 = vadd.f32 %v136, %v154
  %v208 = vadd.f32 %v137, %v154
  %v209 = vadd.f32 %v138, %v154
  %v210 = vadd.f32 %v139, %v154
  %v211 = vadd.f32 %v140, %v154
  %v212 = vadd.f32 %v141, %v154
  %v213 = vadd.f32 %v142, %v154
  %v214 = vadd.f32 %v143, %v154
  %v215 = vadd.f32 %v144, %v154
  %v216 = vadd.f32 %v145, %v154
  %v217 = vadd.f32 %v146, %v154
  %v218 = vadd.f32 %v147, %v154
  %v219 = vadd.f32 %v148, %v154
  %v220 = vmax.f32 %v156, 0.0
  %v221 = vmax.f32 %v157, 0.0
  %v222 = vmax.f32 %v158, 0.0
  %v223 = vmax.f32 %v159, 0.0
  %v224 = vmax.f32 %v160, 0.0
  %v225 = vmax.f32 %v161, 0.0
  %v226 = vmax.f32 %v162, 0.0
  %v227 = vmax.f32 %v163, 0.0
  %v228 = vmax.f32 %v164, 0.0
  %v229 = vmax.f32 %v165, 0.0
  %v230 = vmax.f32 %v166, 0.0
  %v231 = vmax.f32 %v167, 0.0
  %v232 = vmax.f32 %v168, 0.0
  %v233 = vmax.f32 %v169, 0.0
  %v234 = vmax.f32 %v170, 0.0
  %v235 = vmax.f32 %v171, 0.0
  %v236 = vmax.f32 %v172, 0.0
  %v237 = vmax.f32 %v173, 0.0
  %v238 = vmax.f32 %v174, 0.0
  %v239 = vmax.f32 %v175, 0.0
  %v240 = vmax.f32 %v176, 0.0
  %v241 = vmax.f32 %v177, 0.0
  %v242 = vmax.f32 %v178, 0.0
  %v243 = vmax.f32 %v179, 0.0
  %v244 = vmax.f32 %v180, 0.0
  %v245 = vmax.f32 %v181, 0.0
  %v246 = vmax.f32 %v182, 0.0
  %v247 = vmax.f32 %v183, 0.0
  %v248 = vmax.f32 %v184, 0.0
  %v249 = vmax.f32 %v185, 0.0
  %v250 = vmax.f32 %v186, 0.0
  %v251 = vmax.f32 %v187, 0.0
  %v252 = vmax.f32 %v188, 0.0
  %v253 = vmax.f32 %v189, 0.0
  %v254 = vmax.f32 %v190, 0.0
  %v255 = vmax.f32 %v191, 0.0
  %v256 = vmax.f32 %v192, 0.0
  %v257 = vmax.f32 %v193, 0.0
  %v258 = vmax.f32 %v194, 0.0
  %v259 = vmax.f32 %v195, 0.0
  %v260 = vmax.f32 %v196, 0.0
  %v261 = vmax.f32 %v197, 0.0
  %v262 = vmax.f32 %v198, 0.0
  %v263 = vmax.f32 %v199, 0.0
  %v264 = vmax.f32 %v200, 0.0
  %v265 = vmax.f32 %v201, 0.0
  %v266 = vmax.f32 %v202, 0.0
  %v267 = vmax.f32 %v203, 0.0
  %v268 = vmax.f32 %v204, 0.0
  %v269 = vmax.f32 %v205, 0.0
  %v270 = vmax.f32 %v206, 0.0
  %v271 = vmax.f32 %v207, 0.0
  %v272 = vmax.f32 %v208, 0.0
  %v273 = vmax.f32 %v209, 0.0
  %v274 = vmax.f32 %v210, 0.0
  %v275 = vmax.f32 %v211, 0.0
  %v276 = vmax.f32 %v212, 0.0
  %v277 = vmax.f32 %v213, 0.0
  %v278 = vmax.f32 %v214, 0.0
  %v279 = vmax.f32 %v215, 0.0
  %v280 = vmax.f32 %v216, 0.0
  %v281 = vmax.f32 %v217, 0.0
  %v282 = vmax.f32 %v218, 0.0
  %v283 = vmax.f32 %v219, 0.0
  %v284 = vpack.c.bf16 %v221, %v220
  %v285 = vpack.c.bf16 %v223, %v222
  %v286 = vpack.c.bf16 %v225, %v224
  %v287 = vpack.c.bf16 %v227, %v226
  %v288 = vpack.c.bf16 %v229, %v228
  %v289 = vpack.c.bf16 %v231, %v230
  %v290 = vpack.c.bf16 %v233, %v232
  %v291 = vpack.c.bf16 %v235, %v234
  %v292 = vpack.c.bf16 %v237, %v236
  %v293 = vpack.c.bf16 %v239, %v238
  %v294 = vpack.c.bf16 %v241, %v240
  %v295 = vpack.c.bf16 %v243, %v242
  %v296 = vpack.c.bf16 %v245, %v244
  %v297 = vpack.c.bf16 %v247, %v246
  %v298 = vpack.c.bf16 %v249, %v248
  %v299 = vpack.c.bf16 %v251, %v250
  %v300 = vpack.c.bf16 %v253, %v252
  %v301 = vpack.c.bf16 %v255, %v254
  %v302 = vpack.c.bf16 %v257, %v256
  %v303 = vpack.c.bf16 %v259, %v258
  %v304 = vpack.c.bf16 %v261, %v260
  %v305 = vpack.c.bf16 %v263, %v262
  %v306 = vpack.c.bf16 %v265, %v264
  %v307 = vpack.c.bf16 %v267, %v266
  %v308 = vpack.c.bf16 %v269, %v268
  %v309 = vpack.c.bf16 %v271, %v270
  %v310 = vpack.c.bf16 %v273, %v272
  %v311 = vpack.c.bf16 %v275, %v274
  %v312 = vpack.c.bf16 %v277, %v276
  %v313 = vpack.c.bf16 %v279, %v278
  %v314 = vpack.c.bf16 %v281, %v280
  %v315 = vpack.c.bf16 %v283, %v282
  %v348 = vunpack.c.l.b16 %v284
  %v349 = vunpack.c.h.b16 %v284
  %v350 = vunpack.c.l.b16 %v285
  %v351 = vunpack.c.h.b16 %v285
  %v352 = vunpack.c.l.b16 %v286
  %v353 = vunpack.c.h.b16 %v286
  %v354 = vunpack.c.l.b16 %v287
  %v355 = vunpack.c.h.b16 %v287
  %v356 = vunpack.c.l.b16 %v288
  %v357 = vunpack.c.h.b16 %v288
  %v358 = vunpack.c.l.b16 %v289
  %v359 = vunpack.c.h.b16 %v289
  %v360 = vunpack.c.l.b16 %v290
  %v361 = vunpack.c.h.b16 %v290
  %v362 = vunpack.c.l.b16 %v291
  %v363 = vunpack.c.h.b16 %v291
  %v364 = vunpack.c.l.b16 %v292
  %v365 = vunpack.c.h.b16 %v292
  %v366 = vunpack.c.l.b16 %v293
  %v367 = vunpack.c.h.b16 %v293
  %v368 = vunpack.c.l.b16 %v294
  %v369 = vunpack.c.h.b16 %v294
  %v370 = vunpack.c.l.b16 %v295
  %v371 = vunpack.c.h.b16 %v295
  %v372 = vunpack.c.l.b16 %v296
  %v373 = vunpack.c.h.b16 %v296
  %v374 = vunpack.c.l.b16 %v297
  %v375 = vunpack.c.h.b16 %v297
  %v376 = vunpack.c.l.b16 %v298
  %v377 = vunpack.c.h.b16 %v298
  %v378 = vunpack.c.l.b16 %v299
  %v379 = vunpack.c.h.b16 %v299
  %v380 = vunpack.c.l.b16 %v300
  %v381 = vunpack.c.h.b16 %v300
  %v382 = vunpack.c.l.b16 %v301
  %v383 = vunpack.c.h.b16 %v301
  %v384 = vunpack.c.l.b16 %v302
  %v385 = vunpack.c.h.b16 %v302
  %v386 = vunpack.c.l.b16 %v303
  %v387 = vunpack.c.h.b16 %v303
  %v388 = vunpack.c.l.b16 %v304
  %v389 = vunpack.c.h.b16 %v304
  %v390 = vunpack.c.l.b16 %v305
  %v391 = vunpack.c.h.b16 %v305
  %v392 = vunpack.c.l.b16 %v306
  %v393 = vunpack.c.h.b16 %v306
  %v394 = vunpack.c.l.b16 %v307
  %v395 = vunpack.c.h.b16 %v307
  %v396 = vunpack.c.l.b16 %v308
  %v397 = vunpack.c.h.b16 %v308
  %v398 = vunpack.c.l.b16 %v309
  %v399 = vunpack.c.h.b16 %v309
  %v400 = vunpack.c.l.b16 %v310
  %v401 = vunpack.c.h.b16 %v310
  %v402 = vunpack.c.l.b16 %v311
  %v403 = vunpack.c.h.b16 %v311
  %v404 = vunpack.c.l.b16 %v312
  %v405 = vunpack.c.h.b16 %v312
  %v406 = vunpack.c.l.b16 %v313
  %v407 = vunpack.c.h.b16 %v313
  %v408 = vunpack.c.l.b16 %v314
  %v409 = vunpack.c.h.b16 %v314
  %v410 = vunpack.c.l.b16 %v315
  %v411 = vunpack.c.h.b16 %v315
  %v412 = vpack.c.b16 %v348, %v348
  %v413 = vpack.c.b16 %v349, %v349
  %v414 = vpack.c.b16 %v350, %v350
  %v415 = vpack.c.b16 %v351, %v351
  %v416 = vpack.c.b16 %v352, %v352
  %v417 = vpack.c.b16 %v353, %v353
  %v418 = vpack.c.b16 %v354, %v354
  %v419 = vpack.c.b16 %v355, %v355
  %v420 = vpack.c.b16 %v356, %v356
  %v421 = vpack.c.b16 %v357, %v357
  %v422 = vpack.c.b16 %v358, %v358
  %v423 = vpack.c.b16 %v359, %v359
  %v424 = vpack.c.b16 %v360, %v360
  %v425 = vpack.c.b16 %v361, %v361
  %v426 = vpack.c.b16 %v362, %v362
  %v427 = vpack.c.b16 %v363, %v363
  %v428 = vpack.c.b16 %v364, %v364
  %v429 = vpack.c.b16 %v365, %v365
  %v430 = vpack.c.b16 %v366, %v366
  %v431 = vpack.c.b16 %v367, %v367
  %v432 = vpack.c.b16 %v368, %v368
  %v433 = vpack.c.b16 %v369, %v369
  %v434 = vpack.c.b16 %v370, %v370
  %v435 = vpack.c.b16 %v371, %v371
  %v436 = vpack.c.b16 %v372, %v372
  %v437 = vpack.c.b16 %v373, %v373
  %v438 = vpack.c.b16 %v374, %v374
  %v439 = vpack.c.b16 %v375, %v375
  %v440 = vpack.c.b16 %v376, %v376
  %v441 = vpack.c.b16 %v377, %v377
  %v442 = vpack.c.b16 %v378, %v378
  %v443 = vpack.c.b16 %v379, %v379
  %v444 = vpack.c.b16 %v380, %v380
  %v445 = vpack.c.b16 %v381, %v381
  %v446 = vpack.c.b16 %v382, %v382
  %v447 = vpack.c.b16 %v383, %v383
  %v448 = vpack.c.b16 %v384, %v384
  %v449 = vpack.c.b16 %v385, %v385
  %v450 = vpack.c.b16 %v386, %v386
  %v451 = vpack.c.b16 %v387, %v387
  %v452 = vpack.c.b16 %v388, %v388
  %v453 = vpack.c.b16 %v389, %v389
  %v454 = vpack.c.b16 %v390, %v390
  %v455 = vpack.c.b16 %v391, %v391
  %v456 = vpack.c.b16 %v392, %v392
  %v457 = vpack.c.b16 %v393, %v393
  %v458 = vpack.c.b16 %v394, %v394
  %v459 = vpack.c.b16 %v395, %v395
  %v460 = vpack.c.b16 %v396, %v396
  %v461 = vpack.c.b16 %v397, %v397
  %v462 = vpack.c.b16 %v398, %v398
  %v463 = vpack.c.b16 %v399, %v399
  %v464 = vpack.c.b16 %v400, %v400
  %v465 = vpack.c.b16 %v401, %v401
  %v466 = vpack.c.b16 %v402, %v402
  %v467 = vpack.c.b16 %v403, %v403
  %v468 = vpack.c.b16 %v404, %v404
  %v469 = vpack.c.b16 %v405, %v405
  %v470 = vpack.c.b16 %v406, %v406
  %v471 = vpack.c.b16 %v407, %v407
  %v472 = vpack.c.b16 %v408, %v408
  %v473 = vpack.c.b16 %v409, %v409
  %v474 = vpack.c.b16 %v410, %v410
  %v475 = vpack.c.b16 %v411, %v411
  %vm540 = vcmask 60416
  %541 = vst.msk [vmem:[%s3] sm:$0xf] %vm540, %v412
  %542 = vst.msk [vmem:[%s3 + $0x4] sm:$0xf] %vm540, %v413
  %543 = vst.msk [vmem:[%s3 + $0x8] sm:$0xf] %vm540, %v414
  %544 = vst.msk [vmem:[%s3 + $0xc] sm:$0xf] %vm540, %v415
  %545 = vst.msk [vmem:[%s3 + $0x10] sm:$0xf] %vm540, %v416
  %546 = vst.msk [vmem:[%s3 + $0x14] sm:$0xf] %vm540, %v417
  %547 = vst.msk [vmem:[%s3 + $0x18] sm:$0xf] %vm540, %v418
  %548 = vst.msk [vmem:[%s3 + $0x1c] sm:$0xf] %vm540, %v419
  %549 = vst.msk [vmem:[%s3 + $0x20] sm:$0xf] %vm540, %v420
  %550 = vst.msk [vmem:[%s3 + $0x24] sm:$0xf] %vm540, %v421
  %551 = vst.msk [vmem:[%s3 + $0x28] sm:$0xf] %vm540, %v422
  %552 = vst.msk [vmem:[%s3 + $0x2c] sm:$0xf] %vm540, %v423
  %553 = vst.msk [vmem:[%s3 + $0x30] sm:$0xf] %vm540, %v424
  %554 = vst.msk [vmem:[%s3 + $0x34] sm:$0xf] %vm540, %v425
  %555 = vst.msk [vmem:[%s3 + $0x38] sm:$0xf] %vm540, %v426
  %556 = vst.msk [vmem:[%s3 + $0x3c] sm:$0xf] %vm540, %v427
  %557 = vst.msk [vmem:[%s3 + $0x40] sm:$0xf] %vm540, %v428
  %558 = vst.msk [vmem:[%s3 + $0x44] sm:$0xf] %vm540, %v429
  %559 = vst.msk [vmem:[%s3 + $0x48] sm:$0xf] %vm540, %v430
  %560 = vst.msk [vmem:[%s3 + $0x4c] sm:$0xf] %vm540, %v431
  %561 = vst.msk [vmem:[%s3 + $0x50] sm:$0xf] %vm540, %v432
  %562 = vst.msk [vmem:[%s3 + $0x54] sm:$0xf] %vm540, %v433
  %563 = vst.msk [vmem:[%s3 + $0x58] sm:$0xf] %vm540, %v434
  %564 = vst.msk [vmem:[%s3 + $0x5c] sm:$0xf] %vm540, %v435
  %565 = vst.msk [vmem:[%s3 + $0x60] sm:$0xf] %vm540, %v436
  %566 = vst.msk [vmem:[%s3 + $0x64] sm:$0xf] %vm540, %v437
  %567 = vst.msk [vmem:[%s3 + $0x68] sm:$0xf] %vm540, %v438
  %568 = vst.msk [vmem:[%s3 + $0x6c] sm:$0xf] %vm540, %v439
  %569 = vst.msk [vmem:[%s3 + $0x70] sm:$0xf] %vm540, %v440
  %570 = vst.msk [vmem:[%s3 + $0x74] sm:$0xf] %vm540, %v441
  %571 = vst.msk [vmem:[%s3 + $0x78] sm:$0xf] %vm540, %v442
  %572 = vst.msk [vmem:[%s3 + $0x7c] sm:$0xf] %vm540, %v443
  %573 = vst.msk [vmem:[%s3 + $0x80] sm:$0xf] %vm540, %v444
  %574 = vst.msk [vmem:[%s3 + $0x84] sm:$0xf] %vm540, %v445
  %575 = vst.msk [vmem:[%s3 + $0x88] sm:$0xf] %vm540, %v446
  %576 = vst.msk [vmem:[%s3 + $0x8c] sm:$0xf] %vm540, %v447
  %577 = vst.msk [vmem:[%s3 + $0x90] sm:$0xf] %vm540, %v448
  %578 = vst.msk [vmem:[%s3 + $0x94] sm:$0xf] %vm540, %v449
  %579 = vst.msk [vmem:[%s3 + $0x98] sm:$0xf] %vm540, %v450
  %580 = vst.msk [vmem:[%s3 + $0x9c] sm:$0xf] %vm540, %v451
  %581 = vst.msk [vmem:[%s3 + $0xa0] sm:$0xf] %vm540, %v452
  %582 = vst.msk [vmem:[%s3 + $0xa4] sm:$0xf] %vm540, %v453
  %583 = vst.msk [vmem:[%s3 + $0xa8] sm:$0xf] %vm540, %v454
  %584 = vst.msk [vmem:[%s3 + $0xac] sm:$0xf] %vm540, %v455
  %585 = vst.msk [vmem:[%s3 + $0xb0] sm:$0xf] %vm540, %v456
  %586 = vst.msk [vmem:[%s3 + $0xb4] sm:$0xf] %vm540, %v457
  %587 = vst.msk [vmem:[%s3 + $0xb8] sm:$0xf] %vm540, %v458
  %588 = vst.msk [vmem:[%s3 + $0xbc] sm:$0xf] %vm540, %v459
  %589 = vst.msk [vmem:[%s3 + $0xc0] sm:$0xf] %vm540, %v460
  %590 = vst.msk [vmem:[%s3 + $0xc4] sm:$0xf] %vm540, %v461
  %591 = vst.msk [vmem:[%s3 + $0xc8] sm:$0xf] %vm540, %v462
  %592 = vst.msk [vmem:[%s3 + $0xcc] sm:$0xf] %vm540, %v463
  %593 = vst.msk [vmem:[%s3 + $0xd0] sm:$0xf] %vm540, %v464
  %594 = vst.msk [vmem:[%s3 + $0xd4] sm:$0xf] %vm540, %v465
  %595 = vst.msk [vmem:[%s3 + $0xd8] sm:$0xf] %vm540, %v466
  %596 = vst.msk [vmem:[%s3 + $0xdc] sm:$0xf] %vm540, %v467
  %597 = vst.msk [vmem:[%s3 + $0xe0] sm:$0xf] %vm540, %v468
  %598 = vst.msk [vmem:[%s3 + $0xe4] sm:$0xf] %vm540, %v469
  %599 = vst.msk [vmem:[%s3 + $0xe8] sm:$0xf] %vm540, %v470
  %600 = vst.msk [vmem:[%s3 + $0xec] sm:$0xf] %vm540, %v471
  %601 = vst.msk [vmem:[%s3 + $0xf0] sm:$0xf] %vm540, %v472
  %602 = vst.msk [vmem:[%s3 + $0xf4] sm:$0xf] %vm540, %v473
  %603 = vst.msk [vmem:[%s3 + $0xf8] sm:$0xf] %vm540, %v474
  %604 = vst.msk [vmem:[%s3 + $0xfc] sm:$0xf] %vm540, %v475
  // Predicated region
  $region14: #{film_forward.5} parent=0 // pred_check
    _
  $region15: #{film_forward.5} parent=0 // pred_check_branch
    %606 = sbr.rel (0) target = $region17
  $region16: #{film_forward.5} parent=0 // pred_region
    _
  $region17: #{film_forward.5} parent=0 // pred_fallthru
    _
  // Predicated region
  $region18: #{film_forward.5} parent=0 // pred_check
    _
  $region19: #{film_forward.5} parent=0 // pred_check_branch
    %608 = sbr.rel (0) target = $region21
  $region20: #{film_forward.5} parent=0 // pred_region
    _
  $region21: #{film_forward.5} parent=0 // pred_fallthru
    _

// kernel: film_forward.4
$region0: #{film_forward.4}
  #allocation0 [shape = 'u32[]', space=smem, size = 0x4, offset = 0x4, fixed_abs, tag = 'smem constant byte address 0x4 - core index']
  #allocation1 [shape = 'u32[144,128]{1,0:T(1,128)}', space=vmem, size = 0x12000, scoped, tag = 'internal scratch']
  %s0 = inlined_call_operand.vmem [shape: bf16[2,18,18,4], index: 0, kind: input, shape index: {}]
  %s1 = inlined_call_operand.vmem [shape: bf16[36,8], index: 1, kind: input, shape index: {}]
  %s2 = inlined_call_operand.vmem [shape: f32[1,8], index: 2, kind: input, shape index: {}]
  %s3 = inlined_call_operand.vmem [shape: f32[2,1,8], index: 3, kind: input, shape index: {}]
  %s4 = inlined_call_operand.vmem [shape: f32[2,1,8], index: 4, kind: input, shape index: {}]
  %s5 = inlined_call_operand.vmem [shape: f32[2,256,8], index: 5, kind: output, shape index: {0}]
  %s6 = inlined_call_operand.vmem [shape: f32[2,1,2,8], index: 6, kind: output, shape index: {1}]
  %7 = xla_tuple %s5, %s6
  %s8 = sld [smem:[#allocation0]]
  $region61: #{film_forward.4} parent=0
    _
  %s10 = ssub.s32 1, %s8
  %s11 = scalar_select 0, %s10, %s8
  loop: start=0, step=1, limit=4
  $region2: #{film_forward.4} parent=0 // loop_pre_header
    _
  $region3: #{film_forward.4} parent=0 // loop_header
    %s13 = sphi 0, %s17
    %p14 = scmp.ge.s32.totalorder %s13, 4
    %s20 = sphi 0, %s32
    %s21 = sphi 0, %s28
    %s22 = sphi 0, %s20
    %s23 = sphi 0, %s21
    %s24 = sphi 0, %s22
    %s25 = sphi 0, %s23
    %s35 = sphi 0, %s37
    %s38 = sphi 0, %s35
    %s39 = sphi 0, %s38
    %s55 = sphi 0, %s39
    %s59 = sphi 0, %s59
    %s61 = sphi 0, %s59
    %s62 = sphi 0, %s61
    %s76 = sphi 0, %s62
    %s80 = sphi 0, %s80
    %s82 = sphi 0, %s80
    %s83 = sphi 0, %s82
    %s97 = sphi 0, %s83
    %s103 = sphi 0, %s105
    %s106 = sphi 0, %s103
    %s107 = sphi 0, %s106
    %s123 = sphi 0, %s107
    %s129 = sphi 0, %s131
    %s132 = sphi 0, %s129
    %s133 = sphi 0, %s132
    %s149 = sphi 0, %s133
    %s157 = sphi 0, %s159
    %s160 = sphi 0, %s157
    %s161 = sphi 0, %s160
    %s177 = sphi 0, %s161
    %s185 = sphi 0, %s187
    %s188 = sphi 0, %s185
    %s189 = sphi 0, %s188
    %s205 = sphi 0, %s189
  $region4: #{film_forward.4} parent=0 // loop_header_branch
    %16 = sbr.rel (%p14) target = $region8
  $region5: #{film_forward.4} parent=0 // loop_body
    %s18 = ssub.s32 %s13, 1
    %s19 = ssub.s32 %s13, 2
    %s26 = sadd.s32 1, %s21
    %p27 = scmp.ge.s32.totalorder %s26, 1
    %s28 = scalar_select %p27, 0, %s26
    %s29 = sadd.s32 1, %s20
    %s30 = scalar_select %p27, %s29, %s20
    %p31 = scmp.ge.s32.totalorder %s30, 2
    %s32 = scalar_select %p31, 0, %s30
    %s33 = ssub.s32 %s20, %s32
    %p34 = scmp.eq.s32.totalorder %s33, 0
    %s36 = sadd.s32 %s35, 1
    %s37 = scalar_select %p34, %s35, %s36
    %p40 = pneg %p34
    %p41 = scmp.eq.s32.totalorder %s13, 1
    %p42 = por %p40, %p41
    %p43 = scmp.ne.s32.totalorder %s35, %s38
    %p44 = scmp.eq.s32.totalorder %s13, 0
    %p45 = por %p43, %p44
    %p46 = scmp.ne.s32.totalorder %s35, %s38
    %p47 = scmp.eq.s32.totalorder %s18, 1
    %p48 = por %p46, %p47
    %p49 = scmp.ne.s32.totalorder %s38, %s39
    %p50 = scmp.eq.s32.totalorder %s18, 0
    %p51 = por %p49, %p50
    %p52 = scmp.ne.s32.totalorder %s38, %s39
    %p53 = scmp.eq.s32.totalorder %s19, 1
    %p54 = por %p52, %p53
    %p56 = scmp.ne.s32.totalorder %s39, %s55
    %p57 = scmp.eq.s32.totalorder %s19, 0
    %p58 = por %p56, %p57
    %s60 = sadd.s32 %s59, 1
    %p63 = scmp.eq.s32.totalorder %s13, 1
    %p64 = scmp.ne.s32.totalorder %s59, %s61
    %p65 = scmp.eq.s32.totalorder %s13, 0
    %p66 = por %p64, %p65
    %p67 = scmp.ne.s32.totalorder %s59, %s61
    %p68 = scmp.eq.s32.totalorder %s18, 1
    %p69 = por %p67, %p68
    %p70 = scmp.ne.s32.totalorder %s61, %s62
    %p71 = scmp.eq.s32.totalorder %s18, 0
    %p72 = por %p70, %p71
    %p73 = scmp.ne.s32.totalorder %s61, %s62
    %p74 = scmp.eq.s32.totalorder %s19, 1
    %p75 = por %p73, %p74
    %p77 = scmp.ne.s32.totalorder %s62, %s76
    %p78 = scmp.eq.s32.totalorder %s19, 0
    %p79 = por %p77, %p78
    %s81 = sadd.s32 %s80, 1
    %p84 = scmp.eq.s32.totalorder %s13, 1
    %p85 = scmp.ne.s32.totalorder %s80, %s82
    %p86 = scmp.eq.s32.totalorder %s13, 0
    %p87 = por %p85, %p86
    %p88 = scmp.ne.s32.totalorder %s80, %s82
    %p89 = scmp.eq.s32.totalorder %s18, 1
    %p90 = por %p88, %p89
    %p91 = scmp.ne.s32.totalorder %s82, %s83
    %p92 = scmp.eq.s32.totalorder %s18, 0
    %p93 = por %p91, %p92
    %p94 = scmp.ne.s32.totalorder %s82, %s83
    %p95 = scmp.eq.s32.totalorder %s19, 1
    %p96 = por %p94, %p95
    %p98 = scmp.ne.s32.totalorder %s83, %s97
    %p99 = scmp.eq.s32.totalorder %s19, 0
    %p100 = por %p98, %p99
    %s101 = ssub.s32 %s20, %s32
    %p102 = scmp.eq.s32.totalorder %s101, 0
    %s104 = sadd.s32 %s103, 1
    %s105 = scalar_select %p102, %s103, %s104
    %p108 = pneg %p102
    %p109 = scmp.eq.s32.totalorder %s13, 1
    %p110 = por %p108, %p109
    %p111 = scmp.ne.s32.totalorder %s103, %s106
    %p112 = scmp.eq.s32.totalorder %s13, 0
    %p113 = por %p111, %p112
    %p114 = scmp.ne.s32.totalorder %s103, %s106
    %p115 = scmp.eq.s32.totalorder %s18, 1
    %p116 = por %p114, %p115
    %p117 = scmp.ne.s32.totalorder %s106, %s107
    %p118 = scmp.eq.s32.totalorder %s18, 0
    %p119 = por %p117, %p118
    %p120 = scmp.ne.s32.totalorder %s106, %s107
    %p121 = scmp.eq.s32.totalorder %s19, 1
    %p122 = por %p120, %p121
    %p124 = scmp.ne.s32.totalorder %s107, %s123
    %p125 = scmp.eq.s32.totalorder %s19, 0
    %p126 = por %p124, %p125
    %s127 = ssub.s32 %s20, %s32
    %p128 = scmp.eq.s32.totalorder %s127, 0
    %s130 = sadd.s32 %s129, 1
    %s131 = scalar_select %p128, %s129, %s130
    %p134 = pneg %p128
    %p135 = scmp.eq.s32.totalorder %s13, 1
    %p136 = por %p134, %p135
    %p137 = scmp.ne.s32.totalorder %s129, %s132
    %p138 = scmp.eq.s32.totalorder %s13, 0
    %p139 = por %p137, %p138
    %p140 = scmp.ne.s32.totalorder %s129, %s132
    %p141 = scmp.eq.s32.totalorder %s18, 1
    %p142 = por %p140, %p141
    %p143 = scmp.ne.s32.totalorder %s132, %s133
    %p144 = scmp.eq.s32.totalorder %s18, 0
    %p145 = por %p143, %p144
    %p146 = scmp.ne.s32.totalorder %s132, %s133
    %p147 = scmp.eq.s32.totalorder %s19, 1
    %p148 = por %p146, %p147
    %p150 = scmp.ne.s32.totalorder %s133, %s149
    %p151 = scmp.eq.s32.totalorder %s19, 0
    %p152 = por %p150, %p151
    %s153 = ssub.s32 %s20, %s32
    %s154 = ssub.s32 %s21, %s28
    %s155 = sor.u32 %s153, %s154
    %p156 = scmp.eq.s32.totalorder %s155, 0
    %s158 = sadd.s32 %s157, 1
    %s159 = scalar_select %p156, %s157, %s158
    %p162 = pneg %p156
    %p163 = scmp.eq.s32.totalorder %s13, 1
    %p164 = por %p162, %p163
    %p165 = scmp.ne.s32.totalorder %s157, %s160
    %p166 = scmp.eq.s32.totalorder %s13, 0
    %p167 = por %p165, %p166
    %p168 = scmp.ne.s32.totalorder %s157, %s160
    %p169 = scmp.eq.s32.totalorder %s18, 1
    %p170 = por %p168, %p169
    %p171 = scmp.ne.s32.totalorder %s160, %s161
    %p172 = scmp.eq.s32.totalorder %s18, 0
    %p173 = por %p171, %p172
    %p174 = scmp.ne.s32.totalorder %s160, %s161
    %p175 = scmp.eq.s32.totalorder %s19, 1
    %p176 = por %p174, %p175
    %p178 = scmp.ne.s32.totalorder %s161, %s177
    %p179 = scmp.eq.s32.totalorder %s19, 0
    %p180 = por %p178, %p179
    %s181 = ssub.s32 %s20, %s32
    %s182 = ssub.s32 %s21, %s28
    %s183 = sor.u32 %s181, %s182
    %p184 = scmp.eq.s32.totalorder %s183, 0
    %s186 = sadd.s32 %s185, 1
    %s187 = scalar_select %p184, %s185, %s186
    %p190 = pneg %p184
    %p191 = scmp.eq.s32.totalorder %s13, 1
    %p192 = por %p190, %p191
    %p193 = scmp.ne.s32.totalorder %s185, %s188
    %p194 = scmp.eq.s32.totalorder %s13, 0
    %p195 = por %p193, %p194
    %p196 = scmp.ne.s32.totalorder %s185, %s188
    %p197 = scmp.eq.s32.totalorder %s18, 1
    %p198 = por %p196, %p197
    %p199 = scmp.ne.s32.totalorder %s188, %s189
    %p200 = scmp.eq.s32.totalorder %s18, 0
    %p201 = por %p199, %p200
    %p202 = scmp.ne.s32.totalorder %s188, %s189
    %p203 = scmp.eq.s32.totalorder %s19, 1
    %p204 = por %p202, %p203
    %p206 = scmp.ne.s32.totalorder %s189, %s205
    %p207 = scmp.eq.s32.totalorder %s19, 0
    %p208 = por %p206, %p207
    %p209 = scmp.le.s32.totalorder 1, %s13
    %p210 = scmp.lt.s32.totalorder %s13, 3
    %p211 = pnand %p209, %p210
    %p212 = pneg %p211
    // Predicated region
    $region9: #{film_forward.4} parent=5 // pred_check
      _
    $region10: #{film_forward.4} parent=5 // pred_check_branch
      %214 = sbr.rel (%p211) target = $region12
    $region11: #{film_forward.4} parent=5 // pred_region
      %s215 = ssub.s32 %s13, 1
      // Predicated region
      $region13: #{film_forward.4} parent=11 // pred_check
        %p216 = pneg %p72
      $region14: #{film_forward.4} parent=11 // pred_check_branch
        %218 = sbr.rel (%p216) target = $region16
      $region15: #{film_forward.4} parent=11 // pred_region
        _
      $region16: #{film_forward.4} parent=11 // pred_fallthru
        _
      // Predicated region
      $region17: #{film_forward.4} parent=11 // pred_check
        %p219 = pneg %p93
      $region18: #{film_forward.4} parent=11 // pred_check_branch
        %221 = sbr.rel (%p219) target = $region20
      $region19: #{film_forward.4} parent=11 // pred_region
        _
      $region20: #{film_forward.4} parent=11 // pred_fallthru
        _
    $region12: #{film_forward.4} parent=5 // pred_fallthru
      _
    %p222 = scmp.lt.s32.totalorder %s13, 2
    // Predicated region
    $region21: #{film_forward.4} parent=5 // pred_check
      %p223 = pneg %p222
    $region22: #{film_forward.4} parent=5 // pred_check_branch
      %225 = sbr.rel (%p223) target = $region24
    $region23: #{film_forward.4} parent=5 // pred_region
      // Predicated region
      $region25: #{film_forward.4} parent=23 // pred_check
        %p226 = pneg %p45
      $region26: #{film_forward.4} parent=23 // pred_check_branch
        %228 = sbr.rel (%p226) target = $region28
      $region27: #{film_forward.4} parent=23 // pred_region
        %p229 = scmp.lt.s32.totalorder %s20, 1
        %s230 = scalar_select %p229, %s20, 1
        %s231 = smul.addr %s230, 54
        %s232 = smul.addr %s231, 4
        %s233 = scalar_lea.vmem %s0, %s232
      $region28: #{film_forward.4} parent=23 // pred_fallthru
        _
      // Predicated region
      $region29: #{film_forward.4} parent=23 // pred_check
        %p234 = pneg %p113
      $region30: #{film_forward.4} parent=23 // pred_check_branch
        %236 = sbr.rel (%p234) target = $region32
      $region31: #{film_forward.4} parent=23 // pred_region
        %p237 = scmp.lt.s32.totalorder %s20, 1
        %s238 = scalar_select %p237, %s20, 1
        %s239 = scalar_lea.vmem %s3, %s238
      $region32: #{film_forward.4} parent=23 // pred_fallthru
        _
      // Predicated region
      $region33: #{film_forward.4} parent=23 // pred_check
        %p240 = pneg %p139
      $region34: #{film_forward.4} parent=23 // pred_check_branch
        %242 = sbr.rel (%p240) target = $region36
      $region35: #{film_forward.4} parent=23 // pred_region
        %p243 = scmp.lt.s32.totalorder %s20, 1
        %s244 = scalar_select %p243, %s20, 1
        %s245 = scalar_lea.vmem %s4, %s244
      $region36: #{film_forward.4} parent=23 // pred_fallthru
        _
    $region24: #{film_forward.4} parent=5 // pred_fallthru
      _
    %p246 = scmp.le.s32.totalorder 1, %s13
    %p247 = scmp.lt.s32.totalorder %s13, 3
    %p248 = pnand %p246, %p247
    %p249 = pneg %p248
    // Predicated region
    $region37: #{film_forward.4} parent=5 // pred_check
      _
    $region38: #{film_forward.4} parent=5 // pred_check_branch
      %251 = sbr.rel (%p248) target = $region40
    $region39: #{film_forward.4} parent=5 // pred_region
      %s252 = ssub.s32 %s13, 1
      %p253 = scmp.lt.s32.totalorder %s22, 1
      %s254 = scalar_select %p253, %s22, 1
      %s255 = smul.addr %s254, 54
      %s256 = smul.addr %s255, 4
      %s257 = scalar_lea.vmem %s0, %s256
      %p258 = pneg %p51
      %p259 = pneg %p48
      %p260 = pneg %p72
      %p261 = pneg %p69
      %p262 = pneg %p93
      %p263 = pneg %p90
      %p264 = scmp.lt.s32.totalorder %s22, 1
      %s265 = scalar_select %p264, %s22, 1
      %s266 = scalar_lea.vmem %s3, %s265
      %p267 = pneg %p119
      %p268 = pneg %p116
      %p269 = scmp.lt.s32.totalorder %s22, 1
      %s270 = scalar_select %p269, %s22, 1
      %s271 = scalar_lea.vmem %s4, %s270
      %p272 = pneg %p145
      %p273 = pneg %p142
      %p274 = pneg %p173
      %p275 = pneg %p170
      %s276 = smul.u32 32, %s23
      %p277 = scmp.lt.s32.totalorder %s22, 1
      %s278 = scalar_select %p277, %s22, 1
      %p279 = scmp.lt.s32.totalorder %s276, 31
      %s280 = scalar_select %p279, %s276, 31
      %s281 = smul.addr %s278, 32
      %s282 = sadd.s32 %s280, %s281
      %s283 = smul.addr %s282, 8
      %s284 = scalar_lea.vmem %s5, %s283
      %p285 = pneg %p201
      %p286 = pneg %p198
      %p287 = scmp.lt.s32.totalorder %s22, 1
      %s288 = scalar_select %p287, %s22, 1
      %p289 = scmp.lt.s32.totalorder %s23, 0
      %s290 = scalar_select %p289, %s23, 0
      %s291 = sadd.s32 %s290, %s288
      %s292 = smul.addr %s291, 2
      %s293 = scalar_lea.vmem %s6, %s292
      %p294 = scmp.lt.s32.totalorder %s22, 1
      %s295 = scalar_select %p294, %s22, 1
      %s296 = smul.addr %s295, 54
      %s297 = smul.addr %s296, 4
      %s298 = scalar_lea.vmem %s0, %s297
      %p299 = scmp.lt.s32.totalorder %s22, 1
      %s300 = scalar_select %p299, %s22, 1
      %s301 = scalar_lea.vmem %s3, %s300
      %p302 = scmp.lt.s32.totalorder %s22, 1
      %s303 = scalar_select %p302, %s22, 1
      %s304 = scalar_lea.vmem %s4, %s303
      %s305 = smul.u32 32, %s23
      %p306 = scmp.lt.s32.totalorder %s22, 1
      %s307 = scalar_select %p306, %s22, 1
      %p308 = scmp.lt.s32.totalorder %s305, 31
      %s309 = scalar_select %p308, %s305, 31
      %s310 = smul.addr %s307, 32
      %s311 = sadd.s32 %s309, %s310
      %s312 = smul.addr %s311, 8
      %s313 = scalar_lea.vmem %s5, %s312
      %s314 = smul.u32 32, %s23
      %p315 = scmp.lt.s32.totalorder %s22, 1
      %s316 = scalar_select %p315, %s22, 1
      %p317 = scmp.lt.s32.totalorder %s23, 0
      %s318 = scalar_select %p317, %s23, 0
      %s319 = sadd.s32 %s318, %s316
      %s320 = smul.addr %s319, 2
      %s321 = scalar_lea.vmem %s6, %s320
      %s323 = smul.u32 %s23, 16
      %s324 = smul.u32 %s323, 3
      %s325 = smul.addr %s324, 4
      %s326 = scalar_lea.vmem %s298, %s325
      %v327 = vld [vmem:[%s326] sm:$0xf]
      %v328 = vld [vmem:[%s326 + $0x4] sm:$0xf]
      %v329 = vld [vmem:[%s326 + $0x8] sm:$0x1]
      %v330 = vld [vmem:[%s326 + $0xc] sm:$0xf]
      %v331 = vld [vmem:[%s326 + $0x10] sm:$0xf]
      %v332 = vld [vmem:[%s326 + $0x14] sm:$0x1]
      %v333 = vld [vmem:[%s326 + $0x18] sm:$0xf]
      %v334 = vld [vmem:[%s326 + $0x1c] sm:$0xf]
      %v335 = vld [vmem:[%s326 + $0x20] sm:$0x1]
      %v336 = vld [vmem:[%s326 + $0x24] sm:$0xf]
      %v337 = vld [vmem:[%s326 + $0x28] sm:$0xf]
      %v338 = vld [vmem:[%s326 + $0x2c] sm:$0x1]
      %v339 = vld [vmem:[%s326 + $0x30] sm:$0xf]
      %v340 = vld [vmem:[%s326 + $0x34] sm:$0xf]
      %v341 = vld [vmem:[%s326 + $0x38] sm:$0x1]
      %v342 = vld [vmem:[%s326 + $0x3c] sm:$0xf]
      %v343 = vld [vmem:[%s326 + $0x40] sm:$0xf]
      %v344 = vld [vmem:[%s326 + $0x44] sm:$0x1]
      %v345 = vld [vmem:[%s326 + $0x48] sm:$0xf]
      %v346 = vld [vmem:[%s326 + $0x4c] sm:$0xf]
      %v347 = vld [vmem:[%s326 + $0x50] sm:$0x1]
      %v348 = vld [vmem:[%s326 + $0x54] sm:$0xf]
      %v349 = vld [vmem:[%s326 + $0x58] sm:$0xf]
      %v350 = vld [vmem:[%s326 + $0x5c] sm:$0x1]
      %v351 = vld [vmem:[%s326 + $0x60] sm:$0xf]
      %v352 = vld [vmem:[%s326 + $0x64] sm:$0xf]
      %v353 = vld [vmem:[%s326 + $0x68] sm:$0x1]
      %v354 = vld [vmem:[%s326 + $0x6c] sm:$0xf]
      %v355 = vld [vmem:[%s326 + $0x70] sm:$0xf]
      %v356 = vld [vmem:[%s326 + $0x74] sm:$0x1]
      %v357 = vld [vmem:[%s326 + $0x78] sm:$0xf]
      %v358 = vld [vmem:[%s326 + $0x7c] sm:$0xf]
      %v359 = vld [vmem:[%s326 + $0x80] sm:$0x1]
      %v360 = vld [vmem:[%s326 + $0x84] sm:$0xf]
      %v361 = vld [vmem:[%s326 + $0x88] sm:$0xf]
      %v362 = vld [vmem:[%s326 + $0x8c] sm:$0x1]
      %v363 = vld [vmem:[%s326 + $0x90] sm:$0xf]
      %v364 = vld [vmem:[%s326 + $0x94] sm:$0xf]
      %v365 = vld [vmem:[%s326 + $0x98] sm:$0x1]
      %v366 = vld [vmem:[%s326 + $0x9c] sm:$0xf]
      %v367 = vld [vmem:[%s326 + $0xa0] sm:$0xf]
      %v368 = vld [vmem:[%s326 + $0xa4] sm:$0x1]
      %v369 = vld [vmem:[%s326 + $0xa8] sm:$0xf]
      %v370 = vld [vmem:[%s326 + $0xac] sm:$0xf]
      %v371 = vld [vmem:[%s326 + $0xb0] sm:$0x1]
      %v372 = vld [vmem:[%s326 + $0xb4] sm:$0xf]
      %v373 = vld [vmem:[%s326 + $0xb8] sm:$0xf]
      %v374 = vld [vmem:[%s326 + $0xbc] sm:$0x1]
      %v375 = vld [vmem:[%s326 + $0xc0] sm:$0xf]
      %v376 = vld [vmem:[%s326 + $0xc4] sm:$0xf]
      %v377 = vld [vmem:[%s326 + $0xc8] sm:$0x1]
      %v378 = vld [vmem:[%s326 + $0xcc] sm:$0xf]
      %v379 = vld [vmem:[%s326 + $0xd0] sm:$0xf]
      %v380 = vld [vmem:[%s326 + $0xd4] sm:$0x1]
      %v413 = vunpack.c.l.b16 %v327
      %v414 = vunpack.c.l.b16 %v328
      %v415 = vunpack.c.l.b16 %v330
      %v416 = vunpack.c.l.b16 %v331
      %v417 = vunpack.c.l.b16 %v333
      %v418 = vunpack.c.l.b16 %v334
      %v419 = vunpack.c.l.b16 %v336
      %v420 = vunpack.c.l.b16 %v337
      %v421 = vunpack.c.l.b16 %v339
      %v422 = vunpack.c.l.b16 %v340
      %v423 = vunpack.c.l.b16 %v342
      %v424 = vunpack.c.l.b16 %v343
      %v425 = vunpack.c.l.b16 %v345
      %v426 = vunpack.c.l.b16 %v346
      %v427 = vunpack.c.l.b16 %v348
      %v428 = vunpack.c.l.b16 %v349
      %v429 = vunpack.c.l.b16 %v351
      %v430 = vunpack.c.l.b16 %v352
      %v431 = vunpack.c.l.b16 %v354
      %v432 = vunpack.c.l.b16 %v355
      %v433 = vunpack.c.l.b16 %v357
      %v434 = vunpack.c.l.b16 %v358
      %v435 = vunpack.c.l.b16 %v360
      %v436 = vunpack.c.l.b16 %v361
      %v437 = vunpack.c.l.b16 %v363
      %v438 = vunpack.c.l.b16 %v364
      %v439 = vunpack.c.l.b16 %v366
      %v440 = vunpack.c.l.b16 %v367
      %v441 = vunpack.c.l.b16 %v369
      %v442 = vunpack.c.l.b16 %v370
      %v443 = vunpack.c.l.b16 %v372
      %v444 = vunpack.c.l.b16 %v373
      %v445 = vpack.c.b16 %v414, %v413
      %v446 = vpack.c.b16 %v416, %v415
      %v447 = vpack.c.b16 %v418, %v417
      %v448 = vpack.c.b16 %v420, %v419
      %v449 = vpack.c.b16 %v422, %v421
      %v450 = vpack.c.b16 %v424, %v423
      %v451 = vpack.c.b16 %v426, %v425
      %v452 = vpack.c.b16 %v428, %v427
      %v453 = vpack.c.b16 %v430, %v429
      %v454 = vpack.c.b16 %v432, %v431
      %v455 = vpack.c.b16 %v434, %v433
      %v456 = vpack.c.b16 %v436, %v435
      %v457 = vpack.c.b16 %v438, %v437
      %v458 = vpack.c.b16 %v440, %v439
      %v459 = vpack.c.b16 %v442, %v441
      %v460 = vpack.c.b16 %v444, %v443
      %v477 = vunpack.c.l.b16 %v329
      %v478 = vunpack.c.l.b16 %v332
      %v479 = vunpack.c.l.b16 %v335
      %v480 = vunpack.c.l.b16 %v338
      %v481 = vunpack.c.l.b16 %v341
      %v482 = vunpack.c.l.b16 %v344
      %v483 = vunpack.c.l.b16 %v347
      %v484 = vunpack.c.l.b16 %v350
      %v485 = vunpack.c.l.b16 %v353
      %v486 = vunpack.c.l.b16 %v356
      %v487 = vunpack.c.l.b16 %v359
      %v488 = vunpack.c.l.b16 %v362
      %v489 = vunpack.c.l.b16 %v365
      %v490 = vunpack.c.l.b16 %v368
      %v491 = vunpack.c.l.b16 %v371
      %v492 = vunpack.c.l.b16 %v374
      %v493 = vpack.c.b16 %v477, %v477
      %v494 = vpack.c.b16 %v478, %v478
      %v495 = vpack.c.b16 %v479, %v479
      %v496 = vpack.c.b16 %v480, %v480
      %v497 = vpack.c.b16 %v481, %v481
      %v498 = vpack.c.b16 %v482, %v482
      %v499 = vpack.c.b16 %v483, %v483
      %v500 = vpack.c.b16 %v484, %v484
      %v501 = vpack.c.b16 %v485, %v485
      %v502 = vpack.c.b16 %v486, %v486
      %v503 = vpack.c.b16 %v487, %v487
      %v504 = vpack.c.b16 %v488, %v488
      %v505 = vpack.c.b16 %v489, %v489
      %v506 = vpack.c.b16 %v490, %v490
      %v507 = vpack.c.b16 %v491, %v491
      %v508 = vpack.c.b16 %v492, %v492
      %vm509 = vsmask.f32 7424
      %v511 = vshrl.u32 %v445, 16
      %v513 = vshll.u32 %v445, 16
      %v515 = vrot.slane %v513, 1
      %v516 = vor.u32 %v511, %v515
      %v518 = vshll.u32 %v493, 16
      %v520 = vrot.slane %v518, 1
      %v521 = vsel %vm509, %v516, %v520
      %v523 = vshrl.u32 %v446, 16
      %v525 = vshll.u32 %v446, 16
      %v527 = vrot.slane %v525, 1
      %v528 = vor.u32 %v523, %v527
      %v530 = vshll.u32 %v494, 16
      %v532 = vrot.slane %v530, 1
      %v533 = vsel %vm509, %v528, %v532
      %v535 = vshrl.u32 %v447, 16
      %v537 = vshll.u32 %v447, 16
      %v539 = vrot.slane %v537, 1
      %v540 = vor.u32 %v535, %v539
      %v542 = vshll.u32 %v495, 16
      %v544 = vrot.slane %v542, 1
      %v545 = vsel %vm509, %v540, %v544
      %v547 = vshrl.u32 %v448, 16
      %v549 = vshll.u32 %v448, 16
      %v551 = vrot.slane %v549, 1
      %v552 = vor.u32 %v547, %v551
      %v554 = vshll.u32 %v496, 16
      %v556 = vrot.slane %v554, 1
      %v557 = vsel %vm509, %v552, %v556
      %v559 = vshrl.u32 %v449, 16
      %v561 = vshll.u32 %v449, 16
      %v563 = vrot.slane %v561, 1
      %v564 = vor.u32 %v559, %v563
      %v566 = vshll.u32 %v497, 16
      %v568 = vrot.slane %v566, 1
      %v569 = vsel %vm509, %v564, %v568
      %v571 = vshrl.u32 %v450, 16
      %v573 = vshll.u32 %v450, 16
      %v575 = vrot.slane %v573, 1
      %v576 = vor.u32 %v571, %v575
      %v578 = vshll.u32 %v498, 16
      %v580 = vrot.slane %v578, 1
      %v581 = vsel %vm509, %v576, %v580
      %v583 = vshrl.u32 %v451, 16
      %v585 = vshll.u32 %v451, 16
      %v587 = vrot.slane %v585, 1
      %v588 = vor.u32 %v583, %v587
      %v590 = vshll.u32 %v499, 16
      %v592 = vrot.slane %v590, 1
      %v593 = vsel %vm509, %v588, %v592
      %v595 = vshrl.u32 %v452, 16
      %v597 = vshll.u32 %v452, 16
      %v599 = vrot.slane %v597, 1
      %v600 = vor.u32 %v595, %v599
      %v602 = vshll.u32 %v500, 16
      %v604 = vrot.slane %v602, 1
      %v605 = vsel %vm509, %v600, %v604
      %v607 = vshrl.u32 %v453, 16
      %v609 = vshll.u32 %v453, 16
      %v611 = vrot.slane %v609, 1
      %v612 = vor.u32 %v607, %v611
      %v614 = vshll.u32 %v501, 16
      %v616 = vrot.slane %v614, 1
      %v617 = vsel %vm509, %v612, %v616
      %v619 = vshrl.u32 %v454, 16
      %v621 = vshll.u32 %v454, 16
      %v623 = vrot.slane %v621, 1
      %v624 = vor.u32 %v619, %v623
      %v626 = vshll.u32 %v502, 16
      %v628 = vrot.slane %v626, 1
      %v629 = vsel %vm509, %v624, %v628
      %v631 = vshrl.u32 %v455, 16
      %v633 = vshll.u32 %v455, 16
      %v635 = vrot.slane %v633, 1
      %v636 = vor.u32 %v631, %v635
      %v638 = vshll.u32 %v503, 16
      %v640 = vrot.slane %v638, 1
      %v641 = vsel %vm509, %v636, %v640
      %v643 = vshrl.u32 %v456, 16
      %v645 = vshll.u32 %v456, 16
      %v647 = vrot.slane %v645, 1
      %v648 = vor.u32 %v643, %v647
      %v650 = vshll.u32 %v504, 16
      %v652 = vrot.slane %v650, 1
      %v653 = vsel %vm509, %v648, %v652
      %v655 = vshrl.u32 %v457, 16
      %v657 = vshll.u32 %v457, 16
      %v659 = vrot.slane %v657, 1
      %v660 = vor.u32 %v655, %v659
      %v662 = vshll.u32 %v505, 16
      %v664 = vrot.slane %v662, 1
      %v665 = vsel %vm509, %v660, %v664
      %v667 = vshrl.u32 %v458, 16
      %v669 = vshll.u32 %v458, 16
      %v671 = vrot.slane %v669, 1
      %v672 = vor.u32 %v667, %v671
      %v674 = vshll.u32 %v506, 16
      %v676 = vrot.slane %v674, 1
      %v677 = vsel %vm509, %v672, %v676
      %v679 = vshrl.u32 %v459, 16
      %v681 = vshll.u32 %v459, 16
      %v683 = vrot.slane %v681, 1
      %v684 = vor.u32 %v679, %v683
      %v686 = vshll.u32 %v507, 16
      %v688 = vrot.slane %v686, 1
      %v689 = vsel %vm509, %v684, %v688
      %v691 = vshrl.u32 %v460, 16
      %v693 = vshll.u32 %v460, 16
      %v695 = vrot.slane %v693, 1
      %v696 = vor.u32 %v691, %v695
      %v698 = vshll.u32 %v508, 16
      %v700 = vrot.slane %v698, 1
      %v701 = vsel %vm509, %v696, %v700
      %702 = vrot.lane.b32.xlu0 %v521, 4
      %v703 = vpop.permute.xlu0 %702
      %704 = vrot.lane.b32.xlu0 %v533, 4
      %v705 = vpop.permute.xlu0 %704
      %706 = vrot.lane.b32.xlu0 %v545, 4
      %v707 = vpop.permute.xlu0 %706
      %708 = vrot.lane.b32.xlu0 %v557, 4
      %v709 = vpop.permute.xlu0 %708
      %710 = vrot.lane.b32.xlu0 %v569, 4
      %v711 = vpop.permute.xlu0 %710
      %712 = vrot.lane.b32.xlu0 %v581, 4
      %v713 = vpop.permute.xlu0 %712
      %714 = vrot.lane.b32.xlu0 %v593, 4
      %v715 = vpop.permute.xlu0 %714
      %716 = vrot.lane.b32.xlu0 %v605, 4
      %v717 = vpop.permute.xlu0 %716
      %718 = vrot.lane.b32.xlu0 %v617, 4
      %v719 = vpop.permute.xlu0 %718
      %720 = vrot.lane.b32.xlu0 %v629, 4
      %v721 = vpop.permute.xlu0 %720
      %722 = vrot.lane.b32.xlu0 %v641, 4
      %v723 = vpop.permute.xlu0 %722
      %724 = vrot.lane.b32.xlu0 %v653, 4
      %v725 = vpop.permute.xlu0 %724
      %726 = vrot.lane.b32.xlu0 %v665, 4
      %v727 = vpop.permute.xlu0 %726
      %728 = vrot.lane.b32.xlu0 %v677, 4
      %v729 = vpop.permute.xlu0 %728
      %730 = vrot.lane.b32.xlu0 %v689, 4
      %v731 = vpop.permute.xlu0 %730
      %732 = vrot.lane.b32.xlu0 %v701, 4
      %v733 = vpop.permute.xlu0 %732
      %vm734 = vcmask 1046528
      %v735 = vrot.slane %v445, 1
      %v736 = vrot.slane %v493, 1
      %v737 = vsel %vm734, %v735, %v736
      %v738 = vrot.slane %v446, 1
      %v739 = vrot.slane %v494, 1
      %v740 = vsel %vm734, %v738, %v739
      %v741 = vrot.slane %v447, 1
      %v742 = vrot.slane %v495, 1
      %v743 = vsel %vm734, %v741, %v742
      %v744 = vrot.slane %v448, 1
      %v745 = vrot.slane %v496, 1
      %v746 = vsel %vm734, %v744, %v745
      %v747 = vrot.slane %v449, 1
      %v748 = vrot.slane %v497, 1
      %v749 = vsel %vm734, %v747, %v748
      %v750 = vrot.slane %v450, 1
      %v751 = vrot.slane %v498, 1
      %v752 = vsel %vm734, %v750, %v751
      %v753 = vrot.slane %v451, 1
      %v754 = vrot.slane %v499, 1
      %v755 = vsel %vm734, %v753, %v754
      %v756 = vrot.slane %v452, 1
      %v757 = vrot.slane %v500, 1
      %v758 = vsel %vm734, %v756, %v757
      %v759 = vrot.slane %v453, 1
      %v760 = vrot.slane %v501, 1
      %v761 = vsel %vm734, %v759, %v760
      %v762 = vrot.slane %v454, 1
      %v763 = vrot.slane %v502, 1
      %v764 = vsel %vm734, %v762, %v763
      %v765 = vrot.slane %v455, 1
      %v766 = vrot.slane %v503, 1
      %v767 = vsel %vm734, %v765, %v766
      %v768 = vrot.slane %v456, 1
      %v769 = vrot.slane %v504, 1
      %v770 = vsel %vm734, %v768, %v769
      %v771 = vrot.slane %v457, 1
      %v772 = vrot.slane %v505, 1
      %v773 = vsel %vm734, %v771, %v772
      %v774 = vrot.slane %v458, 1
      %v775 = vrot.slane %v506, 1
      %v776 = vsel %vm734, %v774, %v775
      %v777 = vrot.slane %v459, 1
      %v778 = vrot.slane %v507, 1
      %v779 = vsel %vm734, %v777, %v778
      %v780 = vrot.slane %v460, 1
      %v781 = vrot.slane %v508, 1
      %v782 = vsel %vm734, %v780, %v781
      %783 = vrot.lane.b32.xlu0 %v737, 8
      %v784 = vpop.permute.xlu0 %783
      %785 = vrot.lane.b32.xlu0 %v740, 8
      %v786 = vpop.permute.xlu0 %785
      %787 = vrot.lane.b32.xlu0 %v743, 8
      %v788 = vpop.permute.xlu0 %787
      %789 = vrot.lane.b32.xlu0 %v746, 8
      %v790 = vpop.permute.xlu0 %789
      %791 = vrot.lane.b32.xlu0 %v749, 8
      %v792 = vpop.permute.xlu0 %791
      %793 = vrot.lane.b32.xlu0 %v752, 8
      %v794 = vpop.permute.xlu0 %793
      %795 = vrot.lane.b32.xlu0 %v755, 8
      %v796 = vpop.permute.xlu0 %795
      %797 = vrot.lane.b32.xlu0 %v758, 8
      %v798 = vpop.permute.xlu0 %797
      %799 = vrot.lane.b32.xlu0 %v761, 8
      %v800 = vpop.permute.xlu0 %799
      %801 = vrot.lane.b32.xlu0 %v764, 8
      %v802 = vpop.permute.xlu0 %801
      %803 = vrot.lane.b32.xlu0 %v767, 8
      %v804 = vpop.permute.xlu0 %803
      %805 = vrot.lane.b32.xlu0 %v770, 8
      %v806 = vpop.permute.xlu0 %805
      %807 = vrot.lane.b32.xlu0 %v773, 8
      %v808 = vpop.permute.xlu0 %807
      %809 = vrot.lane.b32.xlu0 %v776, 8
      %v810 = vpop.permute.xlu0 %809
      %811 = vrot.lane.b32.xlu0 %v779, 8
      %v812 = vpop.permute.xlu0 %811
      %813 = vrot.lane.b32.xlu0 %v782, 8
      %v814 = vpop.permute.xlu0 %813
      %v817 = vunpack.c.l.b16 %v375
      %v818 = vunpack.c.l.b16 %v376
      %v819 = vpack.c.b16 %v818, %v817
      %820 = vrot.lane.b32.xlu0 %v446, 12
      %v821 = vpop.permute.xlu0 %820
      %822 = vrot.lane.b32.xlu0 %v447, 12
      %v823 = vpop.permute.xlu0 %822
      %824 = vrot.lane.b32.xlu0 %v448, 12
      %v825 = vpop.permute.xlu0 %824
      %826 = vrot.lane.b32.xlu0 %v449, 12
      %v827 = vpop.permute.xlu0 %826
      %828 = vrot.lane.b32.xlu0 %v450, 12
      %v829 = vpop.permute.xlu0 %828
      %830 = vrot.lane.b32.xlu0 %v451, 12
      %v831 = vpop.permute.xlu0 %830
      %832 = vrot.lane.b32.xlu0 %v452, 12
      %v833 = vpop.permute.xlu0 %832
      %834 = vrot.lane.b32.xlu0 %v453, 12
      %v835 = vpop.permute.xlu0 %834
      %836 = vrot.lane.b32.xlu0 %v454, 12
      %v837 = vpop.permute.xlu0 %836
      %838 = vrot.lane.b32.xlu0 %v455, 12
      %v839 = vpop.permute.xlu0 %838
      %840 = vrot.lane.b32.xlu0 %v456, 12
      %v841 = vpop.permute.xlu0 %840
      %842 = vrot.lane.b32.xlu0 %v457, 12
      %v843 = vpop.permute.xlu0 %842
      %844 = vrot.lane.b32.xlu0 %v458, 12
      %v845 = vpop.permute.xlu0 %844
      %846 = vrot.lane.b32.xlu0 %v459, 12
      %v847 = vpop.permute.xlu0 %846
      %848 = vrot.lane.b32.xlu0 %v460, 12
      %v849 = vpop.permute.xlu0 %848
      %850 = vrot.lane.b32.xlu0 %v819, 12
      %v851 = vpop.permute.xlu0 %850
      %v853 = vunpack.c.l.b16 %v377
      %v854 = vpack.c.b16 %v853, %v853
      %v856 = vshrl.u32 %v819, 16
      %v858 = vshll.u32 %v819, 16
      %v860 = vrot.slane %v858, 1
      %v861 = vor.u32 %v856, %v860
      %v863 = vshll.u32 %v854, 16
      %v865 = vrot.slane %v863, 1
      %v866 = vsel %vm509, %v861, %v865
      %867 = vrot.lane.b32.xlu0 %v533, 16
      %v868 = vpop.permute.xlu0 %867
      %869 = vrot.lane.b32.xlu0 %v545, 16
      %v870 = vpop.permute.xlu0 %869
      %871 = vrot.lane.b32.xlu0 %v557, 16
      %v872 = vpop.permute.xlu0 %871
      %873 = vrot.lane.b32.xlu0 %v569, 16
      %v874 = vpop.permute.xlu0 %873
      %875 = vrot.lane.b32.xlu0 %v581, 16
      %v876 = vpop.permute.xlu0 %875
      %877 = vrot.lane.b32.xlu0 %v593, 16
      %v878 = vpop.permute.xlu0 %877
      %879 = vrot.lane.b32.xlu0 %v605, 16
      %v880 = vpop.permute.xlu0 %879
      %881 = vrot.lane.b32.xlu0 %v617, 16
      %v882 = vpop.permute.xlu0 %881
      %883 = vrot.lane.b32.xlu0 %v629, 16
      %v884 = vpop.permute.xlu0 %883
      %885 = vrot.lane.b32.xlu0 %v641, 16
      %v886 = vpop.permute.xlu0 %885
      %887 = vrot.lane.b32.xlu0 %v653, 16
      %v888 = vpop.permute.xlu0 %887
      %889 = vrot.lane.b32.xlu0 %v665, 16
      %v890 = vpop.permute.xlu0 %889
      %891 = vrot.lane.b32.xlu0 %v677, 16
      %v892 = vpop.permute.xlu0 %891
      %893 = vrot.lane.b32.xlu0 %v689, 16
      %v894 = vpop.permute.xlu0 %893
      %895 = vrot.lane.b32.xlu0 %v701, 16
      %v896 = vpop.permute.xlu0 %895
      %897 = vrot.lane.b32.xlu0 %v866, 16
      %v898 = vpop.permute.xlu0 %897
      %v899 = vrot.slane %v819, 1
      %v900 = vrot.slane %v854, 1
      %v901 = vsel %vm734, %v899, %v900
      %902 = vrot.lane.b32.xlu0 %v740, 20
      %v903 = vpop.permute.xlu0 %902
      %904 = vrot.lane.b32.xlu0 %v743, 20
      %v905 = vpop.permute.xlu0 %904
      %906 = vrot.lane.b32.xlu0 %v746, 20
      %v907 = vpop.permute.xlu0 %906
      %908 = vrot.lane.b32.xlu0 %v749, 20
      %v909 = vpop.permute.xlu0 %908
      %910 = vrot.lane.b32.xlu0 %v752, 20
      %v911 = vpop.permute.xlu0 %910
      %912 = vrot.lane.b32.xlu0 %v755, 20
      %v913 = vpop.permute.xlu0 %912
      %914 = vrot.lane.b32.xlu0 %v758, 20
      %v915 = vpop.permute.xlu0 %914
      %916 = vrot.lane.b32.xlu0 %v761, 20
      %v917 = vpop.permute.xlu0 %916
      %918 = vrot.lane.b32.xlu0 %v764, 20
      %v919 = vpop.permute.xlu0 %918
      %920 = vrot.lane.b32.xlu0 %v767, 20
      %v921 = vpop.permute.xlu0 %920
      %922 = vrot.lane.b32.xlu0 %v770, 20
      %v923 = vpop.permute.xlu0 %922
      %924 = vrot.lane.b32.xlu0 %v773, 20
      %v925 = vpop.permute.xlu0 %924
      %926 = vrot.lane.b32.xlu0 %v776, 20
      %v927 = vpop.permute.xlu0 %926
      %928 = vrot.lane.b32.xlu0 %v779, 20
      %v929 = vpop.permute.xlu0 %928
      %930 = vrot.lane.b32.xlu0 %v782, 20
      %v931 = vpop.permute.xlu0 %930
      %932 = vrot.lane.b32.xlu0 %v901, 20
      %v933 = vpop.permute.xlu0 %932
      %v936 = vunpack.c.l.b16 %v378
      %v937 = vunpack.c.l.b16 %v379
      %v938 = vpack.c.b16 %v937, %v936
      %939 = vrot.lane.b32.xlu0 %v447, 24
      %v940 = vpop.permute.xlu0 %939
      %941 = vrot.lane.b32.xlu0 %v448, 24
      %v942 = vpop.permute.xlu0 %941
      %943 = vrot.lane.b32.xlu0 %v449, 24
      %v944 = vpop.permute.xlu0 %943
      %945 = vrot.lane.b32.xlu0 %v450, 24
      %v946 = vpop.permute.xlu0 %945
      %947 = vrot.lane.b32.xlu0 %v451, 24
      %v948 = vpop.permute.xlu0 %947
      %949 = vrot.lane.b32.xlu0 %v452, 24
      %v950 = vpop.permute.xlu0 %949
      %951 = vrot.lane.b32.xlu0 %v453, 24
      %v952 = vpop.permute.xlu0 %951
      %953 = vrot.lane.b32.xlu0 %v454, 24
      %v954 = vpop.permute.xlu0 %953
      %955 = vrot.lane.b32.xlu0 %v455, 24
      %v956 = vpop.permute.xlu0 %955
      %957 = vrot.lane.b32.xlu0 %v456, 24
      %v958 = vpop.permute.xlu0 %957
      %959 = vrot.lane.b32.xlu0 %v457, 24
      %v960 = vpop.permute.xlu0 %959
      %961 = vrot.lane.b32.xlu0 %v458, 24
      %v962 = vpop.permute.xlu0 %961
      %963 = vrot.lane.b32.xlu0 %v459, 24
      %v964 = vpop.permute.xlu0 %963
      %965 = vrot.lane.b32.xlu0 %v460, 24
      %v966 = vpop.permute.xlu0 %965
      %967 = vrot.lane.b32.xlu0 %v819, 24
      %v968 = vpop.permute.xlu0 %967
      %969 = vrot.lane.b32.xlu0 %v938, 24
      %v970 = vpop.permute.xlu0 %969
      %v972 = vunpack.c.l.b16 %v380
      %v973 = vpack.c.b16 %v972, %v972
      %v975 = vshrl.u32 %v938, 16
      %v977 = vshll.u32 %v938, 16
      %v979 = vrot.slane %v977, 1
      %v980 = vor.u32 %v975, %v979
      %v982 = vshll.u32 %v973, 16
      %v984 = vrot.slane %v982, 1
      %v985 = vsel %vm509, %v980, %v984
      %986 = vrot.lane.b32.xlu0 %v545, 28
      %v987 = vpop.permute.xlu0 %986
      %988 = vrot.lane.b32.xlu0 %v557, 28
      %v989 = vpop.permute.xlu0 %988
      %990 = vrot.lane.b32.xlu0 %v569, 28
      %v991 = vpop.permute.xlu0 %990
      %992 = vrot.lane.b32.xlu0 %v581, 28
      %v993 = vpop.permute.xlu0 %992
      %994 = vrot.lane.b32.xlu0 %v593, 28
      %v995 = vpop.permute.xlu0 %994
      %996 = vrot.lane.b32.xlu0 %v605, 28
      %v997 = vpop.permute.xlu0 %996
      %998 = vrot.lane.b32.xlu0 %v617, 28
      %v999 = vpop.permute.xlu0 %998
      %1000 = vrot.lane.b32.xlu0 %v629, 28
      %v1001 = vpop.permute.xlu0 %1000
      %1002 = vrot.lane.b32.xlu0 %v641, 28
      %v1003 = vpop.permute.xlu0 %1002
      %1004 = vrot.lane.b32.xlu0 %v653, 28
      %v1005 = vpop.permute.xlu0 %1004
      %1006 = vrot.lane.b32.xlu0 %v665, 28
      %v1007 = vpop.permute.xlu0 %1006
      %1008 = vrot.lane.b32.xlu0 %v677, 28
      %v1009 = vpop.permute.xlu0 %1008
      %1010 = vrot.lane.b32.xlu0 %v689, 28
      %v1011 = vpop.permute.xlu0 %1010
      %1012 = vrot.lane.b32.xlu0 %v701, 28
      %v1013 = vpop.permute.xlu0 %1012
      %1014 = vrot.lane.b32.xlu0 %v866, 28
      %v1015 = vpop.permute.xlu0 %1014
      %1016 = vrot.lane.b32.xlu0 %v985, 28
      %v1017 = vpop.permute.xlu0 %1016
      %v1018 = vrot.slane %v938, 1
      %v1019 = vrot.slane %v973, 1
      %v1020 = vsel %vm734, %v1018, %v1019
      %1021 = vrot.lane.b32.xlu0 %v743, 32
      %v1022 = vpop.permute.xlu0 %1021
      %1023 = vrot.lane.b32.xlu0 %v746, 32
      %v1024 = vpop.permute.xlu0 %1023
      %1025 = vrot.lane.b32.xlu0 %v749, 32
      %v1026 = vpop.permute.xlu0 %1025
      %1027 = vrot.lane.b32.xlu0 %v752, 32
      %v1028 = vpop.permute.xlu0 %1027
      %1029 = vrot.lane.b32.xlu0 %v755, 32
      %v1030 = vpop.permute.xlu0 %1029
      %1031 = vrot.lane.b32.xlu0 %v758, 32
      %v1032 = vpop.permute.xlu0 %1031
      %1033 = vrot.lane.b32.xlu0 %v761, 32
      %v1034 = vpop.permute.xlu0 %1033
      %1035 = vrot.lane.b32.xlu0 %v764, 32
      %v1036 = vpop.permute.xlu0 %1035
      %1037 = vrot.lane.b32.xlu0 %v767, 32
      %v1038 = vpop.permute.xlu0 %1037
      %1039 = vrot.lane.b32.xlu0 %v770, 32
      %v1040 = vpop.permute.xlu0 %1039
      %1041 = vrot.lane.b32.xlu0 %v773, 32
      %v1042 = vpop.permute.xlu0 %1041
      %1043 = vrot.lane.b32.xlu0 %v776, 32
      %v1044 = vpop.permute.xlu0 %1043
      %1045 = vrot.lane.b32.xlu0 %v779, 32
      %v1046 = vpop.permute.xlu0 %1045
      %1047 = vrot.lane.b32.xlu0 %v782, 32
      %v1048 = vpop.permute.xlu0 %1047
      %1049 = vrot.lane.b32.xlu0 %v901, 32
      %v1050 = vpop.permute.xlu0 %1049
      %1051 = vrot.lane.b32.xlu0 %v1020, 32
      %v1052 = vpop.permute.xlu0 %1051
      %vm1053 = vcmask 31744
      %v1055 = vsel %vm1053, %v445, %v703
      %v1057 = vsel %vm1053, %v446, %v705
      %v1059 = vsel %vm1053, %v447, %v707
      %v1061 = vsel %vm1053, %v448, %v709
      %v1063 = vsel %vm1053, %v449, %v711
      %v1065 = vsel %vm1053, %v450, %v713
      %v1067 = vsel %vm1053, %v451, %v715
      %v1069 = vsel %vm1053, %v452, %v717
      %v1071 = vsel %vm1053, %v453, %v719
      %v1073 = vsel %vm1053, %v454, %v721
      %v1075 = vsel %vm1053, %v455, %v723
      %v1077 = vsel %vm1053, %v456, %v725
      %v1079 = vsel %vm1053, %v457, %v727
      %v1081 = vsel %vm1053, %v458, %v729
      %v1083 = vsel %vm1053, %v459, %v731
      %v1085 = vsel %vm1053, %v460, %v733
      %vm1086 = vcmask 64512
      %v1088 = vsel %vm1086, %v1055, %v784
      %v1090 = vsel %vm1086, %v1057, %v786
      %v1092 = vsel %vm1086, %v1059, %v788
      %v1094 = vsel %vm1086, %v1061, %v790
      %v1096 = vsel %vm1086, %v1063, %v792
      %v1098 = vsel %vm1086, %v1065, %v794
      %v1100 = vsel %vm1086, %v1067, %v796
      %v1102 = vsel %vm1086, %v1069, %v798
      %v1104 = vsel %vm1086, %v1071, %v800
      %v1106 = vsel %vm1086, %v1073, %v802
      %v1108 = vsel %vm1086, %v1075, %v804
      %v1110 = vsel %vm1086, %v1077, %v806
      %v1112 = vsel %vm1086, %v1079, %v808
      %v1114 = vsel %vm1086, %v1081, %v810
      %v1116 = vsel %vm1086, %v1083, %v812
      %v1118 = vsel %vm1086, %v1085, %v814
      %vm1119 = vcmask 97280
      %v1121 = vsel %vm1119, %v1088, %v821
      %v1123 = vsel %vm1119, %v1090, %v823
      %v1125 = vsel %vm1119, %v1092, %v825
      %v1127 = vsel %vm1119, %v1094, %v827
      %v1129 = vsel %vm1119, %v1096, %v829
      %v1131 = vsel %vm1119, %v1098, %v831
      %v1133 = vsel %vm1119, %v1100, %v833
      %v1135 = vsel %vm1119, %v1102, %v835
      %v1137 = vsel %vm1119, %v1104, %v837
      %v1139 = vsel %vm1119, %v1106, %v839
      %v1141 = vsel %vm1119, %v1108, %v841
      %v1143 = vsel %vm1119, %v1110, %v843
      %v1145 = vsel %vm1119, %v1112, %v845
      %v1147 = vsel %vm1119, %v1114, %v847
      %v1149 = vsel %vm1119, %v1116, %v849
      %v1151 = vsel %vm1119, %v1118, %v851
      %vm1152 = vcmask 130048
      %v1154 = vsel %vm1152, %v1121, %v868
      %v1156 = vsel %vm1152, %v1123, %v870
      %v1158 = vsel %vm1152, %v1125, %v872
      %v1160 = vsel %vm1152, %v1127, %v874
      %v1162 = vsel %vm1152, %v1129, %v876
      %v1164 = vsel %vm1152, %v1131, %v878
      %v1166 = vsel %vm1152, %v1133, %v880
      %v1168 = vsel %vm1152, %v1135, %v882
      %v1170 = vsel %vm1152, %v1137, %v884
      %v1172 = vsel %vm1152, %v1139, %v886
      %v1174 = vsel %vm1152, %v1141, %v888
      %v1176 = vsel %vm1152, %v1143, %v890
      %v1178 = vsel %vm1152, %v1145, %v892
      %v1180 = vsel %vm1152, %v1147, %v894
      %v1182 = vsel %vm1152, %v1149, %v896
      %v1184 = vsel %vm1152, %v1151, %v898
      %vm1185 = vcmask 162816
      %v1187 = vsel %vm1185, %v1154, %v903
      %v1189 = vsel %vm1185, %v1156, %v905
      %v1191 = vsel %vm1185, %v1158, %v907
      %v1193 = vsel %vm1185, %v1160, %v909
      %v1195 = vsel %vm1185, %v1162, %v911
      %v1197 = vsel %vm1185, %v1164, %v913
      %v1199 = vsel %vm1185, %v1166, %v915
      %v1201 = vsel %vm1185, %v1168, %v917
      %v1203 = vsel %vm1185, %v1170, %v919
      %v1205 = vsel %vm1185, %v1172, %v921
      %v1207 = vsel %vm1185, %v1174, %v923
      %v1209 = vsel %vm1185, %v1176, %v925
      %v1211 = vsel %vm1185, %v1178, %v927
      %v1213 = vsel %vm1185, %v1180, %v929
      %v1215 = vsel %vm1185, %v1182, %v931
      %v1217 = vsel %vm1185, %v1184, %v933
      %vm1218 = vcmask 195584
      %v1220 = vsel %vm1218, %v1187, %v940
      %v1222 = vsel %vm1218, %v1189, %v942
      %v1224 = vsel %vm1218, %v1191, %v944
      %v1226 = vsel %vm1218, %v1193, %v946
      %v1228 = vsel %vm1218, %v1195, %v948
      %v1230 = vsel %vm1218, %v1197, %v950
      %v1232 = vsel %vm1218, %v1199, %v952
      %v1234 = vsel %vm1218, %v1201, %v954
      %v1236 = vsel %vm1218, %v1203, %v956
      %v1238 = vsel %vm1218, %v1205, %v958
      %v1240 = vsel %vm1218, %v1207, %v960
      %v1242 = vsel %vm1218, %v1209, %v962
      %v1244 = vsel %vm1218, %v1211, %v964
      %v1246 = vsel %vm1218, %v1213, %v966
      %v1248 = vsel %vm1218, %v1215, %v968
      %v1250 = vsel %vm1218, %v1217, %v970
      %vm1251 = vcmask 228352
      %v1253 = vsel %vm1251, %v1220, %v987
      %v1255 = vsel %vm1251, %v1222, %v989
      %v1257 = vsel %vm1251, %v1224, %v991
      %v1259 = vsel %vm1251, %v1226, %v993
      %v1261 = vsel %vm1251, %v1228, %v995
      %v1263 = vsel %vm1251, %v1230, %v997
      %v1265 = vsel %vm1251, %v1232, %v999
      %v1267 = vsel %vm1251, %v1234, %v1001
      %v1269 = vsel %vm1251, %v1236, %v1003
      %v1271 = vsel %vm1251, %v1238, %v1005
      %v1273 = vsel %vm1251, %v1240, %v1007
      %v1275 = vsel %vm1251, %v1242, %v1009
      %v1277 = vsel %vm1251, %v1244, %v1011
      %v1279 = vsel %vm1251, %v1246, %v1013
      %v1281 = vsel %vm1251, %v1248, %v1015
      %v1283 = vsel %vm1251, %v1250, %v1017
      %vm1284 = vcmask 261120
      %v1286 = vsel %vm1284, %v1253, %v1022
      %v1288 = vsel %vm1284, %v1255, %v1024
      %v1290 = vsel %vm1284, %v1257, %v1026
      %v1292 = vsel %vm1284, %v1259, %v1028
      %v1294 = vsel %vm1284, %v1261, %v1030
      %v1296 = vsel %vm1284, %v1263, %v1032
      %v1298 = vsel %vm1284, %v1265, %v1034
      %v1300 = vsel %vm1284, %v1267, %v1036
      %v1302 = vsel %vm1284, %v1269, %v1038
      %v1304 = vsel %vm1284, %v1271, %v1040
      %v1306 = vsel %vm1284, %v1273, %v1042
      %v1308 = vsel %vm1284, %v1275, %v1044
      %v1310 = vsel %vm1284, %v1277, %v1046
      %v1312 = vsel %vm1284, %v1279, %v1048
      %v1314 = vsel %vm1284, %v1281, %v1050
      %v1316 = vsel %vm1284, %v1283, %v1052
      %v1317 = vld [vmem:[%s1] sm:$0xf]
      %v1318 = vld [vmem:[%s1 + $0x4] sm:$0xf]
      %v1319 = vld [vmem:[%s1 + $0x8] sm:$0xf]
      %v1320 = vld [vmem:[%s1 + $0xc] sm:$0xf]
      %v1321 = vld [vmem:[%s1 + $0x10] sm:$0x3]
      %v1322 = vld [vmem:[%s2] sm:$0x1]
      %v1324 = vlaneseq
      %v1325 = vshrl.u32 %v1324, 7
      %v1326 = vsub.s32 0, %v1325
      %v1327 = vrot.slane %v1322, %v1326
      %v1334 = vunpack.c.l.b16 %v1317
      %v1335 = vunpack.c.l.b16 %v1318
      %v1336 = vunpack.c.l.b16 %v1319
      %v1337 = vunpack.c.l.b16 %v1320
      %v1338 = vunpack.c.l.b16 %v1321
      %v1339 = vpack.c.b16 %v1335, %v1334
      %v1340 = vpack.c.b16 %v1337, %v1336
      %v1341 = vpack.c.b16 %v1338, %v1338
      %vm1344 = vcmask 293888
      %v1345 = vsel %vm1344, %v1286, 0
      %v1347 = vsel %vm1344, %v1288, 0
      %v1349 = vsel %vm1344, %v1290, 0
      %v1351 = vsel %vm1344, %v1292, 0
      %v1353 = vsel %vm1344, %v1294, 0
      %v1355 = vsel %vm1344, %v1296, 0
      %v1357 = vsel %vm1344, %v1298, 0
      %v1359 = vsel %vm1344, %v1300, 0
      %v1361 = vsel %vm1344, %v1302, 0
      %v1363 = vsel %vm1344, %v1304, 0
      %v1365 = vsel %vm1344, %v1306, 0
      %v1367 = vsel %vm1344, %v1308, 0
      %v1369 = vsel %vm1344, %v1310, 0
      %v1371 = vsel %vm1344, %v1312, 0
      %v1373 = vsel %vm1344, %v1314, 0
      %v1375 = vsel %vm1344, %v1316, 0
      %vm1377 = vcmask 1041408
      %v1379 = vsel %vm1377, %v1341, 0
      %1381 = vmatprep.subr.bf16.mxu0 0
      %1382 = vmatpush1.bf16.msra.mxu0 %v1339
      %1383 = vmatprep.subr.bf16.mxu0 0
      %1384 = vmatpush1.bf16.msra.mxu0 %v1340
      %1385 = vmatprep.subr.bf16.mxu0 0
      %1386 = vmatpush1.bf16.msra.mxu0 %v1379
      %1387 = vmatprep.subr.bf16.mxu0 0
      %1388 = vmatpush1.bf16.msra.mxu0 0
      %1389 = vmatprep.subr.bf16.mxu0 0
      %1390 = vmatpush1.bf16.msra.mxu0 0
      %1391 = vmatprep.subr.bf16.mxu0 0
      %1392 = vmatpush1.bf16.msra.mxu0 0
      %1393 = vmatprep.subr.bf16.mxu0 0
      %1394 = vmatpush1.bf16.msra.mxu0 0
      %1395 = vmatprep.subr.bf16.mxu0 0
      %1396 = vmatpush1.bf16.msra.mxu0 0
      %1397 = vmatprep.subr.bf16.mxu0 0
      %1398 = vmatpush1.bf16.msra.mxu0 0
      %1399 = vmatprep.subr.bf16.mxu0 0
      %1400 = vmatpush1.bf16.msra.mxu0 0
      %1401 = vmatprep.subr.bf16.mxu0 0
      %1402 = vmatpush1.bf16.msra.mxu0 0
      %1403 = vmatprep.subr.bf16.mxu0 0
      %1404 = vmatpush1.bf16.msra.mxu0 0
      %1405 = vmatprep.subr.bf16.mxu0 0
      %1406 = vmatpush1.bf16.msra.mxu0 0
      %1407 = vmatprep.subr.bf16.mxu0 0
      %1408 = vmatpush1.bf16.msra.mxu0 0
      %1409 = vmatprep.subr.bf16.mxu0 0
      %1410 = vmatpush1.bf16.msra.mxu0 0
      %1411 = vmatprep.subr.bf16.mxu0 0
      %1412 = vmatpush1.bf16.msra.mxu0 0
      %1413 = vmatprep.mubr.bf16.mxu0 0
      %1414 = vmatmul.mubr.bf16.gmra.mrb[0].mxu0 %v1345
      %v1415 = vpop.f32.mrb[0].mxu0
      %v1416 = vadd.f32 %v1327, %v1415
      %v1417 = vpop.f32.mrb[0].mxu0
      %v1418 = vpop.f32.mrb[0].mxu0
      %v1419 = vadd.f32 %v1327, %v1418
      %v1420 = vpop.f32.mrb[0].mxu0
      %1421 = vmatprep.mubr.bf16.mxu0 0
      %1422 = vmatmul.mubr.bf16.gmra.mrb[0].mxu0 %v1347
      %v1423 = vpop.f32.mrb[0].mxu0
      %v1424 = vadd.f32 %v1327, %v1423
      %v1425 = vpop.f32.mrb[0].mxu0
      %v1426 = vpop.f32.mrb[0].mxu0
      %v1427 = vadd.f32 %v1327, %v1426
      %v1428 = vpop.f32.mrb[0].mxu0
      %1429 = vmatprep.mubr.bf16.mxu0 0
      %1430 = vmatmul.mubr.bf16.gmra.mrb[0].mxu0 %v1349
      %v1431 = vpop.f32.mrb[0].mxu0
      %v1432 = vadd.f32 %v1327, %v1431
      %v1433 = vpop.f32.mrb[0].mxu0
      %v1434 = vpop.f32.mrb[0].mxu0
      %v1435 = vadd.f32 %v1327, %v1434
      %v1436 = vpop.f32.mrb[0].mxu0
      %1437 = vmatprep.mubr.bf16.mxu0 0
      %1438 = vmatmul.mubr.bf16.gmra.mrb[0].mxu0 %v1351
      %v1439 = vpop.f32.mrb[0].mxu0
      %v1440 = vadd.f32 %v1327, %v1439
      %v1441 = vpop.f32.mrb[0].mxu0
      %v1442 = vpop.f32.mrb[0].mxu0
      %v1443 = vadd.f32 %v1327, %v1442
      %v1444 = vpop.f32.mrb[0].mxu0
      %1445 = vmatprep.mubr.bf16.mxu0 0
      %1446 = vmatmul.mubr.bf16.gmra.mrb[0].mxu0 %v1353
      %v1447 = vpop.f32.mrb[0].mxu0
      %v1448 = vadd.f32 %v1327, %v1447
      %v1449 = vpop.f32.mrb[0].mxu0
      %v1450 = vpop.f32.mrb[0].mxu0
      %v1451 = vadd.f32 %v1327, %v1450
      %v1452 = vpop.f32.mrb[0].mxu0
      %1453 = vmatprep.mubr.bf16.mxu0 0
      %1454 = vmatmul.mubr.bf16.gmra.mrb[0].mxu0 %v1355
      %v1455 = vpop.f32.mrb[0].mxu0
      %v1456 = vadd.f32 %v1327, %v1455
      %v1457 = vpop.f32.mrb[0].mxu0
      %v1458 = vpop.f32.mrb[0].mxu0
      %v1459 = vadd.f32 %v1327, %v1458
      %v1460 = vpop.f32.mrb[0].mxu0
      %1461 = vmatprep.mubr.bf16.mxu0 0
      %1462 = vmatmul.mubr.bf16.gmra.mrb[0].mxu0 %v1357
      %v1463 = vpop.f32.mrb[0].mxu0
      %v1464 = vadd.f32 %v1327, %v1463
      %v1465 = vpop.f32.mrb[0].mxu0
      %v1466 = vpop.f32.mrb[0].mxu0
      %v1467 = vadd.f32 %v1327, %v1466
      %v1468 = vpop.f32.mrb[0].mxu0
      %1469 = vmatprep.mubr.bf16.mxu0 0
      %1470 = vmatmul.mubr.bf16.gmra.mrb[0].mxu0 %v1359
      %v1471 = vpop.f32.mrb[0].mxu0
      %v1472 = vadd.f32 %v1327, %v1471
      %v1473 = vpop.f32.mrb[0].mxu0
      %v1474 = vpop.f32.mrb[0].mxu0
      %v1475 = vadd.f32 %v1327, %v1474
      %v1476 = vpop.f32.mrb[0].mxu0
      %1477 = vmatprep.mubr.bf16.mxu0 0
      %1478 = vmatmul.mubr.bf16.gmra.mrb[0].mxu0 %v1361
      %v1479 = vpop.f32.mrb[0].mxu0
      %v1480 = vadd.f32 %v1327, %v1479
      %v1481 = vpop.f32.mrb[0].mxu0
      %v1482 = vpop.f32.mrb[0].mxu0
      %v1483 = vadd.f32 %v1327, %v1482
      %v1484 = vpop.f32.mrb[0].mxu0
      %1485 = vmatprep.mubr.bf16.mxu0 0
      %1486 = vmatmul.mubr.bf16.gmra.mrb[0].mxu0 %v1363
      %v1487 = vpop.f32.mrb[0].mxu0
      %v1488 = vadd.f32 %v1327, %v1487
      %v1489 = vpop.f32.mrb[0].mxu0
      %v1490 = vpop.f32.mrb[0].mxu0
      %v1491 = vadd.f32 %v1327, %v1490
      %v1492 = vpop.f32.mrb[0].mxu0
      %1493 = vmatprep.mubr.bf16.mxu0 0
      %1494 = vmatmul.mubr.bf16.gmra.mrb[0].mxu0 %v1365
      %v1495 = vpop.f32.mrb[0].mxu0
      %v1496 = vadd.f32 %v1327, %v1495
      %v1497 = vpop.f32.mrb[0].mxu0
      %v1498 = vpop.f32.mrb[0].mxu0
      %v1499 = vadd.f32 %v1327, %v1498
      %v1500 = vpop.f32.mrb[0].mxu0
      %1501 = vmatprep.mubr.bf16.mxu0 0
      %1502 = vmatmul.mubr.bf16.gmra.mrb[0].mxu0 %v1367
      %v1503 = vpop.f32.mrb[0].mxu0
      %v1504 = vadd.f32 %v1327, %v1503
      %v1505 = vpop.f32.mrb[0].mxu0
      %v1506 = vpop.f32.mrb[0].mxu0
      %v1507 = vadd.f32 %v1327, %v1506
      %v1508 = vpop.f32.mrb[0].mxu0
      %1509 = vmatprep.mubr.bf16.mxu0 0
      %1510 = vmatmul.mubr.bf16.gmra.mrb[0].mxu0 %v1369
      %v1511 = vpop.f32.mrb[0].mxu0
      %v1512 = vadd.f32 %v1327, %v1511
      %v1513 = vpop.f32.mrb[0].mxu0
      %v1514 = vpop.f32.mrb[0].mxu0
      %v1515 = vadd.f32 %v1327, %v1514
      %v1516 = vpop.f32.mrb[0].mxu0
      %1517 = vmatprep.mubr.bf16.mxu0 0
      %1518 = vmatmul.mubr.bf16.gmra.mrb[0].mxu0 %v1371
      %v1519 = vpop.f32.mrb[0].mxu0
      %v1520 = vadd.f32 %v1327, %v1519
      %v1521 = vpop.f32.mrb[0].mxu0
      %v1522 = vpop.f32.mrb[0].mxu0
      %v1523 = vadd.f32 %v1327, %v1522
      %v1524 = vpop.f32.mrb[0].mxu0
      %1525 = vmatprep.mubr.bf16.mxu0 0
      %1526 = vmatmul.mubr.bf16.gmra.mrb[0].mxu0 %v1373
      %v1527 = vpop.f32.mrb[0].mxu0
      %v1528 = vadd.f32 %v1327, %v1527
      %v1529 = vpop.f32.mrb[0].mxu0
      %v1530 = vpop.f32.mrb[0].mxu0
      %v1531 = vadd.f32 %v1327, %v1530
      %v1532 = vpop.f32.mrb[0].mxu0
      %1533 = vmatprep.mubr.bf16.mxu0 0
      %1534 = vmatmul.mubr.bf16.gmra.mrb[0].mxu0 %v1375
      %v1535 = vpop.f32.mrb[0].mxu0
      %v1536 = vadd.f32 %v1327, %v1535
      %v1537 = vpop.f32.mrb[0].mxu0
      %v1538 = vpop.f32.mrb[0].mxu0
      %v1539 = vadd.f32 %v1327, %v1538
      %v1540 = vpop.f32.mrb[0].mxu0
      %1541 = vdwg.mxu0
      %v1542 = vld [vmem:[%s301] sm:$0x1]
      %v1544 = vlaneseq
      %v1545 = vshrl.u32 %v1544, 7
      %v1546 = vsub.s32 0, %v1545
      %v1547 = vrot.slane %v1542, %v1546
      %v1549 = vmul.f32 %v1416, %v1547
      %v1550 = vmul.f32 %v1419, %v1547
      %v1551 = vmul.f32 %v1424, %v1547
      %v1552 = vmul.f32 %v1427, %v1547
      %v1553 = vmul.f32 %v1432, %v1547
      %v1554 = vmul.f32 %v1435, %v1547
      %v1555 = vmul.f32 %v1440, %v1547
      %v1556 = vmul.f32 %v1443, %v1547
      %v1557 = vmul.f32 %v1448, %v1547
      %v1558 = vmul.f32 %v1451, %v1547
      %v1559 = vmul.f32 %v1456, %v1547
      %v1560 = vmul.f32 %v1459, %v1547
      %v1561 = vmul.f32 %v1464, %v1547
      %v1562 = vmul.f32 %v1467, %v1547
      %v1563 = vmul.f32 %v1472, %v1547
      %v1564 = vmul.f32 %v1475, %v1547
      %v1565 = vmul.f32 %v1480, %v1547
      %v1566 = vmul.f32 %v1483, %v1547
      %v1567 = vmul.f32 %v1488, %v1547
      %v1568 = vmul.f32 %v1491, %v1547
      %v1569 = vmul.f32 %v1496, %v1547
      %v1570 = vmul.f32 %v1499, %v1547
      %v1571 = vmul.f32 %v1504, %v1547
      %v1572 = vmul.f32 %v1507, %v1547
      %v1573 = vmul.f32 %v1512, %v1547
      %v1574 = vmul.f32 %v1515, %v1547
      %v1575 = vmul.f32 %v1520, %v1547
      %v1576 = vmul.f32 %v1523, %v1547
      %v1577 = vmul.f32 %v1528, %v1547
      %v1578 = vmul.f32 %v1531, %v1547
      %v1579 = vmul.f32 %v1536, %v1547
      %v1580 = vmul.f32 %v1539, %v1547
      %v1581 = vld [vmem:[%s304] sm:$0x1]
      %v1583 = vlaneseq
      %v1584 = vshrl.u32 %v1583, 7
      %v1585 = vsub.s32 0, %v1584
      %v1586 = vrot.slane %v1581, %v1585
      %v1588 = vadd.f32 %v1549, %v1586
      %v1589 = vadd.f32 %v1550, %v1586
      %v1590 = vadd.f32 %v1551, %v1586
      %v1591 = vadd.f32 %v1552, %v1586
      %v1592 = vadd.f32 %v1553, %v1586
      %v1593 = vadd.f32 %v1554, %v1586
      %v1594 = vadd.f32 %v1555, %v1586
      %v1595 = vadd.f32 %v1556, %v1586
      %v1596 = vadd.f32 %v1557, %v1586
      %v1597 = vadd.f32 %v1558, %v1586
      %v1598 = vadd.f32 %v1559, %v1586
      %v1599 = vadd.f32 %v1560, %v1586
      %v1600 = vadd.f32 %v1561, %v1586
      %v1601 = vadd.f32 %v1562, %v1586
      %v1602 = vadd.f32 %v1563, %v1586
      %v1603 = vadd.f32 %v1564, %v1586
      %v1604 = vadd.f32 %v1565, %v1586
      %v1605 = vadd.f32 %v1566, %v1586
      %v1606 = vadd.f32 %v1567, %v1586
      %v1607 = vadd.f32 %v1568, %v1586
      %v1608 = vadd.f32 %v1569, %v1586
      %v1609 = vadd.f32 %v1570, %v1586
      %v1610 = vadd.f32 %v1571, %v1586
      %v1611 = vadd.f32 %v1572, %v1586
      %v1612 = vadd.f32 %v1573, %v1586
      %v1613 = vadd.f32 %v1574, %v1586
      %v1614 = vadd.f32 %v1575, %v1586
      %v1615 = vadd.f32 %v1576, %v1586
      %v1616 = vadd.f32 %v1577, %v1586
      %v1617 = vadd.f32 %v1578, %v1586
      %v1618 = vadd.f32 %v1579, %v1586
      %v1619 = vadd.f32 %v1580, %v1586
      %1620 = vst.msk [vmem:[%s313] sm:$0xff] %vm1086, %v1588
      %1621 = vst.msk [vmem:[%s313 + $0x8] sm:$0xff] %vm1086, %v1589
      %1622 = vst.msk [vmem:[%s313 + $0x10] sm:$0xff] %vm1086, %v1590
      %1623 = vst.msk [vmem:[%s313 + $0x18] sm:$0xff] %vm1086, %v1591
      %1624 = vst.msk [vmem:[%s313 + $0x20] sm:$0xff] %vm1086, %v1592
      %1625 = vst.msk [vmem:[%s313 + $0x28] sm:$0xff] %vm1086, %v1593
      %1626 = vst.msk [vmem:[%s313 + $0x30] sm:$0xff] %vm1086, %v1594
      %1627 = vst.msk [vmem:[%s313 + $0x38] sm:$0xff] %vm1086, %v1595
      %1628 = vst.msk [vmem:[%s313 + $0x40] sm:$0xff] %vm1086, %v1596
      %1629 = vst.msk [vmem:[%s313 + $0x48] sm:$0xff] %vm1086, %v1597
      %1630 = vst.msk [vmem:[%s313 + $0x50] sm:$0xff] %vm1086, %v1598
      %1631 = vst.msk [vmem:[%s313 + $0x58] sm:$0xff] %vm1086, %v1599
      %1632 = vst.msk [vmem:[%s313 + $0x60] sm:$0xff] %vm1086, %v1600
      %1633 = vst.msk [vmem:[%s313 + $0x68] sm:$0xff] %vm1086, %v1601
      %1634 = vst.msk [vmem:[%s313 + $0x70] sm:$0xff] %vm1086, %v1602
      %1635 = vst.msk [vmem:[%s313 + $0x78] sm:$0xff] %vm1086, %v1603
      %1636 = vst.msk [vmem:[%s313 + $0x80] sm:$0xff] %vm1086, %v1604
      %1637 = vst.msk [vmem:[%s313 + $0x88] sm:$0xff] %vm1086, %v1605
      %1638 = vst.msk [vmem:[%s313 + $0x90] sm:$0xff] %vm1086, %v1606
      %1639 = vst.msk [vmem:[%s313 + $0x98] sm:$0xff] %vm1086, %v1607
      %1640 = vst.msk [vmem:[%s313 + $0xa0] sm:$0xff] %vm1086, %v1608
      %1641 = vst.msk [vmem:[%s313 + $0xa8] sm:$0xff] %vm1086, %v1609
      %1642 = vst.msk [vmem:[%s313 + $0xb0] sm:$0xff] %vm1086, %v1610
      %1643 = vst.msk [vmem:[%s313 + $0xb8] sm:$0xff] %vm1086, %v1611
      %1644 = vst.msk [vmem:[%s313 + $0xc0] sm:$0xff] %vm1086, %v1612
      %1645 = vst.msk [vmem:[%s313 + $0xc8] sm:$0xff] %vm1086, %v1613
      %1646 = vst.msk [vmem:[%s313 + $0xd0] sm:$0xff] %vm1086, %v1614
      %1647 = vst.msk [vmem:[%s313 + $0xd8] sm:$0xff] %vm1086, %v1615
      %1648 = vst.msk [vmem:[%s313 + $0xe0] sm:$0xff] %vm1086, %v1616
      %1649 = vst.msk [vmem:[%s313 + $0xe8] sm:$0xff] %vm1086, %v1617
      %1650 = vst.msk [vmem:[%s313 + $0xf0] sm:$0xff] %vm1086, %v1618
      %1651 = vst.msk [vmem:[%s313 + $0xf8] sm:$0xff] %vm1086, %v1619
      %v1652 = vsel %vm1086, %v1588, 0.0
      %v1653 = vsel %vm1086, %v1589, 0.0
      %v1654 = vadd.f32 %v1652, %v1653
      %v1655 = vsel %vm1086, %v1590, 0.0
      %v1656 = vadd.f32 %v1654, %v1655
      %v1657 = vsel %vm1086, %v1591, 0.0
      %v1658 = vadd.f32 %v1656, %v1657
      %v1659 = vsel %vm1086, %v1592, 0.0
      %v1660 = vadd.f32 %v1658, %v1659
      %v1661 = vsel %vm1086, %v1593, 0.0
      %v1662 = vadd.f32 %v1660, %v1661
      %v1663 = vsel %vm1086, %v1594, 0.0
      %v1664 = vadd.f32 %v1662, %v1663
      %v1665 = vsel %vm1086, %v1595, 0.0
      %v1666 = vadd.f32 %v1664, %v1665
      %v1667 = vsel %vm1086, %v1596, 0.0
      %v1668 = vadd.f32 %v1666, %v1667
      %v1669 = vsel %vm1086, %v1597, 0.0
      %v1670 = vadd.f32 %v1668, %v1669
      %v1671 = vsel %vm1086, %v1598, 0.0
      %v1672 = vadd.f32 %v1670, %v1671
      %v1673 = vsel %vm1086, %v1599, 0.0
      %v1674 = vadd.f32 %v1672, %v1673
      %v1675 = vsel %vm1086, %v1600, 0.0
      %v1676 = vadd.f32 %v1674, %v1675
      %v1677 = vsel %vm1086, %v1601, 0.0
      %v1678 = vadd.f32 %v1676, %v1677
      %v1679 = vsel %vm1086, %v1602, 0.0
      %v1680 = vadd.f32 %v1678, %v1679
      %v1681 = vsel %vm1086, %v1603, 0.0
      %v1682 = vadd.f32 %v1680, %v1681
      %v1683 = vsel %vm1086, %v1604, 0.0
      %v1684 = vadd.f32 %v1682, %v1683
      %v1685 = vsel %vm1086, %v1605, 0.0
      %v1686 = vadd.f32 %v1684, %v1685
      %v1687 = vsel %vm1086, %v1606, 0.0
      %v1688 = vadd.f32 %v1686, %v1687
      %v1689 = vsel %vm1086, %v1607, 0.0
      %v1690 = vadd.f32 %v1688, %v1689
      %v1691 = vsel %vm1086, %v1608, 0.0
      %v1692 = vadd.f32 %v1690, %v1691
      %v1693 = vsel %vm1086, %v1609, 0.0
      %v1694 = vadd.f32 %v1692, %v1693
      %v1695 = vsel %vm1086, %v1610, 0.0
      %v1696 = vadd.f32 %v1694, %v1695
      %v1697 = vsel %vm1086, %v1611, 0.0
      %v1698 = vadd.f32 %v1696, %v1697
      %v1699 = vsel %vm1086, %v1612, 0.0
      %v1700 = vadd.f32 %v1698, %v1699
      %v1701 = vsel %vm1086, %v1613, 0.0
      %v1702 = vadd.f32 %v1700, %v1701
      %v1703 = vsel %vm1086, %v1614, 0.0
      %v1704 = vadd.f32 %v1702, %v1703
      %v1705 = vsel %vm1086, %v1615, 0.0
      %v1706 = vadd.f32 %v1704, %v1705
      %v1707 = vsel %vm1086, %v1616, 0.0
      %v1708 = vadd.f32 %v1706, %v1707
      %v1709 = vsel %vm1086, %v1617, 0.0
      %v1710 = vadd.f32 %v1708, %v1709
      %v1711 = vsel %vm1086, %v1618, 0.0
      %v1712 = vadd.f32 %v1710, %v1711
      %v1713 = vsel %vm1086, %v1619, 0.0
      %v1714 = vadd.f32 %v1712, %v1713
      %v1715 = vrot.slane %v1714, 4
      %v1716 = vadd.f32 %v1714, %v1715
      %v1717 = vrot.slane %v1716, 2
      %v1718 = vadd.f32 %v1716, %v1717
      %v1719 = vrot.slane %v1718, 1
      %v1720 = vadd.f32 %v1718, %v1719
      %v1721 = vmul.f32 %v1588, %v1588
      %v1722 = vmul.f32 %v1589, %v1589
      %v1723 = vmul.f32 %v1590, %v1590
      %v1724 = vmul.f32 %v1591, %v1591
      %v1725 = vmul.f32 %v1592, %v1592
      %v1726 = vmul.f32 %v1593, %v1593
      %v1727 = vmul.f32 %v1594, %v1594
      %v1728 = vmul.f32 %v1595, %v1595
      %v1729 = vmul.f32 %v1596, %v1596
      %v1730 = vmul.f32 %v1597, %v1597
      %v1731 = vmul.f32 %v1598, %v1598
      %v1732 = vmul.f32 %v1599, %v1599
      %v1733 = vmul.f32 %v1600, %v1600
      %v1734 = vmul.f32 %v1601, %v1601
      %v1735 = vmul.f32 %v1602, %v1602
      %v1736 = vmul.f32 %v1603, %v1603
      %v1737 = vmul.f32 %v1604, %v1604
      %v1738 = vmul.f32 %v1605, %v1605
      %v1739 = vmul.f32 %v1606, %v1606
      %v1740 = vmul.f32 %v1607, %v1607
      %v1741 = vmul.f32 %v1608, %v1608
      %v1742 = vmul.f32 %v1609, %v1609
      %v1743 = vmul.f32 %v1610, %v1610
      %v1744 = vmul.f32 %v1611, %v1611
      %v1745 = vmul.f32 %v1612, %v1612
      %v1746 = vmul.f32 %v1613, %v1613
      %v1747 = vmul.f32 %v1614, %v1614
      %v1748 = vmul.f32 %v1615, %v1615
      %v1749 = vmul.f32 %v1616, %v1616
      %v1750 = vmul.f32 %v1617, %v1617
      %v1751 = vmul.f32 %v1618, %v1618
      %v1752 = vmul.f32 %v1619, %v1619
      %v1753 = vsel %vm1086, %v1721, 0.0
      %v1754 = vsel %vm1086, %v1722, 0.0
      %v1755 = vadd.f32 %v1753, %v1754
      %v1756 = vsel %vm1086, %v1723, 0.0
      %v1757 = vadd.f32 %v1755, %v1756
      %v1758 = vsel %vm1086, %v1724, 0.0
      %v1759 = vadd.f32 %v1757, %v1758
      %v1760 = vsel %vm1086, %v1725, 0.0
      %v1761 = vadd.f32 %v1759, %v1760
      %v1762 = vsel %vm1086, %v1726, 0.0
      %v1763 = vadd.f32 %v1761, %v1762
      %v1764 = vsel %vm1086, %v1727, 0.0
      %v1765 = vadd.f32 %v1763, %v1764
      %v1766 = vsel %vm1086, %v1728, 0.0
      %v1767 = vadd.f32 %v1765, %v1766
      %v1768 = vsel %vm1086, %v1729, 0.0
      %v1769 = vadd.f32 %v1767, %v1768
      %v1770 = vsel %vm1086, %v1730, 0.0
      %v1771 = vadd.f32 %v1769, %v1770
      %v1772 = vsel %vm1086, %v1731, 0.0
      %v1773 = vadd.f32 %v1771, %v1772
      %v1774 = vsel %vm1086, %v1732, 0.0
      %v1775 = vadd.f32 %v1773, %v1774
      %v1776 = vsel %vm1086, %v1733, 0.0
      %v1777 = vadd.f32 %v1775, %v1776
      %v1778 = vsel %vm1086, %v1734, 0.0
      %v1779 = vadd.f32 %v1777, %v1778
      %v1780 = vsel %vm1086, %v1735, 0.0
      %v1781 = vadd.f32 %v1779, %v1780
      %v1782 = vsel %vm1086, %v1736, 0.0
      %v1783 = vadd.f32 %v1781, %v1782
      %v1784 = vsel %vm1086, %v1737, 0.0
      %v1785 = vadd.f32 %v1783, %v1784
      %v1786 = vsel %vm1086, %v1738, 0.0
      %v1787 = vadd.f32 %v1785, %v1786
      %v1788 = vsel %vm1086, %v1739, 0.0
      %v1789 = vadd.f32 %v1787, %v1788
      %v1790 = vsel %vm1086, %v1740, 0.0
      %v1791 = vadd.f32 %v1789, %v1790
      %v1792 = vsel %vm1086, %v1741, 0.0
      %v1793 = vadd.f32 %v1791, %v1792
      %v1794 = vsel %vm1086, %v1742, 0.0
      %v1795 = vadd.f32 %v1793, %v1794
      %v1796 = vsel %vm1086, %v1743, 0.0
      %v1797 = vadd.f32 %v1795, %v1796
      %v1798 = vsel %vm1086, %v1744, 0.0
      %v1799 = vadd.f32 %v1797, %v1798
      %v1800 = vsel %vm1086, %v1745, 0.0
      %v1801 = vadd.f32 %v1799, %v1800
      %v1802 = vsel %vm1086, %v1746, 0.0
      %v1803 = vadd.f32 %v1801, %v1802
      %v1804 = vsel %vm1086, %v1747, 0.0
      %v1805 = vadd.f32 %v1803, %v1804
      %v1806 = vsel %vm1086, %v1748, 0.0
      %v1807 = vadd.f32 %v1805, %v1806
      %v1808 = vsel %vm1086, %v1749, 0.0
      %v1809 = vadd.f32 %v1807, %v1808
      %v1810 = vsel %vm1086, %v1750, 0.0
      %v1811 = vadd.f32 %v1809, %v1810
      %v1812 = vsel %vm1086, %v1751, 0.0
      %v1813 = vadd.f32 %v1811, %v1812
      %v1814 = vsel %vm1086, %v1752, 0.0
      %v1815 = vadd.f32 %v1813, %v1814
      %v1816 = vrot.slane %v1815, 4
      %v1817 = vadd.f32 %v1815, %v1816
      %v1818 = vrot.slane %v1817, 2
      %v1819 = vadd.f32 %v1817, %v1818
      %v1820 = vrot.slane %v1819, 1
      %v1821 = vadd.f32 %v1819, %v1820
      %vm1822 = vcmask 1040384
      %v1823 = vsel %vm1822, %v1720, %v1821
      %vm1824 = vcmask 58368
      %1825 = vst.msk [vmem:[%s321] sm:$0x3] %vm1824, %v1823
      %s1826 = smul.u32 32, %s23
      %p1827 = scmp.lt.s32.totalorder %s22, 1
      %s1828 = scalar_select %p1827, %s22, 1
      %p1829 = scmp.lt.s32.totalorder %s1826, 31
      %s1830 = scalar_select %p1829, %s1826, 31
      %s1831 = smul.addr %s1828, 32
      %s1832 = sadd.s32 %s1830, %s1831
      %s1833 = smul.addr %s1832, 8
      %s1834 = scalar_lea.vmem %s5, %s1833
      %p1835 = scmp.lt.s32.totalorder %s22, 1
      %s1836 = scalar_select %p1835, %s22, 1
      %p1837 = scmp.lt.s32.totalorder %s23, 0
      %s1838 = scalar_select %p1837, %s23, 0
      %s1839 = sadd.s32 %s1838, %s1836
      %s1840 = smul.addr %s1839, 2
      %s1841 = scalar_lea.vmem %s6, %s1840
      // Predicated region
      $region41: #{film_forward.4} parent=39 // pred_check
        %p1842 = pneg %p170
      $region42: #{film_forward.4} parent=39 // pred_check_branch
        %1844 = sbr.rel (%p1842) target = $region44
      $region43: #{film_forward.4} parent=39 // pred_region
        %s1845 = smul.u32 32, %s23
      $region44: #{film_forward.4} parent=39 // pred_fallthru
        _
      // Predicated region
      $region45: #{film_forward.4} parent=39 // pred_check
        %p1846 = pneg %p198
      $region46: #{film_forward.4} parent=39 // pred_check_branch
        %1848 = sbr.rel (%p1846) target = $region48
      $region47: #{film_forward.4} parent=39 // pred_region
        _
      $region48: #{film_forward.4} parent=39 // pred_fallthru
        _
    $region40: #{film_forward.4} parent=5 // pred_fallthru
      _
    %p1849 = scmp.le.s32.totalorder 2, %s13
    // Predicated region
    $region49: #{film_forward.4} parent=5 // pred_check
      %p1850 = pneg %p1849
    $region50: #{film_forward.4} parent=5 // pred_check_branch
      %1852 = sbr.rel (%p1850) target = $region52
    $region51: #{film_forward.4} parent=5 // pred_region
      %s1853 = ssub.s32 %s13, 2
      // Predicated region
      $region53: #{film_forward.4} parent=51 // pred_check
        %p1854 = pneg %p176
      $region54: #{film_forward.4} parent=51 // pred_check_branch
        %1856 = sbr.rel (%p1854) target = $region56
      $region55: #{film_forward.4} parent=51 // pred_region
        %s1857 = smul.u32 32, %s25
        %p1858 = scmp.lt.s32.totalorder %s24, 1
        %s1859 = scalar_select %p1858, %s24, 1
        %p1860 = scmp.lt.s32.totalorder %s1857, 31
        %s1861 = scalar_select %p1860, %s1857, 31
        %s1862 = smul.addr %s1859, 32
        %s1863 = sadd.s32 %s1861, %s1862
        %s1864 = smul.addr %s1863, 8
        %s1865 = scalar_lea.vmem %s5, %s1864
      $region56: #{film_forward.4} parent=51 // pred_fallthru
        _
      // Predicated region
      $region57: #{film_forward.4} parent=51 // pred_check
        %p1866 = pneg %p204
      $region58: #{film_forward.4} parent=51 // pred_check_branch
        %1868 = sbr.rel (%p1866) target = $region60
      $region59: #{film_forward.4} parent=51 // pred_region
        %p1869 = scmp.lt.s32.totalorder %s24, 1
        %s1870 = scalar_select %p1869, %s24, 1
        %p1871 = scmp.lt.s32.totalorder %s25, 0
        %s1872 = scalar_select %p1871, %s25, 0
        %s1873 = sadd.s32 %s1872, %s1870
        %s1874 = smul.addr %s1873, 2
        %s1875 = scalar_lea.vmem %s6, %s1874
      $region60: #{film_forward.4} parent=51 // pred_fallthru
        _
    $region52: #{film_forward.4} parent=5 // pred_fallthru
      _
  $region6: #{film_forward.4} parent=0 // loop_footer
    %s17 = sadd.s32 1, %s13
  $region7: #{film_forward.4} parent=0 // loop_footer_branch
    %12 = sbr.rel target = $region3
  $region8: #{film_forward.4} parent=0 // loop_exit
    _

// kernel: film_forward.7
$region0: #{film_forward.7}
  #allocation0 [shape = 'u32[]', space=smem, size = 0x4, offset = 0x4, fixed_abs, tag = 'smem constant byte address 0x4 - core index']
  #allocation1 [shape = 'u32[144,128]{1,0:T(1,128)}', space=vmem, size = 0x12000, scoped, tag = 'internal scratch']
  %s0 = inlined_call_operand.vmem [shape: f32[512,16], index: 0, kind: input, shape index: {}]
  %s1 = inlined_call_operand.vmem [shape: f32[1,16], index: 1, kind: input, shape index: {}]
  %s2 = inlined_call_operand.vmem [shape: f32[1,16], index: 2, kind: input, shape index: {}]
  %s3 = inlined_call_operand.vmem [shape: f32[512,16], index: 3, kind: output, shape index: {}]
  %s4 = sld [smem:[#allocation0]]
  $region22: #{film_forward.7} parent=0
    _
  %s6 = ssub.s32 1, %s4
  %s7 = scalar_select 0, %s6, %s4
  // Predicated region
  $region2: #{film_forward.7} parent=0 // pred_check
    _
  $region3: #{film_forward.7} parent=0 // pred_check_branch
    %9 = sbr.rel (0) target = $region5
  $region4: #{film_forward.7} parent=0 // pred_region
    _
  $region5: #{film_forward.7} parent=0 // pred_fallthru
    _
  // Predicated region
  $region6: #{film_forward.7} parent=0 // pred_check
    _
  $region7: #{film_forward.7} parent=0 // pred_check_branch
    %11 = sbr.rel (0) target = $region9
  $region8: #{film_forward.7} parent=0 // pred_region
    _
  $region9: #{film_forward.7} parent=0 // pred_fallthru
    _
  // Predicated region
  $region10: #{film_forward.7} parent=0 // pred_check
    _
  $region11: #{film_forward.7} parent=0 // pred_check_branch
    %13 = sbr.rel (0) target = $region13
  $region12: #{film_forward.7} parent=0 // pred_region
    _
  $region13: #{film_forward.7} parent=0 // pred_fallthru
    _
  %v14 = vld [vmem:[%s0] sm:$0xff]
  %v15 = vld [vmem:[%s0 + $0x8] sm:$0xff]
  %v16 = vld [vmem:[%s0 + $0x10] sm:$0xff]
  %v17 = vld [vmem:[%s0 + $0x18] sm:$0xff]
  %v18 = vld [vmem:[%s0 + $0x20] sm:$0xff]
  %v19 = vld [vmem:[%s0 + $0x28] sm:$0xff]
  %v20 = vld [vmem:[%s0 + $0x30] sm:$0xff]
  %v21 = vld [vmem:[%s0 + $0x38] sm:$0xff]
  %v22 = vld [vmem:[%s0 + $0x40] sm:$0xff]
  %v23 = vld [vmem:[%s0 + $0x48] sm:$0xff]
  %v24 = vld [vmem:[%s0 + $0x50] sm:$0xff]
  %v25 = vld [vmem:[%s0 + $0x58] sm:$0xff]
  %v26 = vld [vmem:[%s0 + $0x60] sm:$0xff]
  %v27 = vld [vmem:[%s0 + $0x68] sm:$0xff]
  %v28 = vld [vmem:[%s0 + $0x70] sm:$0xff]
  %v29 = vld [vmem:[%s0 + $0x78] sm:$0xff]
  %v30 = vld [vmem:[%s0 + $0x80] sm:$0xff]
  %v31 = vld [vmem:[%s0 + $0x88] sm:$0xff]
  %v32 = vld [vmem:[%s0 + $0x90] sm:$0xff]
  %v33 = vld [vmem:[%s0 + $0x98] sm:$0xff]
  %v34 = vld [vmem:[%s0 + $0xa0] sm:$0xff]
  %v35 = vld [vmem:[%s0 + $0xa8] sm:$0xff]
  %v36 = vld [vmem:[%s0 + $0xb0] sm:$0xff]
  %v37 = vld [vmem:[%s0 + $0xb8] sm:$0xff]
  %v38 = vld [vmem:[%s0 + $0xc0] sm:$0xff]
  %v39 = vld [vmem:[%s0 + $0xc8] sm:$0xff]
  %v40 = vld [vmem:[%s0 + $0xd0] sm:$0xff]
  %v41 = vld [vmem:[%s0 + $0xd8] sm:$0xff]
  %v42 = vld [vmem:[%s0 + $0xe0] sm:$0xff]
  %v43 = vld [vmem:[%s0 + $0xe8] sm:$0xff]
  %v44 = vld [vmem:[%s0 + $0xf0] sm:$0xff]
  %v45 = vld [vmem:[%s0 + $0xf8] sm:$0xff]
  %v46 = vld [vmem:[%s0 + $0x100] sm:$0xff]
  %v47 = vld [vmem:[%s0 + $0x108] sm:$0xff]
  %v48 = vld [vmem:[%s0 + $0x110] sm:$0xff]
  %v49 = vld [vmem:[%s0 + $0x118] sm:$0xff]
  %v50 = vld [vmem:[%s0 + $0x120] sm:$0xff]
  %v51 = vld [vmem:[%s0 + $0x128] sm:$0xff]
  %v52 = vld [vmem:[%s0 + $0x130] sm:$0xff]
  %v53 = vld [vmem:[%s0 + $0x138] sm:$0xff]
  %v54 = vld [vmem:[%s0 + $0x140] sm:$0xff]
  %v55 = vld [vmem:[%s0 + $0x148] sm:$0xff]
  %v56 = vld [vmem:[%s0 + $0x150] sm:$0xff]
  %v57 = vld [vmem:[%s0 + $0x158] sm:$0xff]
  %v58 = vld [vmem:[%s0 + $0x160] sm:$0xff]
  %v59 = vld [vmem:[%s0 + $0x168] sm:$0xff]
  %v60 = vld [vmem:[%s0 + $0x170] sm:$0xff]
  %v61 = vld [vmem:[%s0 + $0x178] sm:$0xff]
  %v62 = vld [vmem:[%s0 + $0x180] sm:$0xff]
  %v63 = vld [vmem:[%s0 + $0x188] sm:$0xff]
  %v64 = vld [vmem:[%s0 + $0x190] sm:$0xff]
  %v65 = vld [vmem:[%s0 + $0x198] sm:$0xff]
  %v66 = vld [vmem:[%s0 + $0x1a0] sm:$0xff]
  %v67 = vld [vmem:[%s0 + $0x1a8] sm:$0xff]
  %v68 = vld [vmem:[%s0 + $0x1b0] sm:$0xff]
  %v69 = vld [vmem:[%s0 + $0x1b8] sm:$0xff]
  %v70 = vld [vmem:[%s0 + $0x1c0] sm:$0xff]
  %v71 = vld [vmem:[%s0 + $0x1c8] sm:$0xff]
  %v72 = vld [vmem:[%s0 + $0x1d0] sm:$0xff]
  %v73 = vld [vmem:[%s0 + $0x1d8] sm:$0xff]
  %v74 = vld [vmem:[%s0 + $0x1e0] sm:$0xff]
  %v75 = vld [vmem:[%s0 + $0x1e8] sm:$0xff]
  %v76 = vld [vmem:[%s0 + $0x1f0] sm:$0xff]
  %v77 = vld [vmem:[%s0 + $0x1f8] sm:$0xff]
  %v78 = vld [vmem:[%s1] sm:$0x1]
  %v80 = vlaneseq
  %v81 = vshrl.u32 %v80, 7
  %v82 = vsub.s32 0, %v81
  %v83 = vrot.slane %v78, %v82
  %v85 = vmul.f32 %v14, %v83
  %v86 = vmul.f32 %v15, %v83
  %v87 = vmul.f32 %v16, %v83
  %v88 = vmul.f32 %v17, %v83
  %v89 = vmul.f32 %v18, %v83
  %v90 = vmul.f32 %v19, %v83
  %v91 = vmul.f32 %v20, %v83
  %v92 = vmul.f32 %v21, %v83
  %v93 = vmul.f32 %v22, %v83
  %v94 = vmul.f32 %v23, %v83
  %v95 = vmul.f32 %v24, %v83
  %v96 = vmul.f32 %v25, %v83
  %v97 = vmul.f32 %v26, %v83
  %v98 = vmul.f32 %v27, %v83
  %v99 = vmul.f32 %v28, %v83
  %v100 = vmul.f32 %v29, %v83
  %v101 = vmul.f32 %v30, %v83
  %v102 = vmul.f32 %v31, %v83
  %v103 = vmul.f32 %v32, %v83
  %v104 = vmul.f32 %v33, %v83
  %v105 = vmul.f32 %v34, %v83
  %v106 = vmul.f32 %v35, %v83
  %v107 = vmul.f32 %v36, %v83
  %v108 = vmul.f32 %v37, %v83
  %v109 = vmul.f32 %v38, %v83
  %v110 = vmul.f32 %v39, %v83
  %v111 = vmul.f32 %v40, %v83
  %v112 = vmul.f32 %v41, %v83
  %v113 = vmul.f32 %v42, %v83
  %v114 = vmul.f32 %v43, %v83
  %v115 = vmul.f32 %v44, %v83
  %v116 = vmul.f32 %v45, %v83
  %v117 = vmul.f32 %v46, %v83
  %v118 = vmul.f32 %v47, %v83
  %v119 = vmul.f32 %v48, %v83
  %v120 = vmul.f32 %v49, %v83
  %v121 = vmul.f32 %v50, %v83
  %v122 = vmul.f32 %v51, %v83
  %v123 = vmul.f32 %v52, %v83
  %v124 = vmul.f32 %v53, %v83
  %v125 = vmul.f32 %v54, %v83
  %v126 = vmul.f32 %v55, %v83
  %v127 = vmul.f32 %v56, %v83
  %v128 = vmul.f32 %v57, %v83
  %v129 = vmul.f32 %v58, %v83
  %v130 = vmul.f32 %v59, %v83
  %v131 = vmul.f32 %v60, %v83
  %v132 = vmul.f32 %v61, %v83
  %v133 = vmul.f32 %v62, %v83
  %v134 = vmul.f32 %v63, %v83
  %v135 = vmul.f32 %v64, %v83
  %v136 = vmul.f32 %v65, %v83
  %v137 = vmul.f32 %v66, %v83
  %v138 = vmul.f32 %v67, %v83
  %v139 = vmul.f32 %v68, %v83
  %v140 = vmul.f32 %v69, %v83
  %v141 = vmul.f32 %v70, %v83
  %v142 = vmul.f32 %v71, %v83
  %v143 = vmul.f32 %v72, %v83
  %v144 = vmul.f32 %v73, %v83
  %v145 = vmul.f32 %v74, %v83
  %v146 = vmul.f32 %v75, %v83
  %v147 = vmul.f32 %v76, %v83
  %v148 = vmul.f32 %v77, %v83
  %v149 = vld [vmem:[%s2] sm:$0x1]
  %v151 = vlaneseq
  %v152 = vshrl.u32 %v151, 7
  %v153 = vsub.s32 0, %v152
  %v154 = vrot.slane %v149, %v153
  %v156 = vadd.f32 %v85, %v154
  %v157 = vadd.f32 %v86, %v154
  %v158 = vadd.f32 %v87, %v154
  %v159 = vadd.f32 %v88, %v154
  %v160 = vadd.f32 %v89, %v154
  %v161 = vadd.f32 %v90, %v154
  %v162 = vadd.f32 %v91, %v154
  %v163 = vadd.f32 %v92, %v154
  %v164 = vadd.f32 %v93, %v154
  %v165 = vadd.f32 %v94, %v154
  %v166 = vadd.f32 %v95, %v154
  %v167 = vadd.f32 %v96, %v154
  %v168 = vadd.f32 %v97, %v154
  %v169 = vadd.f32 %v98, %v154
  %v170 = vadd.f32 %v99, %v154
  %v171 = vadd.f32 %v100, %v154
  %v172 = vadd.f32 %v101, %v154
  %v173 = vadd.f32 %v102, %v154
  %v174 = vadd.f32 %v103, %v154
  %v175 = vadd.f32 %v104, %v154
  %v176 = vadd.f32 %v105, %v154
  %v177 = vadd.f32 %v106, %v154
  %v178 = vadd.f32 %v107, %v154
  %v179 = vadd.f32 %v108, %v154
  %v180 = vadd.f32 %v109, %v154
  %v181 = vadd.f32 %v110, %v154
  %v182 = vadd.f32 %v111, %v154
  %v183 = vadd.f32 %v112, %v154
  %v184 = vadd.f32 %v113, %v154
  %v185 = vadd.f32 %v114, %v154
  %v186 = vadd.f32 %v115, %v154
  %v187 = vadd.f32 %v116, %v154
  %v188 = vadd.f32 %v117, %v154
  %v189 = vadd.f32 %v118, %v154
  %v190 = vadd.f32 %v119, %v154
  %v191 = vadd.f32 %v120, %v154
  %v192 = vadd.f32 %v121, %v154
  %v193 = vadd.f32 %v122, %v154
  %v194 = vadd.f32 %v123, %v154
  %v195 = vadd.f32 %v124, %v154
  %v196 = vadd.f32 %v125, %v154
  %v197 = vadd.f32 %v126, %v154
  %v198 = vadd.f32 %v127, %v154
  %v199 = vadd.f32 %v128, %v154
  %v200 = vadd.f32 %v129, %v154
  %v201 = vadd.f32 %v130, %v154
  %v202 = vadd.f32 %v131, %v154
  %v203 = vadd.f32 %v132, %v154
  %v204 = vadd.f32 %v133, %v154
  %v205 = vadd.f32 %v134, %v154
  %v206 = vadd.f32 %v135, %v154
  %v207 = vadd.f32 %v136, %v154
  %v208 = vadd.f32 %v137, %v154
  %v209 = vadd.f32 %v138, %v154
  %v210 = vadd.f32 %v139, %v154
  %v211 = vadd.f32 %v140, %v154
  %v212 = vadd.f32 %v141, %v154
  %v213 = vadd.f32 %v142, %v154
  %v214 = vadd.f32 %v143, %v154
  %v215 = vadd.f32 %v144, %v154
  %v216 = vadd.f32 %v145, %v154
  %v217 = vadd.f32 %v146, %v154
  %v218 = vadd.f32 %v147, %v154
  %v219 = vadd.f32 %v148, %v154
  %v220 = vmax.f32 %v156, 0.0
  %v221 = vmax.f32 %v157, 0.0
  %v222 = vmax.f32 %v158, 0.0
  %v223 = vmax.f32 %v159, 0.0
  %v224 = vmax.f32 %v160, 0.0
  %v225 = vmax.f32 %v161, 0.0
  %v226 = vmax.f32 %v162, 0.0
  %v227 = vmax.f32 %v163, 0.0
  %v228 = vmax.f32 %v164, 0.0
  %v229 = vmax.f32 %v165, 0.0
  %v230 = vmax.f32 %v166, 0.0
  %v231 = vmax.f32 %v167, 0.0
  %v232 = vmax.f32 %v168, 0.0
  %v233 = vmax.f32 %v169, 0.0
  %v234 = vmax.f32 %v170, 0.0
  %v235 = vmax.f32 %v171, 0.0
  %v236 = vmax.f32 %v172, 0.0
  %v237 = vmax.f32 %v173, 0.0
  %v238 = vmax.f32 %v174, 0.0
  %v239 = vmax.f32 %v175, 0.0
  %v240 = vmax.f32 %v176, 0.0
  %v241 = vmax.f32 %v177, 0.0
  %v242 = vmax.f32 %v178, 0.0
  %v243 = vmax.f32 %v179, 0.0
  %v244 = vmax.f32 %v180, 0.0
  %v245 = vmax.f32 %v181, 0.0
  %v246 = vmax.f32 %v182, 0.0
  %v247 = vmax.f32 %v183, 0.0
  %v248 = vmax.f32 %v184, 0.0
  %v249 = vmax.f32 %v185, 0.0
  %v250 = vmax.f32 %v186, 0.0
  %v251 = vmax.f32 %v187, 0.0
  %v252 = vmax.f32 %v188, 0.0
  %v253 = vmax.f32 %v189, 0.0
  %v254 = vmax.f32 %v190, 0.0
  %v255 = vmax.f32 %v191, 0.0
  %v256 = vmax.f32 %v192, 0.0
  %v257 = vmax.f32 %v193, 0.0
  %v258 = vmax.f32 %v194, 0.0
  %v259 = vmax.f32 %v195, 0.0
  %v260 = vmax.f32 %v196, 0.0
  %v261 = vmax.f32 %v197, 0.0
  %v262 = vmax.f32 %v198, 0.0
  %v263 = vmax.f32 %v199, 0.0
  %v264 = vmax.f32 %v200, 0.0
  %v265 = vmax.f32 %v201, 0.0
  %v266 = vmax.f32 %v202, 0.0
  %v267 = vmax.f32 %v203, 0.0
  %v268 = vmax.f32 %v204, 0.0
  %v269 = vmax.f32 %v205, 0.0
  %v270 = vmax.f32 %v206, 0.0
  %v271 = vmax.f32 %v207, 0.0
  %v272 = vmax.f32 %v208, 0.0
  %v273 = vmax.f32 %v209, 0.0
  %v274 = vmax.f32 %v210, 0.0
  %v275 = vmax.f32 %v211, 0.0
  %v276 = vmax.f32 %v212, 0.0
  %v277 = vmax.f32 %v213, 0.0
  %v278 = vmax.f32 %v214, 0.0
  %v279 = vmax.f32 %v215, 0.0
  %v280 = vmax.f32 %v216, 0.0
  %v281 = vmax.f32 %v217, 0.0
  %v282 = vmax.f32 %v218, 0.0
  %v283 = vmax.f32 %v219, 0.0
  %vm284 = vcmask 130048
  %285 = vst.msk [vmem:[%s3] sm:$0xff] %vm284, %v220
  %286 = vst.msk [vmem:[%s3 + $0x8] sm:$0xff] %vm284, %v221
  %287 = vst.msk [vmem:[%s3 + $0x10] sm:$0xff] %vm284, %v222
  %288 = vst.msk [vmem:[%s3 + $0x18] sm:$0xff] %vm284, %v223
  %289 = vst.msk [vmem:[%s3 + $0x20] sm:$0xff] %vm284, %v224
  %290 = vst.msk [vmem:[%s3 + $0x28] sm:$0xff] %vm284, %v225
  %291 = vst.msk [vmem:[%s3 + $0x30] sm:$0xff] %vm284, %v226
  %292 = vst.msk [vmem:[%s3 + $0x38] sm:$0xff] %vm284, %v227
  %293 = vst.msk [vmem:[%s3 + $0x40] sm:$0xff] %vm284, %v228
  %294 = vst.msk [vmem:[%s3 + $0x48] sm:$0xff] %vm284, %v229
  %295 = vst.msk [vmem:[%s3 + $0x50] sm:$0xff] %vm284, %v230
  %296 = vst.msk [vmem:[%s3 + $0x58] sm:$0xff] %vm284, %v231
  %297 = vst.msk [vmem:[%s3 + $0x60] sm:$0xff] %vm284, %v232
  %298 = vst.msk [vmem:[%s3 + $0x68] sm:$0xff] %vm284, %v233
  %299 = vst.msk [vmem:[%s3 + $0x70] sm:$0xff] %vm284, %v234
  %300 = vst.msk [vmem:[%s3 + $0x78] sm:$0xff] %vm284, %v235
  %301 = vst.msk [vmem:[%s3 + $0x80] sm:$0xff] %vm284, %v236
  %302 = vst.msk [vmem:[%s3 + $0x88] sm:$0xff] %vm284, %v237
  %303 = vst.msk [vmem:[%s3 + $0x90] sm:$0xff] %vm284, %v238
  %304 = vst.msk [vmem:[%s3 + $0x98] sm:$0xff] %vm284, %v239
  %305 = vst.msk [vmem:[%s3 + $0xa0] sm:$0xff] %vm284, %v240
  %306 = vst.msk [vmem:[%s3 + $0xa8] sm:$0xff] %vm284, %v241
  %307 = vst.msk [vmem:[%s3 + $0xb0] sm:$0xff] %vm284, %v242
  %308 = vst.msk [vmem:[%s3 + $0xb8] sm:$0xff] %vm284, %v243
  %309 = vst.msk [vmem:[%s3 + $0xc0] sm:$0xff] %vm284, %v244
  %310 = vst.msk [vmem:[%s3 + $0xc8] sm:$0xff] %vm284, %v245
  %311 = vst.msk [vmem:[%s3 + $0xd0] sm:$0xff] %vm284, %v246
  %312 = vst.msk [vmem:[%s3 + $0xd8] sm:$0xff] %vm284, %v247
  %313 = vst.msk [vmem:[%s3 + $0xe0] sm:$0xff] %vm284, %v248
  %314 = vst.msk [vmem:[%s3 + $0xe8] sm:$0xff] %vm284, %v249
  %315 = vst.msk [vmem:[%s3 + $0xf0] sm:$0xff] %vm284, %v250
  %316 = vst.msk [vmem:[%s3 + $0xf8] sm:$0xff] %vm284, %v251
  %317 = vst.msk [vmem:[%s3 + $0x100] sm:$0xff] %vm284, %v252
  %318 = vst.msk [vmem:[%s3 + $0x108] sm:$0xff] %vm284, %v253
  %319 = vst.msk [vmem:[%s3 + $0x110] sm:$0xff] %vm284, %v254
  %320 = vst.msk [vmem:[%s3 + $0x118] sm:$0xff] %vm284, %v255
  %321 = vst.msk [vmem:[%s3 + $0x120] sm:$0xff] %vm284, %v256
  %322 = vst.msk [vmem:[%s3 + $0x128] sm:$0xff] %vm284, %v257
  %323 = vst.msk [vmem:[%s3 + $0x130] sm:$0xff] %vm284, %v258
  %324 = vst.msk [vmem:[%s3 + $0x138] sm:$0xff] %vm284, %v259
  %325 = vst.msk [vmem:[%s3 + $0x140] sm:$0xff] %vm284, %v260
  %326 = vst.msk [vmem:[%s3 + $0x148] sm:$0xff] %vm284, %v261
  %327 = vst.msk [vmem:[%s3 + $0x150] sm:$0xff] %vm284, %v262
  %328 = vst.msk [vmem:[%s3 + $0x158] sm:$0xff] %vm284, %v263
  %329 = vst.msk [vmem:[%s3 + $0x160] sm:$0xff] %vm284, %v264
  %330 = vst.msk [vmem:[%s3 + $0x168] sm:$0xff] %vm284, %v265
  %331 = vst.msk [vmem:[%s3 + $0x170] sm:$0xff] %vm284, %v266
  %332 = vst.msk [vmem:[%s3 + $0x178] sm:$0xff] %vm284, %v267
  %333 = vst.msk [vmem:[%s3 + $0x180] sm:$0xff] %vm284, %v268
  %334 = vst.msk [vmem:[%s3 + $0x188] sm:$0xff] %vm284, %v269
  %335 = vst.msk [vmem:[%s3 + $0x190] sm:$0xff] %vm284, %v270
  %336 = vst.msk [vmem:[%s3 + $0x198] sm:$0xff] %vm284, %v271
  %337 = vst.msk [vmem:[%s3 + $0x1a0] sm:$0xff] %vm284, %v272
  %338 = vst.msk [vmem:[%s3 + $0x1a8] sm:$0xff] %vm284, %v273
  %339 = vst.msk [vmem:[%s3 + $0x1b0] sm:$0xff] %vm284, %v274
  %340 = vst.msk [vmem:[%s3 + $0x1b8] sm:$0xff] %vm284, %v275
  %341 = vst.msk [vmem:[%s3 + $0x1c0] sm:$0xff] %vm284, %v276
  %342 = vst.msk [vmem:[%s3 + $0x1c8] sm:$0xff] %vm284, %v277
  %343 = vst.msk [vmem:[%s3 + $0x1d0] sm:$0xff] %vm284, %v278
  %344 = vst.msk [vmem:[%s3 + $0x1d8] sm:$0xff] %vm284, %v279
  %345 = vst.msk [vmem:[%s3 + $0x1e0] sm:$0xff] %vm284, %v280
  %346 = vst.msk [vmem:[%s3 + $0x1e8] sm:$0xff] %vm284, %v281
  %347 = vst.msk [vmem:[%s3 + $0x1f0] sm:$0xff] %vm284, %v282
  %348 = vst.msk [vmem:[%s3 + $0x1f8] sm:$0xff] %vm284, %v283
  // Predicated region
  $region14: #{film_forward.7} parent=0 // pred_check
    _
  $region15: #{film_forward.7} parent=0 // pred_check_branch
    %350 = sbr.rel (0) target = $region17
  $region16: #{film_forward.7} parent=0 // pred_region
    _
  $region17: #{film_forward.7} parent=0 // pred_fallthru
    _
  // Predicated region
  $region18: #{film_forward.7} parent=0 // pred_check
    _
  $region19: #{film_forward.7} parent=0 // pred_check_branch
    %352 = sbr.rel (0) target = $region21
  $region20: #{film_forward.7} parent=0 // pred_region
    _
  $region21: #{film_forward.7} parent=0 // pred_fallthru
    _

// kernel: film_forward.6
$region0: #{film_forward.6}
  #allocation0 [shape = 'u32[]', space=smem, size = 0x4, offset = 0x4, fixed_abs, tag = 'smem constant byte address 0x4 - core index']
  #allocation1 [shape = 'u32[144,128]{1,0:T(1,128)}', space=vmem, size = 0x12000, scoped, tag = 'internal scratch']
  %s0 = inlined_call_operand.vmem [shape: bf16[2,18,18,8], index: 0, kind: input, shape index: {}]
  %s1 = inlined_call_operand.vmem [shape: bf16[72,16], index: 1, kind: input, shape index: {}]
  %s2 = inlined_call_operand.vmem [shape: f32[1,16], index: 2, kind: input, shape index: {}]
  %s3 = inlined_call_operand.vmem [shape: f32[2,1,16], index: 3, kind: input, shape index: {}]
  %s4 = inlined_call_operand.vmem [shape: f32[2,1,16], index: 4, kind: input, shape index: {}]
  %s5 = inlined_call_operand.vmem [shape: f32[2,256,16], index: 5, kind: output, shape index: {0}]
  %s6 = inlined_call_operand.vmem [shape: f32[2,1,2,16], index: 6, kind: output, shape index: {1}]
  %7 = xla_tuple %s5, %s6
  %s8 = sld [smem:[#allocation0]]
  $region61: #{film_forward.6} parent=0
    _
  %s10 = ssub.s32 1, %s8
  %s11 = scalar_select 0, %s10, %s8
  loop: start=0, step=1, limit=4
  $region2: #{film_forward.6} parent=0 // loop_pre_header
    _
  $region3: #{film_forward.6} parent=0 // loop_header
    %s13 = sphi 0, %s17
    %p14 = scmp.ge.s32.totalorder %s13, 4
    %s20 = sphi 0, %s32
    %s21 = sphi 0, %s28
    %s22 = sphi 0, %s20
    %s23 = sphi 0, %s21
    %s24 = sphi 0, %s22
    %s25 = sphi 0, %s23
    %s35 = sphi 0, %s37
    %s38 = sphi 0, %s35
    %s39 = sphi 0, %s38
    %s55 = sphi 0, %s39
    %s59 = sphi 0, %s59
    %s61 = sphi 0, %s59
    %s62 = sphi 0, %s61
    %s76 = sphi 0, %s62
    %s80 = sphi 0, %s80
    %s82 = sphi 0, %s80
    %s83 = sphi 0, %s82
    %s97 = sphi 0, %s83
    %s103 = sphi 0, %s105
    %s106 = sphi 0, %s103
    %s107 = sphi 0, %s106
    %s123 = sphi 0, %s107
    %s129 = sphi 0, %s131
    %s132 = sphi 0, %s129
    %s133 = sphi 0, %s132
    %s149 = sphi 0, %s133
    %s157 = sphi 0, %s159
    %s160 = sphi 0, %s157
    %s161 = sphi 0, %s160
    %s177 = sphi 0, %s161
    %s185 = sphi 0, %s187
    %s188 = sphi 0, %s185
    %s189 = sphi 0, %s188
    %s205 = sphi 0, %s189
  $region4: #{film_forward.6} parent=0 // loop_header_branch
    %16 = sbr.rel (%p14) target = $region8
  $region5: #{film_forward.6} parent=0 // loop_body
    %s18 = ssub.s32 %s13, 1
    %s19 = ssub.s32 %s13, 2
    %s26 = sadd.s32 1, %s21
    %p27 = scmp.ge.s32.totalorder %s26, 1
    %s28 = scalar_select %p27, 0, %s26
    %s29 = sadd.s32 1, %s20
    %s30 = scalar_select %p27, %s29, %s20
    %p31 = scmp.ge.s32.totalorder %s30, 2
    %s32 = scalar_select %p31, 0, %s30
    %s33 = ssub.s32 %s20, %s32
    %p34 = scmp.eq.s32.totalorder %s33, 0
    %s36 = sadd.s32 %s35, 1
    %s37 = scalar_select %p34, %s35, %s36
    %p40 = pneg %p34
    %p41 = scmp.eq.s32.totalorder %s13, 1
    %p42 = por %p40, %p41
    %p43 = scmp.ne.s32.totalorder %s35, %s38
    %p44 = scmp.eq.s32.totalorder %s13, 0
    %p45 = por %p43, %p44
    %p46 = scmp.ne.s32.totalorder %s35, %s38
    %p47 = scmp.eq.s32.totalorder %s18, 1
    %p48 = por %p46, %p47
    %p49 = scmp.ne.s32.totalorder %s38, %s39
    %p50 = scmp.eq.s32.totalorder %s18, 0
    %p51 = por %p49, %p50
    %p52 = scmp.ne.s32.totalorder %s38, %s39
    %p53 = scmp.eq.s32.totalorder %s19, 1
    %p54 = por %p52, %p53
    %p56 = scmp.ne.s32.totalorder %s39, %s55
    %p57 = scmp.eq.s32.totalorder %s19, 0
    %p58 = por %p56, %p57
    %s60 = sadd.s32 %s59, 1
    %p63 = scmp.eq.s32.totalorder %s13, 1
    %p64 = scmp.ne.s32.totalorder %s59, %s61
    %p65 = scmp.eq.s32.totalorder %s13, 0
    %p66 = por %p64, %p65
    %p67 = scmp.ne.s32.totalorder %s59, %s61
    %p68 = scmp.eq.s32.totalorder %s18, 1
    %p69 = por %p67, %p68
    %p70 = scmp.ne.s32.totalorder %s61, %s62
    %p71 = scmp.eq.s32.totalorder %s18, 0
    %p72 = por %p70, %p71
    %p73 = scmp.ne.s32.totalorder %s61, %s62
    %p74 = scmp.eq.s32.totalorder %s19, 1
    %p75 = por %p73, %p74
    %p77 = scmp.ne.s32.totalorder %s62, %s76
    %p78 = scmp.eq.s32.totalorder %s19, 0
    %p79 = por %p77, %p78
    %s81 = sadd.s32 %s80, 1
    %p84 = scmp.eq.s32.totalorder %s13, 1
    %p85 = scmp.ne.s32.totalorder %s80, %s82
    %p86 = scmp.eq.s32.totalorder %s13, 0
    %p87 = por %p85, %p86
    %p88 = scmp.ne.s32.totalorder %s80, %s82
    %p89 = scmp.eq.s32.totalorder %s18, 1
    %p90 = por %p88, %p89
    %p91 = scmp.ne.s32.totalorder %s82, %s83
    %p92 = scmp.eq.s32.totalorder %s18, 0
    %p93 = por %p91, %p92
    %p94 = scmp.ne.s32.totalorder %s82, %s83
    %p95 = scmp.eq.s32.totalorder %s19, 1
    %p96 = por %p94, %p95
    %p98 = scmp.ne.s32.totalorder %s83, %s97
    %p99 = scmp.eq.s32.totalorder %s19, 0
    %p100 = por %p98, %p99
    %s101 = ssub.s32 %s20, %s32
    %p102 = scmp.eq.s32.totalorder %s101, 0
    %s104 = sadd.s32 %s103, 1
    %s105 = scalar_select %p102, %s103, %s104
    %p108 = pneg %p102
    %p109 = scmp.eq.s32.totalorder %s13, 1
    %p110 = por %p108, %p109
    %p111 = scmp.ne.s32.totalorder %s103, %s106
    %p112 = scmp.eq.s32.totalorder %s13, 0
    %p113 = por %p111, %p112
    %p114 = scmp.ne.s32.totalorder %s103, %s106
    %p115 = scmp.eq.s32.totalorder %s18, 1
    %p116 = por %p114, %p115
    %p117 = scmp.ne.s32.totalorder %s106, %s107
    %p118 = scmp.eq.s32.totalorder %s18, 0
    %p119 = por %p117, %p118
    %p120 = scmp.ne.s32.totalorder %s106, %s107
    %p121 = scmp.eq.s32.totalorder %s19, 1
    %p122 = por %p120, %p121
    %p124 = scmp.ne.s32.totalorder %s107, %s123
    %p125 = scmp.eq.s32.totalorder %s19, 0
    %p126 = por %p124, %p125
    %s127 = ssub.s32 %s20, %s32
    %p128 = scmp.eq.s32.totalorder %s127, 0
    %s130 = sadd.s32 %s129, 1
    %s131 = scalar_select %p128, %s129, %s130
    %p134 = pneg %p128
    %p135 = scmp.eq.s32.totalorder %s13, 1
    %p136 = por %p134, %p135
    %p137 = scmp.ne.s32.totalorder %s129, %s132
    %p138 = scmp.eq.s32.totalorder %s13, 0
    %p139 = por %p137, %p138
    %p140 = scmp.ne.s32.totalorder %s129, %s132
    %p141 = scmp.eq.s32.totalorder %s18, 1
    %p142 = por %p140, %p141
    %p143 = scmp.ne.s32.totalorder %s132, %s133
    %p144 = scmp.eq.s32.totalorder %s18, 0
    %p145 = por %p143, %p144
    %p146 = scmp.ne.s32.totalorder %s132, %s133
    %p147 = scmp.eq.s32.totalorder %s19, 1
    %p148 = por %p146, %p147
    %p150 = scmp.ne.s32.totalorder %s133, %s149
    %p151 = scmp.eq.s32.totalorder %s19, 0
    %p152 = por %p150, %p151
    %s153 = ssub.s32 %s20, %s32
    %s154 = ssub.s32 %s21, %s28
    %s155 = sor.u32 %s153, %s154
    %p156 = scmp.eq.s32.totalorder %s155, 0
    %s158 = sadd.s32 %s157, 1
    %s159 = scalar_select %p156, %s157, %s158
    %p162 = pneg %p156
    %p163 = scmp.eq.s32.totalorder %s13, 1
    %p164 = por %p162, %p163
    %p165 = scmp.ne.s32.totalorder %s157, %s160
    %p166 = scmp.eq.s32.totalorder %s13, 0
    %p167 = por %p165, %p166
    %p168 = scmp.ne.s32.totalorder %s157, %s160
    %p169 = scmp.eq.s32.totalorder %s18, 1
    %p170 = por %p168, %p169
    %p171 = scmp.ne.s32.totalorder %s160, %s161
    %p172 = scmp.eq.s32.totalorder %s18, 0
    %p173 = por %p171, %p172
    %p174 = scmp.ne.s32.totalorder %s160, %s161
    %p175 = scmp.eq.s32.totalorder %s19, 1
    %p176 = por %p174, %p175
    %p178 = scmp.ne.s32.totalorder %s161, %s177
    %p179 = scmp.eq.s32.totalorder %s19, 0
    %p180 = por %p178, %p179
    %s181 = ssub.s32 %s20, %s32
    %s182 = ssub.s32 %s21, %s28
    %s183 = sor.u32 %s181, %s182
    %p184 = scmp.eq.s32.totalorder %s183, 0
    %s186 = sadd.s32 %s185, 1
    %s187 = scalar_select %p184, %s185, %s186
    %p190 = pneg %p184
    %p191 = scmp.eq.s32.totalorder %s13, 1
    %p192 = por %p190, %p191
    %p193 = scmp.ne.s32.totalorder %s185, %s188
    %p194 = scmp.eq.s32.totalorder %s13, 0
    %p195 = por %p193, %p194
    %p196 = scmp.ne.s32.totalorder %s185, %s188
    %p197 = scmp.eq.s32.totalorder %s18, 1
    %p198 = por %p196, %p197
    %p199 = scmp.ne.s32.totalorder %s188, %s189
    %p200 = scmp.eq.s32.totalorder %s18, 0
    %p201 = por %p199, %p200
    %p202 = scmp.ne.s32.totalorder %s188, %s189
    %p203 = scmp.eq.s32.totalorder %s19, 1
    %p204 = por %p202, %p203
    %p206 = scmp.ne.s32.totalorder %s189, %s205
    %p207 = scmp.eq.s32.totalorder %s19, 0
    %p208 = por %p206, %p207
    %p209 = scmp.le.s32.totalorder 1, %s13
    %p210 = scmp.lt.s32.totalorder %s13, 3
    %p211 = pnand %p209, %p210
    %p212 = pneg %p211
    // Predicated region
    $region9: #{film_forward.6} parent=5 // pred_check
      _
    $region10: #{film_forward.6} parent=5 // pred_check_branch
      %214 = sbr.rel (%p211) target = $region12
    $region11: #{film_forward.6} parent=5 // pred_region
      %s215 = ssub.s32 %s13, 1
      // Predicated region
      $region13: #{film_forward.6} parent=11 // pred_check
        %p216 = pneg %p72
      $region14: #{film_forward.6} parent=11 // pred_check_branch
        %218 = sbr.rel (%p216) target = $region16
      $region15: #{film_forward.6} parent=11 // pred_region
        _
      $region16: #{film_forward.6} parent=11 // pred_fallthru
        _
      // Predicated region
      $region17: #{film_forward.6} parent=11 // pred_check
        %p219 = pneg %p93
      $region18: #{film_forward.6} parent=11 // pred_check_branch
        %221 = sbr.rel (%p219) target = $region20
      $region19: #{film_forward.6} parent=11 // pred_region
        _
      $region20: #{film_forward.6} parent=11 // pred_fallthru
        _
    $region12: #{film_forward.6} parent=5 // pred_fallthru
      _
    %p222 = scmp.lt.s32.totalorder %s13, 2
    // Predicated region
    $region21: #{film_forward.6} parent=5 // pred_check
      %p223 = pneg %p222
    $region22: #{film_forward.6} parent=5 // pred_check_branch
      %225 = sbr.rel (%p223) target = $region24
    $region23: #{film_forward.6} parent=5 // pred_region
      // Predicated region
      $region25: #{film_forward.6} parent=23 // pred_check
        %p226 = pneg %p45
      $region26: #{film_forward.6} parent=23 // pred_check_branch
        %228 = sbr.rel (%p226) target = $region28
      $region27: #{film_forward.6} parent=23 // pred_region
        %p229 = scmp.lt.s32.totalorder %s20, 1
        %s230 = scalar_select %p229, %s20, 1
        %s231 = smul.addr %s230, 54
        %s232 = smul.addr %s231, 4
        %s233 = scalar_lea.vmem %s0, %s232
      $region28: #{film_forward.6} parent=23 // pred_fallthru
        _
      // Predicated region
      $region29: #{film_forward.6} parent=23 // pred_check
        %p234 = pneg %p113
      $region30: #{film_forward.6} parent=23 // pred_check_branch
        %236 = sbr.rel (%p234) target = $region32
      $region31: #{film_forward.6} parent=23 // pred_region
        %p237 = scmp.lt.s32.totalorder %s20, 1
        %s238 = scalar_select %p237, %s20, 1
        %s239 = scalar_lea.vmem %s3, %s238
      $region32: #{film_forward.6} parent=23 // pred_fallthru
        _
      // Predicated region
      $region33: #{film_forward.6} parent=23 // pred_check
        %p240 = pneg %p139
      $region34: #{film_forward.6} parent=23 // pred_check_branch
        %242 = sbr.rel (%p240) target = $region36
      $region35: #{film_forward.6} parent=23 // pred_region
        %p243 = scmp.lt.s32.totalorder %s20, 1
        %s244 = scalar_select %p243, %s20, 1
        %s245 = scalar_lea.vmem %s4, %s244
      $region36: #{film_forward.6} parent=23 // pred_fallthru
        _
    $region24: #{film_forward.6} parent=5 // pred_fallthru
      _
    %p246 = scmp.le.s32.totalorder 1, %s13
    %p247 = scmp.lt.s32.totalorder %s13, 3
    %p248 = pnand %p246, %p247
    %p249 = pneg %p248
    // Predicated region
    $region37: #{film_forward.6} parent=5 // pred_check
      _
    $region38: #{film_forward.6} parent=5 // pred_check_branch
      %251 = sbr.rel (%p248) target = $region40
    $region39: #{film_forward.6} parent=5 // pred_region
      %s252 = ssub.s32 %s13, 1
      %p253 = scmp.lt.s32.totalorder %s22, 1
      %s254 = scalar_select %p253, %s22, 1
      %s255 = smul.addr %s254, 54
      %s256 = smul.addr %s255, 4
      %s257 = scalar_lea.vmem %s0, %s256
      %p258 = pneg %p51
      %p259 = pneg %p48
      %p260 = pneg %p72
      %p261 = pneg %p69
      %p262 = pneg %p93
      %p263 = pneg %p90
      %p264 = scmp.lt.s32.totalorder %s22, 1
      %s265 = scalar_select %p264, %s22, 1
      %s266 = scalar_lea.vmem %s3, %s265
      %p267 = pneg %p119
      %p268 = pneg %p116
      %p269 = scmp.lt.s32.totalorder %s22, 1
      %s270 = scalar_select %p269, %s22, 1
      %s271 = scalar_lea.vmem %s4, %s270
      %p272 = pneg %p145
      %p273 = pneg %p142
      %p274 = pneg %p173
      %p275 = pneg %p170
      %s276 = smul.u32 32, %s23
      %p277 = scmp.lt.s32.totalorder %s22, 1
      %s278 = scalar_select %p277, %s22, 1
      %p279 = scmp.lt.s32.totalorder %s276, 31
      %s280 = scalar_select %p279, %s276, 31
      %s281 = smul.addr %s278, 32
      %s282 = sadd.s32 %s280, %s281
      %s283 = smul.addr %s282, 8
      %s284 = scalar_lea.vmem %s5, %s283
      %p285 = pneg %p201
      %p286 = pneg %p198
      %p287 = scmp.lt.s32.totalorder %s22, 1
      %s288 = scalar_select %p287, %s22, 1
      %p289 = scmp.lt.s32.totalorder %s23, 0
      %s290 = scalar_select %p289, %s23, 0
      %s291 = sadd.s32 %s290, %s288
      %s292 = smul.addr %s291, 2
      %s293 = scalar_lea.vmem %s6, %s292
      %p294 = scmp.lt.s32.totalorder %s22, 1
      %s295 = scalar_select %p294, %s22, 1
      %s296 = smul.addr %s295, 54
      %s297 = smul.addr %s296, 4
      %s298 = scalar_lea.vmem %s0, %s297
      %p299 = scmp.lt.s32.totalorder %s22, 1
      %s300 = scalar_select %p299, %s22, 1
      %s301 = scalar_lea.vmem %s3, %s300
      %p302 = scmp.lt.s32.totalorder %s22, 1
      %s303 = scalar_select %p302, %s22, 1
      %s304 = scalar_lea.vmem %s4, %s303
      %s305 = smul.u32 32, %s23
      %p306 = scmp.lt.s32.totalorder %s22, 1
      %s307 = scalar_select %p306, %s22, 1
      %p308 = scmp.lt.s32.totalorder %s305, 31
      %s309 = scalar_select %p308, %s305, 31
      %s310 = smul.addr %s307, 32
      %s311 = sadd.s32 %s309, %s310
      %s312 = smul.addr %s311, 8
      %s313 = scalar_lea.vmem %s5, %s312
      %s314 = smul.u32 32, %s23
      %p315 = scmp.lt.s32.totalorder %s22, 1
      %s316 = scalar_select %p315, %s22, 1
      %p317 = scmp.lt.s32.totalorder %s23, 0
      %s318 = scalar_select %p317, %s23, 0
      %s319 = sadd.s32 %s318, %s316
      %s320 = smul.addr %s319, 2
      %s321 = scalar_lea.vmem %s6, %s320
      %s323 = smul.u32 %s23, 16
      %s324 = smul.u32 %s323, 3
      %s325 = smul.addr %s324, 4
      %s326 = scalar_lea.vmem %s298, %s325
      %v327 = vld [vmem:[%s326] sm:$0xf]
      %v328 = vld [vmem:[%s326 + $0x4] sm:$0xf]
      %v329 = vld [vmem:[%s326 + $0x8] sm:$0x1]
      %v330 = vld [vmem:[%s326 + $0xc] sm:$0xf]
      %v331 = vld [vmem:[%s326 + $0x10] sm:$0xf]
      %v332 = vld [vmem:[%s326 + $0x14] sm:$0x1]
      %v333 = vld [vmem:[%s326 + $0x18] sm:$0xf]
      %v334 = vld [vmem:[%s326 + $0x1c] sm:$0xf]
      %v335 = vld [vmem:[%s326 + $0x20] sm:$0x1]
      %v336 = vld [vmem:[%s326 + $0x24] sm:$0xf]
      %v337 = vld [vmem:[%s326 + $0x28] sm:$0xf]
      %v338 = vld [vmem:[%s326 + $0x2c] sm:$0x1]
      %v339 = vld [vmem:[%s326 + $0x30] sm:$0xf]
      %v340 = vld [vmem:[%s326 + $0x34] sm:$0xf]
      %v341 = vld [vmem:[%s326 + $0x38] sm:$0x1]
      %v342 = vld [vmem:[%s326 + $0x3c] sm:$0xf]
      %v343 = vld [vmem:[%s326 + $0x40] sm:$0xf]
      %v344 = vld [vmem:[%s326 + $0x44] sm:$0x1]
      %v345 = vld [vmem:[%s326 + $0x48] sm:$0xf]
      %v346 = vld [vmem:[%s326 + $0x4c] sm:$0xf]
      %v347 = vld [vmem:[%s326 + $0x50] sm:$0x1]
      %v348 = vld [vmem:[%s326 + $0x54] sm:$0xf]
      %v349 = vld [vmem:[%s326 + $0x58] sm:$0xf]
      %v350 = vld [vmem:[%s326 + $0x5c] sm:$0x1]
      %v351 = vld [vmem:[%s326 + $0x60] sm:$0xf]
      %v352 = vld [vmem:[%s326 + $0x64] sm:$0xf]
      %v353 = vld [vmem:[%s326 + $0x68] sm:$0x1]
      %v354 = vld [vmem:[%s326 + $0x6c] sm:$0xf]
      %v355 = vld [vmem:[%s326 + $0x70] sm:$0xf]
      %v356 = vld [vmem:[%s326 + $0x74] sm:$0x1]
      %v357 = vld [vmem:[%s326 + $0x78] sm:$0xf]
      %v358 = vld [vmem:[%s326 + $0x7c] sm:$0xf]
      %v359 = vld [vmem:[%s326 + $0x80] sm:$0x1]
      %v360 = vld [vmem:[%s326 + $0x84] sm:$0xf]
      %v361 = vld [vmem:[%s326 + $0x88] sm:$0xf]
      %v362 = vld [vmem:[%s326 + $0x8c] sm:$0x1]
      %v363 = vld [vmem:[%s326 + $0x90] sm:$0xf]
      %v364 = vld [vmem:[%s326 + $0x94] sm:$0xf]
      %v365 = vld [vmem:[%s326 + $0x98] sm:$0x1]
      %v366 = vld [vmem:[%s326 + $0x9c] sm:$0xf]
      %v367 = vld [vmem:[%s326 + $0xa0] sm:$0xf]
      %v368 = vld [vmem:[%s326 + $0xa4] sm:$0x1]
      %v369 = vld [vmem:[%s326 + $0xa8] sm:$0xf]
      %v370 = vld [vmem:[%s326 + $0xac] sm:$0xf]
      %v371 = vld [vmem:[%s326 + $0xb0] sm:$0x1]
      %v372 = vld [vmem:[%s326 + $0xb4] sm:$0xf]
      %v373 = vld [vmem:[%s326 + $0xb8] sm:$0xf]
      %v374 = vld [vmem:[%s326 + $0xbc] sm:$0x1]
      %v375 = vld [vmem:[%s326 + $0xc0] sm:$0xf]
      %v376 = vld [vmem:[%s326 + $0xc4] sm:$0xf]
      %v377 = vld [vmem:[%s326 + $0xc8] sm:$0x1]
      %v378 = vld [vmem:[%s326 + $0xcc] sm:$0xf]
      %v379 = vld [vmem:[%s326 + $0xd0] sm:$0xf]
      %v380 = vld [vmem:[%s326 + $0xd4] sm:$0x1]
      %v413 = vunpack.c.l.b16 %v327
      %v414 = vunpack.c.l.b16 %v328
      %v415 = vunpack.c.l.b16 %v330
      %v416 = vunpack.c.l.b16 %v331
      %v417 = vunpack.c.l.b16 %v333
      %v418 = vunpack.c.l.b16 %v334
      %v419 = vunpack.c.l.b16 %v336
      %v420 = vunpack.c.l.b16 %v337
      %v421 = vunpack.c.l.b16 %v339
      %v422 = vunpack.c.l.b16 %v340
      %v423 = vunpack.c.l.b16 %v342
      %v424 = vunpack.c.l.b16 %v343
      %v425 = vunpack.c.l.b16 %v345
      %v426 = vunpack.c.l.b16 %v346
      %v427 = vunpack.c.l.b16 %v348
      %v428 = vunpack.c.l.b16 %v349
      %v429 = vunpack.c.l.b16 %v351
      %v430 = vunpack.c.l.b16 %v352
      %v431 = vunpack.c.l.b16 %v354
      %v432 = vunpack.c.l.b16 %v355
      %v433 = vunpack.c.l.b16 %v357
      %v434 = vunpack.c.l.b16 %v358
      %v435 = vunpack.c.l.b16 %v360
      %v436 = vunpack.c.l.b16 %v361
      %v437 = vunpack.c.l.b16 %v363
      %v438 = vunpack.c.l.b16 %v364
      %v439 = vunpack.c.l.b16 %v366
      %v440 = vunpack.c.l.b16 %v367
      %v441 = vunpack.c.l.b16 %v369
      %v442 = vunpack.c.l.b16 %v370
      %v443 = vunpack.c.l.b16 %v372
      %v444 = vunpack.c.l.b16 %v373
      %v445 = vpack.c.b16 %v414, %v413
      %v446 = vpack.c.b16 %v416, %v415
      %v447 = vpack.c.b16 %v418, %v417
      %v448 = vpack.c.b16 %v420, %v419
      %v449 = vpack.c.b16 %v422, %v421
      %v450 = vpack.c.b16 %v424, %v423
      %v451 = vpack.c.b16 %v426, %v425
      %v452 = vpack.c.b16 %v428, %v427
      %v453 = vpack.c.b16 %v430, %v429
      %v454 = vpack.c.b16 %v432, %v431
      %v455 = vpack.c.b16 %v434, %v433
      %v456 = vpack.c.b16 %v436, %v435
      %v457 = vpack.c.b16 %v438, %v437
      %v458 = vpack.c.b16 %v440, %v439
      %v459 = vpack.c.b16 %v442, %v441
      %v460 = vpack.c.b16 %v444, %v443
      %v477 = vunpack.c.l.b16 %v329
      %v478 = vunpack.c.l.b16 %v332
      %v479 = vunpack.c.l.b16 %v335
      %v480 = vunpack.c.l.b16 %v338
      %v481 = vunpack.c.l.b16 %v341
      %v482 = vunpack.c.l.b16 %v344
      %v483 = vunpack.c.l.b16 %v347
      %v484 = vunpack.c.l.b16 %v350
      %v485 = vunpack.c.l.b16 %v353
      %v486 = vunpack.c.l.b16 %v356
      %v487 = vunpack.c.l.b16 %v359
      %v488 = vunpack.c.l.b16 %v362
      %v489 = vunpack.c.l.b16 %v365
      %v490 = vunpack.c.l.b16 %v368
      %v491 = vunpack.c.l.b16 %v371
      %v492 = vunpack.c.l.b16 %v374
      %v493 = vpack.c.b16 %v477, %v477
      %v494 = vpack.c.b16 %v478, %v478
      %v495 = vpack.c.b16 %v479, %v479
      %v496 = vpack.c.b16 %v480, %v480
      %v497 = vpack.c.b16 %v481, %v481
      %v498 = vpack.c.b16 %v482, %v482
      %v499 = vpack.c.b16 %v483, %v483
      %v500 = vpack.c.b16 %v484, %v484
      %v501 = vpack.c.b16 %v485, %v485
      %v502 = vpack.c.b16 %v486, %v486
      %v503 = vpack.c.b16 %v487, %v487
      %v504 = vpack.c.b16 %v488, %v488
      %v505 = vpack.c.b16 %v489, %v489
      %v506 = vpack.c.b16 %v490, %v490
      %v507 = vpack.c.b16 %v491, %v491
      %v508 = vpack.c.b16 %v492, %v492
      %vm509 = vsmask.f32 7424
      %v511 = vshrl.u32 %v445, 16
      %v513 = vshll.u32 %v445, 16
      %v515 = vrot.slane %v513, 1
      %v516 = vor.u32 %v511, %v515
      %v518 = vshll.u32 %v493, 16
      %v520 = vrot.slane %v518, 1
      %v521 = vsel %vm509, %v516, %v520
      %v523 = vshrl.u32 %v446, 16
      %v525 = vshll.u32 %v446, 16
      %v527 = vrot.slane %v525, 1
      %v528 = vor.u32 %v523, %v527
      %v530 = vshll.u32 %v494, 16
      %v532 = vrot.slane %v530, 1
      %v533 = vsel %vm509, %v528, %v532
      %v535 = vshrl.u32 %v447, 16
      %v537 = vshll.u32 %v447, 16
      %v539 = vrot.slane %v537, 1
      %v540 = vor.u32 %v535, %v539
      %v542 = vshll.u32 %v495, 16
      %v544 = vrot.slane %v542, 1
      %v545 = vsel %vm509, %v540, %v544
      %v547 = vshrl.u32 %v448, 16
      %v549 = vshll.u32 %v448, 16
      %v551 = vrot.slane %v549, 1
      %v552 = vor.u32 %v547, %v551
      %v554 = vshll.u32 %v496, 16
      %v556 = vrot.slane %v554, 1
      %v557 = vsel %vm509, %v552, %v556
      %v559 = vshrl.u32 %v449, 16
      %v561 = vshll.u32 %v449, 16
      %v563 = vrot.slane %v561, 1
      %v564 = vor.u32 %v559, %v563
      %v566 = vshll.u32 %v497, 16
      %v568 = vrot.slane %v566, 1
      %v569 = vsel %vm509, %v564, %v568
      %v571 = vshrl.u32 %v450, 16
      %v573 = vshll.u32 %v450, 16
      %v575 = vrot.slane %v573, 1
      %v576 = vor.u32 %v571, %v575
      %v578 = vshll.u32 %v498, 16
      %v580 = vrot.slane %v578, 1
      %v581 = vsel %vm509, %v576, %v580
      %v583 = vshrl.u32 %v451, 16
      %v585 = vshll.u32 %v451, 16
      %v587 = vrot.slane %v585, 1
      %v588 = vor.u32 %v583, %v587
      %v590 = vshll.u32 %v499, 16
      %v592 = vrot.slane %v590, 1
      %v593 = vsel %vm509, %v588, %v592
      %v595 = vshrl.u32 %v452, 16
      %v597 = vshll.u32 %v452, 16
      %v599 = vrot.slane %v597, 1
      %v600 = vor.u32 %v595, %v599
      %v602 = vshll.u32 %v500, 16
      %v604 = vrot.slane %v602, 1
      %v605 = vsel %vm509, %v600, %v604
      %v607 = vshrl.u32 %v453, 16
      %v609 = vshll.u32 %v453, 16
      %v611 = vrot.slane %v609, 1
      %v612 = vor.u32 %v607, %v611
      %v614 = vshll.u32 %v501, 16
      %v616 = vrot.slane %v614, 1
      %v617 = vsel %vm509, %v612, %v616
      %v619 = vshrl.u32 %v454, 16
      %v621 = vshll.u32 %v454, 16
      %v623 = vrot.slane %v621, 1
      %v624 = vor.u32 %v619, %v623
      %v626 = vshll.u32 %v502, 16
      %v628 = vrot.slane %v626, 1
      %v629 = vsel %vm509, %v624, %v628
      %v631 = vshrl.u32 %v455, 16
      %v633 = vshll.u32 %v455, 16
      %v635 = vrot.slane %v633, 1
      %v636 = vor.u32 %v631, %v635
      %v638 = vshll.u32 %v503, 16
      %v640 = vrot.slane %v638, 1
      %v641 = vsel %vm509, %v636, %v640
      %v643 = vshrl.u32 %v456, 16
      %v645 = vshll.u32 %v456, 16
      %v647 = vrot.slane %v645, 1
      %v648 = vor.u32 %v643, %v647
      %v650 = vshll.u32 %v504, 16
      %v652 = vrot.slane %v650, 1
      %v653 = vsel %vm509, %v648, %v652
      %v655 = vshrl.u32 %v457, 16
      %v657 = vshll.u32 %v457, 16
      %v659 = vrot.slane %v657, 1
      %v660 = vor.u32 %v655, %v659
      %v662 = vshll.u32 %v505, 16
      %v664 = vrot.slane %v662, 1
      %v665 = vsel %vm509, %v660, %v664
      %v667 = vshrl.u32 %v458, 16
      %v669 = vshll.u32 %v458, 16
      %v671 = vrot.slane %v669, 1
      %v672 = vor.u32 %v667, %v671
      %v674 = vshll.u32 %v506, 16
      %v676 = vrot.slane %v674, 1
      %v677 = vsel %vm509, %v672, %v676
      %v679 = vshrl.u32 %v459, 16
      %v681 = vshll.u32 %v459, 16
      %v683 = vrot.slane %v681, 1
      %v684 = vor.u32 %v679, %v683
      %v686 = vshll.u32 %v507, 16
      %v688 = vrot.slane %v686, 1
      %v689 = vsel %vm509, %v684, %v688
      %v691 = vshrl.u32 %v460, 16
      %v693 = vshll.u32 %v460, 16
      %v695 = vrot.slane %v693, 1
      %v696 = vor.u32 %v691, %v695
      %v698 = vshll.u32 %v508, 16
      %v700 = vrot.slane %v698, 1
      %v701 = vsel %vm509, %v696, %v700
      %702 = vrot.lane.b32.xlu0 %v521, 8
      %v703 = vpop.permute.xlu0 %702
      %704 = vrot.lane.b32.xlu0 %v533, 8
      %v705 = vpop.permute.xlu0 %704
      %706 = vrot.lane.b32.xlu0 %v545, 8
      %v707 = vpop.permute.xlu0 %706
      %708 = vrot.lane.b32.xlu0 %v557, 8
      %v709 = vpop.permute.xlu0 %708
      %710 = vrot.lane.b32.xlu0 %v569, 8
      %v711 = vpop.permute.xlu0 %710
      %712 = vrot.lane.b32.xlu0 %v581, 8
      %v713 = vpop.permute.xlu0 %712
      %714 = vrot.lane.b32.xlu0 %v593, 8
      %v715 = vpop.permute.xlu0 %714
      %716 = vrot.lane.b32.xlu0 %v605, 8
      %v717 = vpop.permute.xlu0 %716
      %718 = vrot.lane.b32.xlu0 %v617, 8
      %v719 = vpop.permute.xlu0 %718
      %720 = vrot.lane.b32.xlu0 %v629, 8
      %v721 = vpop.permute.xlu0 %720
      %722 = vrot.lane.b32.xlu0 %v641, 8
      %v723 = vpop.permute.xlu0 %722
      %724 = vrot.lane.b32.xlu0 %v653, 8
      %v725 = vpop.permute.xlu0 %724
      %726 = vrot.lane.b32.xlu0 %v665, 8
      %v727 = vpop.permute.xlu0 %726
      %728 = vrot.lane.b32.xlu0 %v677, 8
      %v729 = vpop.permute.xlu0 %728
      %730 = vrot.lane.b32.xlu0 %v689, 8
      %v731 = vpop.permute.xlu0 %730
      %732 = vrot.lane.b32.xlu0 %v701, 8
      %v733 = vpop.permute.xlu0 %732
      %vm734 = vcmask 1046528
      %v735 = vrot.slane %v445, 1
      %v736 = vrot.slane %v493, 1
      %v737 = vsel %vm734, %v735, %v736
      %v738 = vrot.slane %v446, 1
      %v739 = vrot.slane %v494, 1
      %v740 = vsel %vm734, %v738, %v739
      %v741 = vrot.slane %v447, 1
      %v742 = vrot.slane %v495, 1
      %v743 = vsel %vm734, %v741, %v742
      %v744 = vrot.slane %v448, 1
      %v745 = vrot.slane %v496, 1
      %v746 = vsel %vm734, %v744, %v745
      %v747 = vrot.slane %v449, 1
      %v748 = vrot.slane %v497, 1
      %v749 = vsel %vm734, %v747, %v748
      %v750 = vrot.slane %v450, 1
      %v751 = vrot.slane %v498, 1
      %v752 = vsel %vm734, %v750, %v751
      %v753 = vrot.slane %v451, 1
      %v754 = vrot.slane %v499, 1
      %v755 = vsel %vm734, %v753, %v754
      %v756 = vrot.slane %v452, 1
      %v757 = vrot.slane %v500, 1
      %v758 = vsel %vm734, %v756, %v757
      %v759 = vrot.slane %v453, 1
      %v760 = vrot.slane %v501, 1
      %v761 = vsel %vm734, %v759, %v760
      %v762 = vrot.slane %v454, 1
      %v763 = vrot.slane %v502, 1
      %v764 = vsel %vm734, %v762, %v763
      %v765 = vrot.slane %v455, 1
      %v766 = vrot.slane %v503, 1
      %v767 = vsel %vm734, %v765, %v766
      %v768 = vrot.slane %v456, 1
      %v769 = vrot.slane %v504, 1
      %v770 = vsel %vm734, %v768, %v769
      %v771 = vrot.slane %v457, 1
      %v772 = vrot.slane %v505, 1
      %v773 = vsel %vm734, %v771, %v772
      %v774 = vrot.slane %v458, 1
      %v775 = vrot.slane %v506, 1
      %v776 = vsel %vm734, %v774, %v775
      %v777 = vrot.slane %v459, 1
      %v778 = vrot.slane %v507, 1
      %v779 = vsel %vm734, %v777, %v778
      %v780 = vrot.slane %v460, 1
      %v781 = vrot.slane %v508, 1
      %v782 = vsel %vm734, %v780, %v781
      %783 = vrot.lane.b32.xlu0 %v737, 16
      %v784 = vpop.permute.xlu0 %783
      %785 = vrot.lane.b32.xlu0 %v740, 16
      %v786 = vpop.permute.xlu0 %785
      %787 = vrot.lane.b32.xlu0 %v743, 16
      %v788 = vpop.permute.xlu0 %787
      %789 = vrot.lane.b32.xlu0 %v746, 16
      %v790 = vpop.permute.xlu0 %789
      %791 = vrot.lane.b32.xlu0 %v749, 16
      %v792 = vpop.permute.xlu0 %791
      %793 = vrot.lane.b32.xlu0 %v752, 16
      %v794 = vpop.permute.xlu0 %793
      %795 = vrot.lane.b32.xlu0 %v755, 16
      %v796 = vpop.permute.xlu0 %795
      %797 = vrot.lane.b32.xlu0 %v758, 16
      %v798 = vpop.permute.xlu0 %797
      %799 = vrot.lane.b32.xlu0 %v761, 16
      %v800 = vpop.permute.xlu0 %799
      %801 = vrot.lane.b32.xlu0 %v764, 16
      %v802 = vpop.permute.xlu0 %801
      %803 = vrot.lane.b32.xlu0 %v767, 16
      %v804 = vpop.permute.xlu0 %803
      %805 = vrot.lane.b32.xlu0 %v770, 16
      %v806 = vpop.permute.xlu0 %805
      %807 = vrot.lane.b32.xlu0 %v773, 16
      %v808 = vpop.permute.xlu0 %807
      %809 = vrot.lane.b32.xlu0 %v776, 16
      %v810 = vpop.permute.xlu0 %809
      %811 = vrot.lane.b32.xlu0 %v779, 16
      %v812 = vpop.permute.xlu0 %811
      %813 = vrot.lane.b32.xlu0 %v782, 16
      %v814 = vpop.permute.xlu0 %813
      %v817 = vunpack.c.l.b16 %v375
      %v818 = vunpack.c.l.b16 %v376
      %v819 = vpack.c.b16 %v818, %v817
      %820 = vrot.lane.b32.xlu0 %v446, 24
      %v821 = vpop.permute.xlu0 %820
      %822 = vrot.lane.b32.xlu0 %v447, 24
      %v823 = vpop.permute.xlu0 %822
      %824 = vrot.lane.b32.xlu0 %v448, 24
      %v825 = vpop.permute.xlu0 %824
      %826 = vrot.lane.b32.xlu0 %v449, 24
      %v827 = vpop.permute.xlu0 %826
      %828 = vrot.lane.b32.xlu0 %v450, 24
      %v829 = vpop.permute.xlu0 %828
      %830 = vrot.lane.b32.xlu0 %v451, 24
      %v831 = vpop.permute.xlu0 %830
      %832 = vrot.lane.b32.xlu0 %v452, 24
      %v833 = vpop.permute.xlu0 %832
      %834 = vrot.lane.b32.xlu0 %v453, 24
      %v835 = vpop.permute.xlu0 %834
      %836 = vrot.lane.b32.xlu0 %v454, 24
      %v837 = vpop.permute.xlu0 %836
      %838 = vrot.lane.b32.xlu0 %v455, 24
      %v839 = vpop.permute.xlu0 %838
      %840 = vrot.lane.b32.xlu0 %v456, 24
      %v841 = vpop.permute.xlu0 %840
      %842 = vrot.lane.b32.xlu0 %v457, 24
      %v843 = vpop.permute.xlu0 %842
      %844 = vrot.lane.b32.xlu0 %v458, 24
      %v845 = vpop.permute.xlu0 %844
      %846 = vrot.lane.b32.xlu0 %v459, 24
      %v847 = vpop.permute.xlu0 %846
      %848 = vrot.lane.b32.xlu0 %v460, 24
      %v849 = vpop.permute.xlu0 %848
      %850 = vrot.lane.b32.xlu0 %v819, 24
      %v851 = vpop.permute.xlu0 %850
      %v853 = vunpack.c.l.b16 %v377
      %v854 = vpack.c.b16 %v853, %v853
      %v856 = vshrl.u32 %v819, 16
      %v858 = vshll.u32 %v819, 16
      %v860 = vrot.slane %v858, 1
      %v861 = vor.u32 %v856, %v860
      %v863 = vshll.u32 %v854, 16
      %v865 = vrot.slane %v863, 1
      %v866 = vsel %vm509, %v861, %v865
      %867 = vrot.lane.b32.xlu0 %v533, 32
      %v868 = vpop.permute.xlu0 %867
      %869 = vrot.lane.b32.xlu0 %v545, 32
      %v870 = vpop.permute.xlu0 %869
      %871 = vrot.lane.b32.xlu0 %v557, 32
      %v872 = vpop.permute.xlu0 %871
      %873 = vrot.lane.b32.xlu0 %v569, 32
      %v874 = vpop.permute.xlu0 %873
      %875 = vrot.lane.b32.xlu0 %v581, 32
      %v876 = vpop.permute.xlu0 %875
      %877 = vrot.lane.b32.xlu0 %v593, 32
      %v878 = vpop.permute.xlu0 %877
      %879 = vrot.lane.b32.xlu0 %v605, 32
      %v880 = vpop.permute.xlu0 %879
      %881 = vrot.lane.b32.xlu0 %v617, 32
      %v882 = vpop.permute.xlu0 %881
      %883 = vrot.lane.b32.xlu0 %v629, 32
      %v884 = vpop.permute.xlu0 %883
      %885 = vrot.lane.b32.xlu0 %v641, 32
      %v886 = vpop.permute.xlu0 %885
      %887 = vrot.lane.b32.xlu0 %v653, 32
      %v888 = vpop.permute.xlu0 %887
      %889 = vrot.lane.b32.xlu0 %v665, 32
      %v890 = vpop.permute.xlu0 %889
      %891 = vrot.lane.b32.xlu0 %v677, 32
      %v892 = vpop.permute.xlu0 %891
      %893 = vrot.lane.b32.xlu0 %v689, 32
      %v894 = vpop.permute.xlu0 %893
      %895 = vrot.lane.b32.xlu0 %v701, 32
      %v896 = vpop.permute.xlu0 %895
      %897 = vrot.lane.b32.xlu0 %v866, 32
      %v898 = vpop.permute.xlu0 %897
      %v899 = vrot.slane %v819, 1
      %v900 = vrot.slane %v854, 1
      %v901 = vsel %vm734, %v899, %v900
      %902 = vrot.lane.b32.xlu0 %v740, 40
      %v903 = vpop.permute.xlu0 %902
      %904 = vrot.lane.b32.xlu0 %v743, 40
      %v905 = vpop.permute.xlu0 %904
      %906 = vrot.lane.b32.xlu0 %v746, 40
      %v907 = vpop.permute.xlu0 %906
      %908 = vrot.lane.b32.xlu0 %v749, 40
      %v909 = vpop.permute.xlu0 %908
      %910 = vrot.lane.b32.xlu0 %v752, 40
      %v911 = vpop.permute.xlu0 %910
      %912 = vrot.lane.b32.xlu0 %v755, 40
      %v913 = vpop.permute.xlu0 %912
      %914 = vrot.lane.b32.xlu0 %v758, 40
      %v915 = vpop.permute.xlu0 %914
      %916 = vrot.lane.b32.xlu0 %v761, 40
      %v917 = vpop.permute.xlu0 %916
      %918 = vrot.lane.b32.xlu0 %v764, 40
      %v919 = vpop.permute.xlu0 %918
      %920 = vrot.lane.b32.xlu0 %v767, 40
      %v921 = vpop.permute.xlu0 %920
      %922 = vrot.lane.b32.xlu0 %v770, 40
      %v923 = vpop.permute.xlu0 %922
      %924 = vrot.lane.b32.xlu0 %v773, 40
      %v925 = vpop.permute.xlu0 %924
      %926 = vrot.lane.b32.xlu0 %v776, 40
      %v927 = vpop.permute.xlu0 %926
      %928 = vrot.lane.b32.xlu0 %v779, 40
      %v929 = vpop.permute.xlu0 %928
      %930 = vrot.lane.b32.xlu0 %v782, 40
      %v931 = vpop.permute.xlu0 %930
      %932 = vrot.lane.b32.xlu0 %v901, 40
      %v933 = vpop.permute.xlu0 %932
      %v936 = vunpack.c.l.b16 %v378
      %v937 = vunpack.c.l.b16 %v379
      %v938 = vpack.c.b16 %v937, %v936
      %939 = vrot.lane.b32.xlu0 %v447, 48
      %v940 = vpop.permute.xlu0 %939
      %941 = vrot.lane.b32.xlu0 %v448, 48
      %v942 = vpop.permute.xlu0 %941
      %943 = vrot.lane.b32.xlu0 %v449, 48
      %v944 = vpop.permute.xlu0 %943
      %945 = vrot.lane.b32.xlu0 %v450, 48
      %v946 = vpop.permute.xlu0 %945
      %947 = vrot.lane.b32.xlu0 %v451, 48
      %v948 = vpop.permute.xlu0 %947
      %949 = vrot.lane.b32.xlu0 %v452, 48
      %v950 = vpop.permute.xlu0 %949
      %951 = vrot.lane.b32.xlu0 %v453, 48
      %v952 = vpop.permute.xlu0 %951
      %953 = vrot.lane.b32.xlu0 %v454, 48
      %v954 = vpop.permute.xlu0 %953
      %955 = vrot.lane.b32.xlu0 %v455, 48
      %v956 = vpop.permute.xlu0 %955
      %957 = vrot.lane.b32.xlu0 %v456, 48
      %v958 = vpop.permute.xlu0 %957
      %959 = vrot.lane.b32.xlu0 %v457, 48
      %v960 = vpop.permute.xlu0 %959
      %961 = vrot.lane.b32.xlu0 %v458, 48
      %v962 = vpop.permute.xlu0 %961
      %963 = vrot.lane.b32.xlu0 %v459, 48
      %v964 = vpop.permute.xlu0 %963
      %965 = vrot.lane.b32.xlu0 %v460, 48
      %v966 = vpop.permute.xlu0 %965
      %967 = vrot.lane.b32.xlu0 %v819, 48
      %v968 = vpop.permute.xlu0 %967
      %969 = vrot.lane.b32.xlu0 %v938, 48
      %v970 = vpop.permute.xlu0 %969
      %v972 = vunpack.c.l.b16 %v380
      %v973 = vpack.c.b16 %v972, %v972
      %v975 = vshrl.u32 %v938, 16
      %v977 = vshll.u32 %v938, 16
      %v979 = vrot.slane %v977, 1
      %v980 = vor.u32 %v975, %v979
      %v982 = vshll.u32 %v973, 16
      %v984 = vrot.slane %v982, 1
      %v985 = vsel %vm509, %v980, %v984
      %986 = vrot.lane.b32.xlu0 %v545, 56
      %v987 = vpop.permute.xlu0 %986
      %988 = vrot.lane.b32.xlu0 %v557, 56
      %v989 = vpop.permute.xlu0 %988
      %990 = vrot.lane.b32.xlu0 %v569, 56
      %v991 = vpop.permute.xlu0 %990
      %992 = vrot.lane.b32.xlu0 %v581, 56
      %v993 = vpop.permute.xlu0 %992
      %994 = vrot.lane.b32.xlu0 %v593, 56
      %v995 = vpop.permute.xlu0 %994
      %996 = vrot.lane.b32.xlu0 %v605, 56
      %v997 = vpop.permute.xlu0 %996
      %998 = vrot.lane.b32.xlu0 %v617, 56
      %v999 = vpop.permute.xlu0 %998
      %1000 = vrot.lane.b32.xlu0 %v629, 56
      %v1001 = vpop.permute.xlu0 %1000
      %1002 = vrot.lane.b32.xlu0 %v641, 56
      %v1003 = vpop.permute.xlu0 %1002
      %1004 = vrot.lane.b32.xlu0 %v653, 56
      %v1005 = vpop.permute.xlu0 %1004
      %1006 = vrot.lane.b32.xlu0 %v665, 56
      %v1007 = vpop.permute.xlu0 %1006
      %1008 = vrot.lane.b32.xlu0 %v677, 56
      %v1009 = vpop.permute.xlu0 %1008
      %1010 = vrot.lane.b32.xlu0 %v689, 56
      %v1011 = vpop.permute.xlu0 %1010
      %1012 = vrot.lane.b32.xlu0 %v701, 56
      %v1013 = vpop.permute.xlu0 %1012
      %1014 = vrot.lane.b32.xlu0 %v866, 56
      %v1015 = vpop.permute.xlu0 %1014
      %1016 = vrot.lane.b32.xlu0 %v985, 56
      %v1017 = vpop.permute.xlu0 %1016
      %v1018 = vrot.slane %v938, 1
      %v1019 = vrot.slane %v973, 1
      %v1020 = vsel %vm734, %v1018, %v1019
      %1021 = vrot.lane.b32.xlu0 %v743, 64
      %v1022 = vpop.permute.xlu0 %1021
      %1023 = vrot.lane.b32.xlu0 %v746, 64
      %v1024 = vpop.permute.xlu0 %1023
      %1025 = vrot.lane.b32.xlu0 %v749, 64
      %v1026 = vpop.permute.xlu0 %1025
      %1027 = vrot.lane.b32.xlu0 %v752, 64
      %v1028 = vpop.permute.xlu0 %1027
      %1029 = vrot.lane.b32.xlu0 %v755, 64
      %v1030 = vpop.permute.xlu0 %1029
      %1031 = vrot.lane.b32.xlu0 %v758, 64
      %v1032 = vpop.permute.xlu0 %1031
      %1033 = vrot.lane.b32.xlu0 %v761, 64
      %v1034 = vpop.permute.xlu0 %1033
      %1035 = vrot.lane.b32.xlu0 %v764, 64
      %v1036 = vpop.permute.xlu0 %1035
      %1037 = vrot.lane.b32.xlu0 %v767, 64
      %v1038 = vpop.permute.xlu0 %1037
      %1039 = vrot.lane.b32.xlu0 %v770, 64
      %v1040 = vpop.permute.xlu0 %1039
      %1041 = vrot.lane.b32.xlu0 %v773, 64
      %v1042 = vpop.permute.xlu0 %1041
      %1043 = vrot.lane.b32.xlu0 %v776, 64
      %v1044 = vpop.permute.xlu0 %1043
      %1045 = vrot.lane.b32.xlu0 %v779, 64
      %v1046 = vpop.permute.xlu0 %1045
      %1047 = vrot.lane.b32.xlu0 %v782, 64
      %v1048 = vpop.permute.xlu0 %1047
      %1049 = vrot.lane.b32.xlu0 %v901, 64
      %v1050 = vpop.permute.xlu0 %1049
      %1051 = vrot.lane.b32.xlu0 %v1020, 64
      %v1052 = vpop.permute.xlu0 %1051
      %vm1053 = vcmask 64512
      %v1055 = vsel %vm1053, %v445, %v703
      %v1057 = vsel %vm1053, %v446, %v705
      %v1059 = vsel %vm1053, %v447, %v707
      %v1061 = vsel %vm1053, %v448, %v709
      %v1063 = vsel %vm1053, %v449, %v711
      %v1065 = vsel %vm1053, %v450, %v713
      %v1067 = vsel %vm1053, %v451, %v715
      %v1069 = vsel %vm1053, %v452, %v717
      %v1071 = vsel %vm1053, %v453, %v719
      %v1073 = vsel %vm1053, %v454, %v721
      %v1075 = vsel %vm1053, %v455, %v723
      %v1077 = vsel %vm1053, %v456, %v725
      %v1079 = vsel %vm1053, %v457, %v727
      %v1081 = vsel %vm1053, %v458, %v729
      %v1083 = vsel %vm1053, %v459, %v731
      %v1085 = vsel %vm1053, %v460, %v733
      %vm1086 = vcmask 130048
      %v1088 = vsel %vm1086, %v1055, %v784
      %v1090 = vsel %vm1086, %v1057, %v786
      %v1092 = vsel %vm1086, %v1059, %v788
      %v1094 = vsel %vm1086, %v1061, %v790
      %v1096 = vsel %vm1086, %v1063, %v792
      %v1098 = vsel %vm1086, %v1065, %v794
      %v1100 = vsel %vm1086, %v1067, %v796
      %v1102 = vsel %vm1086, %v1069, %v798
      %v1104 = vsel %vm1086, %v1071, %v800
      %v1106 = vsel %vm1086, %v1073, %v802
      %v1108 = vsel %vm1086, %v1075, %v804
      %v1110 = vsel %vm1086, %v1077, %v806
      %v1112 = vsel %vm1086, %v1079, %v808
      %v1114 = vsel %vm1086, %v1081, %v810
      %v1116 = vsel %vm1086, %v1083, %v812
      %v1118 = vsel %vm1086, %v1085, %v814
      %vm1119 = vcmask 195584
      %v1121 = vsel %vm1119, %v1088, %v821
      %v1123 = vsel %vm1119, %v1090, %v823
      %v1125 = vsel %vm1119, %v1092, %v825
      %v1127 = vsel %vm1119, %v1094, %v827
      %v1129 = vsel %vm1119, %v1096, %v829
      %v1131 = vsel %vm1119, %v1098, %v831
      %v1133 = vsel %vm1119, %v1100, %v833
      %v1135 = vsel %vm1119, %v1102, %v835
      %v1137 = vsel %vm1119, %v1104, %v837
      %v1139 = vsel %vm1119, %v1106, %v839
      %v1141 = vsel %vm1119, %v1108, %v841
      %v1143 = vsel %vm1119, %v1110, %v843
      %v1145 = vsel %vm1119, %v1112, %v845
      %v1147 = vsel %vm1119, %v1114, %v847
      %v1149 = vsel %vm1119, %v1116, %v849
      %v1151 = vsel %vm1119, %v1118, %v851
      %vm1152 = vcmask 261120
      %v1154 = vsel %vm1152, %v1121, %v868
      %v1156 = vsel %vm1152, %v1123, %v870
      %v1158 = vsel %vm1152, %v1125, %v872
      %v1160 = vsel %vm1152, %v1127, %v874
      %v1162 = vsel %vm1152, %v1129, %v876
      %v1164 = vsel %vm1152, %v1131, %v878
      %v1166 = vsel %vm1152, %v1133, %v880
      %v1168 = vsel %vm1152, %v1135, %v882
      %v1170 = vsel %vm1152, %v1137, %v884
      %v1172 = vsel %vm1152, %v1139, %v886
      %v1174 = vsel %vm1152, %v1141, %v888
      %v1176 = vsel %vm1152, %v1143, %v890
      %v1178 = vsel %vm1152, %v1145, %v892
      %v1180 = vsel %vm1152, %v1147, %v894
      %v1182 = vsel %vm1152, %v1149, %v896
      %v1184 = vsel %vm1152, %v1151, %v898
      %vm1185 = vcmask 326656
      %v1187 = vsel %vm1185, %v1154, %v903
      %v1189 = vsel %vm1185, %v1156, %v905
      %v1191 = vsel %vm1185, %v1158, %v907
      %v1193 = vsel %vm1185, %v1160, %v909
      %v1195 = vsel %vm1185, %v1162, %v911
      %v1197 = vsel %vm1185, %v1164, %v913
      %v1199 = vsel %vm1185, %v1166, %v915
      %v1201 = vsel %vm1185, %v1168, %v917
      %v1203 = vsel %vm1185, %v1170, %v919
      %v1205 = vsel %vm1185, %v1172, %v921
      %v1207 = vsel %vm1185, %v1174, %v923
      %v1209 = vsel %vm1185, %v1176, %v925
      %v1211 = vsel %vm1185, %v1178, %v927
      %v1213 = vsel %vm1185, %v1180, %v929
      %v1215 = vsel %vm1185, %v1182, %v931
      %v1217 = vsel %vm1185, %v1184, %v933
      %vm1218 = vcmask 392192
      %v1220 = vsel %vm1218, %v1187, %v940
      %v1222 = vsel %vm1218, %v1189, %v942
      %v1224 = vsel %vm1218, %v1191, %v944
      %v1226 = vsel %vm1218, %v1193, %v946
      %v1228 = vsel %vm1218, %v1195, %v948
      %v1230 = vsel %vm1218, %v1197, %v950
      %v1232 = vsel %vm1218, %v1199, %v952
      %v1234 = vsel %vm1218, %v1201, %v954
      %v1236 = vsel %vm1218, %v1203, %v956
      %v1238 = vsel %vm1218, %v1205, %v958
      %v1240 = vsel %vm1218, %v1207, %v960
      %v1242 = vsel %vm1218, %v1209, %v962
      %v1244 = vsel %vm1218, %v1211, %v964
      %v1246 = vsel %vm1218, %v1213, %v966
      %v1248 = vsel %vm1218, %v1215, %v968
      %v1250 = vsel %vm1218, %v1217, %v970
      %vm1251 = vcmask 457728
      %v1253 = vsel %vm1251, %v1220, %v987
      %v1255 = vsel %vm1251, %v1222, %v989
      %v1257 = vsel %vm1251, %v1224, %v991
      %v1259 = vsel %vm1251, %v1226, %v993
      %v1261 = vsel %vm1251, %v1228, %v995
      %v1263 = vsel %vm1251, %v1230, %v997
      %v1265 = vsel %vm1251, %v1232, %v999
      %v1267 = vsel %vm1251, %v1234, %v1001
      %v1269 = vsel %vm1251, %v1236, %v1003
      %v1271 = vsel %vm1251, %v1238, %v1005
      %v1273 = vsel %vm1251, %v1240, %v1007
      %v1275 = vsel %vm1251, %v1242, %v1009
      %v1277 = vsel %vm1251, %v1244, %v1011
      %v1279 = vsel %vm1251, %v1246, %v1013
      %v1281 = vsel %vm1251, %v1248, %v1015
      %v1283 = vsel %vm1251, %v1250, %v1017
      %vm1284 = vcmask 523264
      %v1286 = vsel %vm1284, %v1253, %v1022
      %v1288 = vsel %vm1284, %v1255, %v1024
      %v1290 = vsel %vm1284, %v1257, %v1026
      %v1292 = vsel %vm1284, %v1259, %v1028
      %v1294 = vsel %vm1284, %v1261, %v1030
      %v1296 = vsel %vm1284, %v1263, %v1032
      %v1298 = vsel %vm1284, %v1265, %v1034
      %v1300 = vsel %vm1284, %v1267, %v1036
      %v1302 = vsel %vm1284, %v1269, %v1038
      %v1304 = vsel %vm1284, %v1271, %v1040
      %v1306 = vsel %vm1284, %v1273, %v1042
      %v1308 = vsel %vm1284, %v1275, %v1044
      %v1310 = vsel %vm1284, %v1277, %v1046
      %v1312 = vsel %vm1284, %v1279, %v1048
      %v1314 = vsel %vm1284, %v1281, %v1050
      %v1316 = vsel %vm1284, %v1283, %v1052
      %v1317 = vld [vmem:[%s1] sm:$0xf]
      %v1318 = vld [vmem:[%s1 + $0x4] sm:$0xf]
      %v1319 = vld [vmem:[%s1 + $0x8] sm:$0xf]
      %v1320 = vld [vmem:[%s1 + $0xc] sm:$0xf]
      %v1321 = vld [vmem:[%s1 + $0x10] sm:$0xf]
      %v1322 = vld [vmem:[%s1 + $0x14] sm:$0xf]
      %v1323 = vld [vmem:[%s1 + $0x18] sm:$0xf]
      %v1324 = vld [vmem:[%s1 + $0x1c] sm:$0xf]
      %v1325 = vld [vmem:[%s1 + $0x20] sm:$0xf]
      %v1326 = vld [vmem:[%s2] sm:$0x1]
      %v1328 = vlaneseq
      %v1329 = vshrl.u32 %v1328, 7
      %v1330 = vsub.s32 0, %v1329
      %v1331 = vrot.slane %v1326, %v1330
      %v1342 = vunpack.c.l.b16 %v1317
      %v1343 = vunpack.c.l.b16 %v1318
      %v1344 = vunpack.c.l.b16 %v1319
      %v1345 = vunpack.c.l.b16 %v1320
      %v1346 = vunpack.c.l.b16 %v1321
      %v1347 = vunpack.c.l.b16 %v1322
      %v1348 = vunpack.c.l.b16 %v1323
      %v1349 = vunpack.c.l.b16 %v1324
      %v1350 = vunpack.c.l.b16 %v1325
      %v1351 = vpack.c.b16 %v1343, %v1342
      %v1352 = vpack.c.b16 %v1345, %v1344
      %v1353 = vpack.c.b16 %v1347, %v1346
      %v1354 = vpack.c.b16 %v1349, %v1348
      %v1355 = vpack.c.b16 %v1350, %v1350
      %vm1360 = vcmask 588800
      %v1361 = vsel %vm1360, %v1286, 0
      %v1363 = vsel %vm1360, %v1288, 0
      %v1365 = vsel %vm1360, %v1290, 0
      %v1367 = vsel %vm1360, %v1292, 0
      %v1369 = vsel %vm1360, %v1294, 0
      %v1371 = vsel %vm1360, %v1296, 0
      %v1373 = vsel %vm1360, %v1298, 0
      %v1375 = vsel %vm1360, %v1300, 0
      %v1377 = vsel %vm1360, %v1302, 0
      %v1379 = vsel %vm1360, %v1304, 0
      %v1381 = vsel %vm1360, %v1306, 0
      %v1383 = vsel %vm1360, %v1308, 0
      %v1385 = vsel %vm1360, %v1310, 0
      %v1387 = vsel %vm1360, %v1312, 0
      %v1389 = vsel %vm1360, %v1314, 0
      %v1391 = vsel %vm1360, %v1316, 0
      %vm1393 = vcmask 1043456
      %v1395 = vsel %vm1393, %v1355, 0
      %1397 = vmatprep.subr.bf16.mxu0 0
      %1398 = vmatpush1.bf16.msra.mxu0 %v1351
      %1399 = vmatprep.subr.bf16.mxu0 0
      %1400 = vmatpush1.bf16.msra.mxu0 %v1352
      %1401 = vmatprep.subr.bf16.mxu0 0
      %1402 = vmatpush1.bf16.msra.mxu0 %v1353
      %1403 = vmatprep.subr.bf16.mxu0 0
      %1404 = vmatpush1.bf16.msra.mxu0 %v1354
      %1405 = vmatprep.subr.bf16.mxu0 0
      %1406 = vmatpush1.bf16.msra.mxu0 %v1395
      %1407 = vmatprep.subr.bf16.mxu0 0
      %1408 = vmatpush1.bf16.msra.mxu0 0
      %1409 = vmatprep.subr.bf16.mxu0 0
      %1410 = vmatpush1.bf16.msra.mxu0 0
      %1411 = vmatprep.subr.bf16.mxu0 0
      %1412 = vmatpush1.bf16.msra.mxu0 0
      %1413 = vmatprep.subr.bf16.mxu0 0
      %1414 = vmatpush1.bf16.msra.mxu0 0
      %1415 = vmatprep.subr.bf16.mxu0 0
      %1416 = vmatpush1.bf16.msra.mxu0 0
      %1417 = vmatprep.subr.bf16.mxu0 0
      %1418 = vmatpush1.bf16.msra.mxu0 0
      %1419 = vmatprep.subr.bf16.mxu0 0
      %1420 = vmatpush1.bf16.msra.mxu0 0
      %1421 = vmatprep.subr.bf16.mxu0 0
      %1422 = vmatpush1.bf16.msra.mxu0 0
      %1423 = vmatprep.subr.bf16.mxu0 0
      %1424 = vmatpush1.bf16.msra.mxu0 0
      %1425 = vmatprep.subr.bf16.mxu0 0
      %1426 = vmatpush1.bf16.msra.mxu0 0
      %1427 = vmatprep.subr.bf16.mxu0 0
      %1428 = vmatpush1.bf16.msra.mxu0 0
      %1429 = vmatprep.mubr.bf16.mxu0 0
      %1430 = vmatmul.mubr.bf16.gmra.mrb[0].mxu0 %v1361
      %v1431 = vpop.f32.mrb[0].mxu0
      %v1432 = vadd.f32 %v1331, %v1431
      %v1433 = vpop.f32.mrb[0].mxu0
      %v1434 = vpop.f32.mrb[0].mxu0
      %v1435 = vadd.f32 %v1331, %v1434
      %v1436 = vpop.f32.mrb[0].mxu0
      %1437 = vmatprep.mubr.bf16.mxu0 0
      %1438 = vmatmul.mubr.bf16.gmra.mrb[0].mxu0 %v1363
      %v1439 = vpop.f32.mrb[0].mxu0
      %v1440 = vadd.f32 %v1331, %v1439
      %v1441 = vpop.f32.mrb[0].mxu0
      %v1442 = vpop.f32.mrb[0].mxu0
      %v1443 = vadd.f32 %v1331, %v1442
      %v1444 = vpop.f32.mrb[0].mxu0
      %1445 = vmatprep.mubr.bf16.mxu0 0
      %1446 = vmatmul.mubr.bf16.gmra.mrb[0].mxu0 %v1365
      %v1447 = vpop.f32.mrb[0].mxu0
      %v1448 = vadd.f32 %v1331, %v1447
      %v1449 = vpop.f32.mrb[0].mxu0
      %v1450 = vpop.f32.mrb[0].mxu0
      %v1451 = vadd.f32 %v1331, %v1450
      %v1452 = vpop.f32.mrb[0].mxu0
      %1453 = vmatprep.mubr.bf16.mxu0 0
      %1454 = vmatmul.mubr.bf16.gmra.mrb[0].mxu0 %v1367
      %v1455 = vpop.f32.mrb[0].mxu0
      %v1456 = vadd.f32 %v1331, %v1455
      %v1457 = vpop.f32.mrb[0].mxu0
      %v1458 = vpop.f32.mrb[0].mxu0
      %v1459 = vadd.f32 %v1331, %v1458
      %v1460 = vpop.f32.mrb[0].mxu0
      %1461 = vmatprep.mubr.bf16.mxu0 0
      %1462 = vmatmul.mubr.bf16.gmra.mrb[0].mxu0 %v1369
      %v1463 = vpop.f32.mrb[0].mxu0
      %v1464 = vadd.f32 %v1331, %v1463
      %v1465 = vpop.f32.mrb[0].mxu0
      %v1466 = vpop.f32.mrb[0].mxu0
      %v1467 = vadd.f32 %v1331, %v1466
      %v1468 = vpop.f32.mrb[0].mxu0
      %1469 = vmatprep.mubr.bf16.mxu0 0
      %1470 = vmatmul.mubr.bf16.gmra.mrb[0].mxu0 %v1371
      %v1471 = vpop.f32.mrb[0].mxu0
      %v1472 = vadd.f32 %v1331, %v1471
      %v1473 = vpop.f32.mrb[0].mxu0
      %v1474 = vpop.f32.mrb[0].mxu0
      %v1475 = vadd.f32 %v1331, %v1474
      %v1476 = vpop.f32.mrb[0].mxu0
      %1477 = vmatprep.mubr.bf16.mxu0 0
      %1478 = vmatmul.mubr.bf16.gmra.mrb[0].mxu0 %v1373
      %v1479 = vpop.f32.mrb[0].mxu0
      %v1480 = vadd.f32 %v1331, %v1479
      %v1481 = vpop.f32.mrb[0].mxu0
      %v1482 = vpop.f32.mrb[0].mxu0
      %v1483 = vadd.f32 %v1331, %v1482
      %v1484 = vpop.f32.mrb[0].mxu0
      %1485 = vmatprep.mubr.bf16.mxu0 0
      %1486 = vmatmul.mubr.bf16.gmra.mrb[0].mxu0 %v1375
      %v1487 = vpop.f32.mrb[0].mxu0
      %v1488 = vadd.f32 %v1331, %v1487
      %v1489 = vpop.f32.mrb[0].mxu0
      %v1490 = vpop.f32.mrb[0].mxu0
      %v1491 = vadd.f32 %v1331, %v1490
      %v1492 = vpop.f32.mrb[0].mxu0
      %1493 = vmatprep.mubr.bf16.mxu0 0
      %1494 = vmatmul.mubr.bf16.gmra.mrb[0].mxu0 %v1377
      %v1495 = vpop.f32.mrb[0].mxu0
      %v1496 = vadd.f32 %v1331, %v1495
      %v1497 = vpop.f32.mrb[0].mxu0
      %v1498 = vpop.f32.mrb[0].mxu0
      %v1499 = vadd.f32 %v1331, %v1498
      %v1500 = vpop.f32.mrb[0].mxu0
      %1501 = vmatprep.mubr.bf16.mxu0 0
      %1502 = vmatmul.mubr.bf16.gmra.mrb[0].mxu0 %v1379
      %v1503 = vpop.f32.mrb[0].mxu0
      %v1504 = vadd.f32 %v1331, %v1503
      %v1505 = vpop.f32.mrb[0].mxu0
      %v1506 = vpop.f32.mrb[0].mxu0
      %v1507 = vadd.f32 %v1331, %v1506
      %v1508 = vpop.f32.mrb[0].mxu0
      %1509 = vmatprep.mubr.bf16.mxu0 0
      %1510 = vmatmul.mubr.bf16.gmra.mrb[0].mxu0 %v1381
      %v1511 = vpop.f32.mrb[0].mxu0
      %v1512 = vadd.f32 %v1331, %v1511
      %v1513 = vpop.f32.mrb[0].mxu0
      %v1514 = vpop.f32.mrb[0].mxu0
      %v1515 = vadd.f32 %v1331, %v1514
      %v1516 = vpop.f32.mrb[0].mxu0
      %1517 = vmatprep.mubr.bf16.mxu0 0
      %1518 = vmatmul.mubr.bf16.gmra.mrb[0].mxu0 %v1383
      %v1519 = vpop.f32.mrb[0].mxu0
      %v1520 = vadd.f32 %v1331, %v1519
      %v1521 = vpop.f32.mrb[0].mxu0
      %v1522 = vpop.f32.mrb[0].mxu0
      %v1523 = vadd.f32 %v1331, %v1522
      %v1524 = vpop.f32.mrb[0].mxu0
      %1525 = vmatprep.mubr.bf16.mxu0 0
      %1526 = vmatmul.mubr.bf16.gmra.mrb[0].mxu0 %v1385
      %v1527 = vpop.f32.mrb[0].mxu0
      %v1528 = vadd.f32 %v1331, %v1527
      %v1529 = vpop.f32.mrb[0].mxu0
      %v1530 = vpop.f32.mrb[0].mxu0
      %v1531 = vadd.f32 %v1331, %v1530
      %v1532 = vpop.f32.mrb[0].mxu0
      %1533 = vmatprep.mubr.bf16.mxu0 0
      %1534 = vmatmul.mubr.bf16.gmra.mrb[0].mxu0 %v1387
      %v1535 = vpop.f32.mrb[0].mxu0
      %v1536 = vadd.f32 %v1331, %v1535
      %v1537 = vpop.f32.mrb[0].mxu0
      %v1538 = vpop.f32.mrb[0].mxu0
      %v1539 = vadd.f32 %v1331, %v1538
      %v1540 = vpop.f32.mrb[0].mxu0
      %1541 = vmatprep.mubr.bf16.mxu0 0
      %1542 = vmatmul.mubr.bf16.gmra.mrb[0].mxu0 %v1389
      %v1543 = vpop.f32.mrb[0].mxu0
      %v1544 = vadd.f32 %v1331, %v1543
      %v1545 = vpop.f32.mrb[0].mxu0
      %v1546 = vpop.f32.mrb[0].mxu0
      %v1547 = vadd.f32 %v1331, %v1546
      %v1548 = vpop.f32.mrb[0].mxu0
      %1549 = vmatprep.mubr.bf16.mxu0 0
      %1550 = vmatmul.mubr.bf16.gmra.mrb[0].mxu0 %v1391
      %v1551 = vpop.f32.mrb[0].mxu0
      %v1552 = vadd.f32 %v1331, %v1551
      %v1553 = vpop.f32.mrb[0].mxu0
      %v1554 = vpop.f32.mrb[0].mxu0
      %v1555 = vadd.f32 %v1331, %v1554
      %v1556 = vpop.f32.mrb[0].mxu0
      %1557 = vdwg.mxu0
      %v1558 = vld [vmem:[%s301] sm:$0x1]
      %v1560 = vlaneseq
      %v1561 = vshrl.u32 %v1560, 7
      %v1562 = vsub.s32 0, %v1561
      %v1563 = vrot.slane %v1558, %v1562
      %v1565 = vmul.f32 %v1432, %v1563
      %v1566 = vmul.f32 %v1435, %v1563
      %v1567 = vmul.f32 %v1440, %v1563
      %v1568 = vmul.f32 %v1443, %v1563
      %v1569 = vmul.f32 %v1448, %v1563
      %v1570 = vmul.f32 %v1451, %v1563
      %v1571 = vmul.f32 %v1456, %v1563
      %v1572 = vmul.f32 %v1459, %v1563
      %v1573 = vmul.f32 %v1464, %v1563
      %v1574 = vmul.f32 %v1467, %v1563
      %v1575 = vmul.f32 %v1472, %v1563
      %v1576 = vmul.f32 %v1475, %v1563
      %v1577 = vmul.f32 %v1480, %v1563
      %v1578 = vmul.f32 %v1483, %v1563
      %v1579 = vmul.f32 %v1488, %v1563
      %v1580 = vmul.f32 %v1491, %v1563
      %v1581 = vmul.f32 %v1496, %v1563
      %v1582 = vmul.f32 %v1499, %v1563
      %v1583 = vmul.f32 %v1504, %v1563
      %v1584 = vmul.f32 %v1507, %v1563
      %v1585 = vmul.f32 %v1512, %v1563
      %v1586 = vmul.f32 %v1515, %v1563
      %v1587 = vmul.f32 %v1520, %v1563
      %v1588 = vmul.f32 %v1523, %v1563
      %v1589 = vmul.f32 %v1528, %v1563
      %v1590 = vmul.f32 %v1531, %v1563
      %v1591 = vmul.f32 %v1536, %v1563
      %v1592 = vmul.f32 %v1539, %v1563
      %v1593 = vmul.f32 %v1544, %v1563
      %v1594 = vmul.f32 %v1547, %v1563
      %v1595 = vmul.f32 %v1552, %v1563
      %v1596 = vmul.f32 %v1555, %v1563
      %v1597 = vld [vmem:[%s304] sm:$0x1]
      %v1599 = vlaneseq
      %v1600 = vshrl.u32 %v1599, 7
      %v1601 = vsub.s32 0, %v1600
      %v1602 = vrot.slane %v1597, %v1601
      %v1604 = vadd.f32 %v1565, %v1602
      %v1605 = vadd.f32 %v1566, %v1602
      %v1606 = vadd.f32 %v1567, %v1602
      %v1607 = vadd.f32 %v1568, %v1602
      %v1608 = vadd.f32 %v1569, %v1602
      %v1609 = vadd.f32 %v1570, %v1602
      %v1610 = vadd.f32 %v1571, %v1602
      %v1611 = vadd.f32 %v1572, %v1602
      %v1612 = vadd.f32 %v1573, %v1602
      %v1613 = vadd.f32 %v1574, %v1602
      %v1614 = vadd.f32 %v1575, %v1602
      %v1615 = vadd.f32 %v1576, %v1602
      %v1616 = vadd.f32 %v1577, %v1602
      %v1617 = vadd.f32 %v1578, %v1602
      %v1618 = vadd.f32 %v1579, %v1602
      %v1619 = vadd.f32 %v1580, %v1602
      %v1620 = vadd.f32 %v1581, %v1602
      %v1621 = vadd.f32 %v1582, %v1602
      %v1622 = vadd.f32 %v1583, %v1602
      %v1623 = vadd.f32 %v1584, %v1602
      %v1624 = vadd.f32 %v1585, %v1602
      %v1625 = vadd.f32 %v1586, %v1602
      %v1626 = vadd.f32 %v1587, %v1602
      %v1627 = vadd.f32 %v1588, %v1602
      %v1628 = vadd.f32 %v1589, %v1602
      %v1629 = vadd.f32 %v1590, %v1602
      %v1630 = vadd.f32 %v1591, %v1602
      %v1631 = vadd.f32 %v1592, %v1602
      %v1632 = vadd.f32 %v1593, %v1602
      %v1633 = vadd.f32 %v1594, %v1602
      %v1634 = vadd.f32 %v1595, %v1602
      %v1635 = vadd.f32 %v1596, %v1602
      %1636 = vst.msk [vmem:[%s313] sm:$0xff] %vm1086, %v1604
      %1637 = vst.msk [vmem:[%s313 + $0x8] sm:$0xff] %vm1086, %v1605
      %1638 = vst.msk [vmem:[%s313 + $0x10] sm:$0xff] %vm1086, %v1606
      %1639 = vst.msk [vmem:[%s313 + $0x18] sm:$0xff] %vm1086, %v1607
      %1640 = vst.msk [vmem:[%s313 + $0x20] sm:$0xff] %vm1086, %v1608
      %1641 = vst.msk [vmem:[%s313 + $0x28] sm:$0xff] %vm1086, %v1609
      %1642 = vst.msk [vmem:[%s313 + $0x30] sm:$0xff] %vm1086, %v1610
      %1643 = vst.msk [vmem:[%s313 + $0x38] sm:$0xff] %vm1086, %v1611
      %1644 = vst.msk [vmem:[%s313 + $0x40] sm:$0xff] %vm1086, %v1612
      %1645 = vst.msk [vmem:[%s313 + $0x48] sm:$0xff] %vm1086, %v1613
      %1646 = vst.msk [vmem:[%s313 + $0x50] sm:$0xff] %vm1086, %v1614
      %1647 = vst.msk [vmem:[%s313 + $0x58] sm:$0xff] %vm1086, %v1615
      %1648 = vst.msk [vmem:[%s313 + $0x60] sm:$0xff] %vm1086, %v1616
      %1649 = vst.msk [vmem:[%s313 + $0x68] sm:$0xff] %vm1086, %v1617
      %1650 = vst.msk [vmem:[%s313 + $0x70] sm:$0xff] %vm1086, %v1618
      %1651 = vst.msk [vmem:[%s313 + $0x78] sm:$0xff] %vm1086, %v1619
      %1652 = vst.msk [vmem:[%s313 + $0x80] sm:$0xff] %vm1086, %v1620
      %1653 = vst.msk [vmem:[%s313 + $0x88] sm:$0xff] %vm1086, %v1621
      %1654 = vst.msk [vmem:[%s313 + $0x90] sm:$0xff] %vm1086, %v1622
      %1655 = vst.msk [vmem:[%s313 + $0x98] sm:$0xff] %vm1086, %v1623
      %1656 = vst.msk [vmem:[%s313 + $0xa0] sm:$0xff] %vm1086, %v1624
      %1657 = vst.msk [vmem:[%s313 + $0xa8] sm:$0xff] %vm1086, %v1625
      %1658 = vst.msk [vmem:[%s313 + $0xb0] sm:$0xff] %vm1086, %v1626
      %1659 = vst.msk [vmem:[%s313 + $0xb8] sm:$0xff] %vm1086, %v1627
      %1660 = vst.msk [vmem:[%s313 + $0xc0] sm:$0xff] %vm1086, %v1628
      %1661 = vst.msk [vmem:[%s313 + $0xc8] sm:$0xff] %vm1086, %v1629
      %1662 = vst.msk [vmem:[%s313 + $0xd0] sm:$0xff] %vm1086, %v1630
      %1663 = vst.msk [vmem:[%s313 + $0xd8] sm:$0xff] %vm1086, %v1631
      %1664 = vst.msk [vmem:[%s313 + $0xe0] sm:$0xff] %vm1086, %v1632
      %1665 = vst.msk [vmem:[%s313 + $0xe8] sm:$0xff] %vm1086, %v1633
      %1666 = vst.msk [vmem:[%s313 + $0xf0] sm:$0xff] %vm1086, %v1634
      %1667 = vst.msk [vmem:[%s313 + $0xf8] sm:$0xff] %vm1086, %v1635
      %v1668 = vsel %vm1086, %v1604, 0.0
      %v1669 = vsel %vm1086, %v1605, 0.0
      %v1670 = vadd.f32 %v1668, %v1669
      %v1671 = vsel %vm1086, %v1606, 0.0
      %v1672 = vadd.f32 %v1670, %v1671
      %v1673 = vsel %vm1086, %v1607, 0.0
      %v1674 = vadd.f32 %v1672, %v1673
      %v1675 = vsel %vm1086, %v1608, 0.0
      %v1676 = vadd.f32 %v1674, %v1675
      %v1677 = vsel %vm1086, %v1609, 0.0
      %v1678 = vadd.f32 %v1676, %v1677
      %v1679 = vsel %vm1086, %v1610, 0.0
      %v1680 = vadd.f32 %v1678, %v1679
      %v1681 = vsel %vm1086, %v1611, 0.0
      %v1682 = vadd.f32 %v1680, %v1681
      %v1683 = vsel %vm1086, %v1612, 0.0
      %v1684 = vadd.f32 %v1682, %v1683
      %v1685 = vsel %vm1086, %v1613, 0.0
      %v1686 = vadd.f32 %v1684, %v1685
      %v1687 = vsel %vm1086, %v1614, 0.0
      %v1688 = vadd.f32 %v1686, %v1687
      %v1689 = vsel %vm1086, %v1615, 0.0
      %v1690 = vadd.f32 %v1688, %v1689
      %v1691 = vsel %vm1086, %v1616, 0.0
      %v1692 = vadd.f32 %v1690, %v1691
      %v1693 = vsel %vm1086, %v1617, 0.0
      %v1694 = vadd.f32 %v1692, %v1693
      %v1695 = vsel %vm1086, %v1618, 0.0
      %v1696 = vadd.f32 %v1694, %v1695
      %v1697 = vsel %vm1086, %v1619, 0.0
      %v1698 = vadd.f32 %v1696, %v1697
      %v1699 = vsel %vm1086, %v1620, 0.0
      %v1700 = vadd.f32 %v1698, %v1699
      %v1701 = vsel %vm1086, %v1621, 0.0
      %v1702 = vadd.f32 %v1700, %v1701
      %v1703 = vsel %vm1086, %v1622, 0.0
      %v1704 = vadd.f32 %v1702, %v1703
      %v1705 = vsel %vm1086, %v1623, 0.0
      %v1706 = vadd.f32 %v1704, %v1705
      %v1707 = vsel %vm1086, %v1624, 0.0
      %v1708 = vadd.f32 %v1706, %v1707
      %v1709 = vsel %vm1086, %v1625, 0.0
      %v1710 = vadd.f32 %v1708, %v1709
      %v1711 = vsel %vm1086, %v1626, 0.0
      %v1712 = vadd.f32 %v1710, %v1711
      %v1713 = vsel %vm1086, %v1627, 0.0
      %v1714 = vadd.f32 %v1712, %v1713
      %v1715 = vsel %vm1086, %v1628, 0.0
      %v1716 = vadd.f32 %v1714, %v1715
      %v1717 = vsel %vm1086, %v1629, 0.0
      %v1718 = vadd.f32 %v1716, %v1717
      %v1719 = vsel %vm1086, %v1630, 0.0
      %v1720 = vadd.f32 %v1718, %v1719
      %v1721 = vsel %vm1086, %v1631, 0.0
      %v1722 = vadd.f32 %v1720, %v1721
      %v1723 = vsel %vm1086, %v1632, 0.0
      %v1724 = vadd.f32 %v1722, %v1723
      %v1725 = vsel %vm1086, %v1633, 0.0
      %v1726 = vadd.f32 %v1724, %v1725
      %v1727 = vsel %vm1086, %v1634, 0.0
      %v1728 = vadd.f32 %v1726, %v1727
      %v1729 = vsel %vm1086, %v1635, 0.0
      %v1730 = vadd.f32 %v1728, %v1729
      %v1731 = vrot.slane %v1730, 4
      %v1732 = vadd.f32 %v1730, %v1731
      %v1733 = vrot.slane %v1732, 2
      %v1734 = vadd.f32 %v1732, %v1733
      %v1735 = vrot.slane %v1734, 1
      %v1736 = vadd.f32 %v1734, %v1735
      %v1737 = vmul.f32 %v1604, %v1604
      %v1738 = vmul.f32 %v1605, %v1605
      %v1739 = vmul.f32 %v1606, %v1606
      %v1740 = vmul.f32 %v1607, %v1607
      %v1741 = vmul.f32 %v1608, %v1608
      %v1742 = vmul.f32 %v1609, %v1609
      %v1743 = vmul.f32 %v1610, %v1610
      %v1744 = vmul.f32 %v1611, %v1611
      %v1745 = vmul.f32 %v1612, %v1612
      %v1746 = vmul.f32 %v1613, %v1613
      %v1747 = vmul.f32 %v1614, %v1614
      %v1748 = vmul.f32 %v1615, %v1615
      %v1749 = vmul.f32 %v1616, %v1616
      %v1750 = vmul.f32 %v1617, %v1617
      %v1751 = vmul.f32 %v1618, %v1618
      %v1752 = vmul.f32 %v1619, %v1619
      %v1753 = vmul.f32 %v1620, %v1620
      %v1754 = vmul.f32 %v1621, %v1621
      %v1755 = vmul.f32 %v1622, %v1622
      %v1756 = vmul.f32 %v1623, %v1623
      %v1757 = vmul.f32 %v1624, %v1624
      %v1758 = vmul.f32 %v1625, %v1625
      %v1759 = vmul.f32 %v1626, %v1626
      %v1760 = vmul.f32 %v1627, %v1627
      %v1761 = vmul.f32 %v1628, %v1628
      %v1762 = vmul.f32 %v1629, %v1629
      %v1763 = vmul.f32 %v1630, %v1630
      %v1764 = vmul.f32 %v1631, %v1631
      %v1765 = vmul.f32 %v1632, %v1632
      %v1766 = vmul.f32 %v1633, %v1633
      %v1767 = vmul.f32 %v1634, %v1634
      %v1768 = vmul.f32 %v1635, %v1635
      %v1769 = vsel %vm1086, %v1737, 0.0
      %v1770 = vsel %vm1086, %v1738, 0.0
      %v1771 = vadd.f32 %v1769, %v1770
      %v1772 = vsel %vm1086, %v1739, 0.0
      %v1773 = vadd.f32 %v1771, %v1772
      %v1774 = vsel %vm1086, %v1740, 0.0
      %v1775 = vadd.f32 %v1773, %v1774
      %v1776 = vsel %vm1086, %v1741, 0.0
      %v1777 = vadd.f32 %v1775, %v1776
      %v1778 = vsel %vm1086, %v1742, 0.0
      %v1779 = vadd.f32 %v1777, %v1778
      %v1780 = vsel %vm1086, %v1743, 0.0
      %v1781 = vadd.f32 %v1779, %v1780
      %v1782 = vsel %vm1086, %v1744, 0.0
      %v1783 = vadd.f32 %v1781, %v1782
      %v1784 = vsel %vm1086, %v1745, 0.0
      %v1785 = vadd.f32 %v1783, %v1784
      %v1786 = vsel %vm1086, %v1746, 0.0
      %v1787 = vadd.f32 %v1785, %v1786
      %v1788 = vsel %vm1086, %v1747, 0.0
      %v1789 = vadd.f32 %v1787, %v1788
      %v1790 = vsel %vm1086, %v1748, 0.0
      %v1791 = vadd.f32 %v1789, %v1790
      %v1792 = vsel %vm1086, %v1749, 0.0
      %v1793 = vadd.f32 %v1791, %v1792
      %v1794 = vsel %vm1086, %v1750, 0.0
      %v1795 = vadd.f32 %v1793, %v1794
      %v1796 = vsel %vm1086, %v1751, 0.0
      %v1797 = vadd.f32 %v1795, %v1796
      %v1798 = vsel %vm1086, %v1752, 0.0
      %v1799 = vadd.f32 %v1797, %v1798
      %v1800 = vsel %vm1086, %v1753, 0.0
      %v1801 = vadd.f32 %v1799, %v1800
      %v1802 = vsel %vm1086, %v1754, 0.0
      %v1803 = vadd.f32 %v1801, %v1802
      %v1804 = vsel %vm1086, %v1755, 0.0
      %v1805 = vadd.f32 %v1803, %v1804
      %v1806 = vsel %vm1086, %v1756, 0.0
      %v1807 = vadd.f32 %v1805, %v1806
      %v1808 = vsel %vm1086, %v1757, 0.0
      %v1809 = vadd.f32 %v1807, %v1808
      %v1810 = vsel %vm1086, %v1758, 0.0
      %v1811 = vadd.f32 %v1809, %v1810
      %v1812 = vsel %vm1086, %v1759, 0.0
      %v1813 = vadd.f32 %v1811, %v1812
      %v1814 = vsel %vm1086, %v1760, 0.0
      %v1815 = vadd.f32 %v1813, %v1814
      %v1816 = vsel %vm1086, %v1761, 0.0
      %v1817 = vadd.f32 %v1815, %v1816
      %v1818 = vsel %vm1086, %v1762, 0.0
      %v1819 = vadd.f32 %v1817, %v1818
      %v1820 = vsel %vm1086, %v1763, 0.0
      %v1821 = vadd.f32 %v1819, %v1820
      %v1822 = vsel %vm1086, %v1764, 0.0
      %v1823 = vadd.f32 %v1821, %v1822
      %v1824 = vsel %vm1086, %v1765, 0.0
      %v1825 = vadd.f32 %v1823, %v1824
      %v1826 = vsel %vm1086, %v1766, 0.0
      %v1827 = vadd.f32 %v1825, %v1826
      %v1828 = vsel %vm1086, %v1767, 0.0
      %v1829 = vadd.f32 %v1827, %v1828
      %v1830 = vsel %vm1086, %v1768, 0.0
      %v1831 = vadd.f32 %v1829, %v1830
      %v1832 = vrot.slane %v1831, 4
      %v1833 = vadd.f32 %v1831, %v1832
      %v1834 = vrot.slane %v1833, 2
      %v1835 = vadd.f32 %v1833, %v1834
      %v1836 = vrot.slane %v1835, 1
      %v1837 = vadd.f32 %v1835, %v1836
      %vm1838 = vcmask 1040384
      %v1839 = vsel %vm1838, %v1736, %v1837
      %vm1840 = vcmask 123904
      %1841 = vst.msk [vmem:[%s321] sm:$0x3] %vm1840, %v1839
      %s1842 = smul.u32 32, %s23
      %p1843 = scmp.lt.s32.totalorder %s22, 1
      %s1844 = scalar_select %p1843, %s22, 1
      %p1845 = scmp.lt.s32.totalorder %s1842, 31
      %s1846 = scalar_select %p1845, %s1842, 31
      %s1847 = smul.addr %s1844, 32
      %s1848 = sadd.s32 %s1846, %s1847
      %s1849 = smul.addr %s1848, 8
      %s1850 = scalar_lea.vmem %s5, %s1849
      %p1851 = scmp.lt.s32.totalorder %s22, 1
      %s1852 = scalar_select %p1851, %s22, 1
      %p1853 = scmp.lt.s32.totalorder %s23, 0
      %s1854 = scalar_select %p1853, %s23, 0
      %s1855 = sadd.s32 %s1854, %s1852
      %s1856 = smul.addr %s1855, 2
      %s1857 = scalar_lea.vmem %s6, %s1856
      // Predicated region
      $region41: #{film_forward.6} parent=39 // pred_check
        %p1858 = pneg %p170
      $region42: #{film_forward.6} parent=39 // pred_check_branch
        %1860 = sbr.rel (%p1858) target = $region44
      $region43: #{film_forward.6} parent=39 // pred_region
        %s1861 = smul.u32 32, %s23
      $region44: #{film_forward.6} parent=39 // pred_fallthru
        _
      // Predicated region
      $region45: #{film_forward.6} parent=39 // pred_check
        %p1862 = pneg %p198
      $region46: #{film_forward.6} parent=39 // pred_check_branch
        %1864 = sbr.rel (%p1862) target = $region48
      $region47: #{film_forward.6} parent=39 // pred_region
        _
      $region48: #{film_forward.6} parent=39 // pred_fallthru
        _
    $region40: #{film_forward.6} parent=5 // pred_fallthru
      _
    %p1865 = scmp.le.s32.totalorder 2, %s13
    // Predicated region
    $region49: #{film_forward.6} parent=5 // pred_check
      %p1866 = pneg %p1865
    $region50: #{film_forward.6} parent=5 // pred_check_branch
      %1868 = sbr.rel (%p1866) target = $region52
    $region51: #{film_forward.6} parent=5 // pred_region
      %s1869 = ssub.s32 %s13, 2
      // Predicated region
      $region53: #{film_forward.6} parent=51 // pred_check
        %p1870 = pneg %p176
      $region54: #{film_forward.6} parent=51 // pred_check_branch
        %1872 = sbr.rel (%p1870) target = $region56
      $region55: #{film_forward.6} parent=51 // pred_region
        %s1873 = smul.u32 32, %s25
        %p1874 = scmp.lt.s32.totalorder %s24, 1
        %s1875 = scalar_select %p1874, %s24, 1
        %p1876 = scmp.lt.s32.totalorder %s1873, 31
        %s1877 = scalar_select %p1876, %s1873, 31
        %s1878 = smul.addr %s1875, 32
        %s1879 = sadd.s32 %s1877, %s1878
        %s1880 = smul.addr %s1879, 8
        %s1881 = scalar_lea.vmem %s5, %s1880
      $region56: #{film_forward.6} parent=51 // pred_fallthru
        _
      // Predicated region
      $region57: #{film_forward.6} parent=51 // pred_check
        %p1882 = pneg %p204
      $region58: #{film_forward.6} parent=51 // pred_check_branch
        %1884 = sbr.rel (%p1882) target = $region60
      $region59: #{film_forward.6} parent=51 // pred_region
        %p1885 = scmp.lt.s32.totalorder %s24, 1
        %s1886 = scalar_select %p1885, %s24, 1
        %p1887 = scmp.lt.s32.totalorder %s25, 0
        %s1888 = scalar_select %p1887, %s25, 0
        %s1889 = sadd.s32 %s1888, %s1886
        %s1890 = smul.addr %s1889, 2
        %s1891 = scalar_lea.vmem %s6, %s1890
      $region60: #{film_forward.6} parent=51 // pred_fallthru
        _
    $region52: #{film_forward.6} parent=5 // pred_fallthru
      _
  $region6: #{film_forward.6} parent=0 // loop_footer
    %s17 = sadd.s32 1, %s13
  $region7: #{film_forward.6} parent=0 // loop_footer_branch
    %12 = sbr.rel target = $region3
  $region8: #{film_forward.6} parent=0 // loop_exit
    _

</llo_original>
